<compile_context>
chip_gen: v7x
topology: tpu7x:2x2x1
jax: 0.10.0
libtpu: 0.0.40
codegen_flags: <defaults>
</compile_context>

<pallas_src>
import functools
import math

import jax
import jax.numpy as jnp
from jax.experimental import pallas as pl
from jax.experimental.pallas import tpu as pltpu


# ----------------------------------------------------------------------------
# small helpers
# ----------------------------------------------------------------------------

def _round_up(x, m):
    return (x + m - 1) // m * m


def _row_tile(M, cap=512):
    """Balanced row tile (multiple of 8, <= cap).  Guarantees >= 2 grid steps
    whenever M > 8 so 'parallel' can actually shard across both v7x TensorCores,
    and never pads more than one tile's worth of rows."""
    Mp8 = _round_up(max(M, 8), 8)
    nt = pl.cdiv(Mp8, cap)
    if Mp8 > 8:
        nt = max(nt, 2)
    tm = _round_up(pl.cdiv(Mp8, nt), 8)
    Mp = _round_up(Mp8, tm)
    return tm, Mp


def _pad_rows(x, Mp):
    M = x.shape[0]
    if Mp == M:
        return x
    return jnp.pad(x, ((0, Mp - M), (0, 0)))


def rope_tables(T, d2):
    inv = 1.0 / (10000.0 ** (jnp.arange(d2, dtype=jnp.float32) / d2))
    freqs = jnp.outer(jnp.arange(T, dtype=jnp.float32), inv)     # (T, d2)
    return jnp.cos(freqs), jnp.sin(freqs)


# ----------------------------------------------------------------------------
# Pallas kernels
# ----------------------------------------------------------------------------

def _layer_norm(x, g, b):
    mu = jnp.mean(x, axis=-1, keepdims=True)
    var = jnp.mean(jnp.square(x - mu), axis=-1, keepdims=True)
    return (x - mu) * jax.lax.rsqrt(var + 1e-5) * g + b


def _tx_stack_kernel(*refs, depth, heads, dh, scale, use_rotary):
    """Entire pre-norm transformer stack for ONE batch element per grid step.

    refs = [x, (cos, sin)?, proj_in_w, proj_in_b,
            12 weight refs per layer (ln1 g/b, qkv w/b, attn_out w/b, ln2 g/b,
            ff_ag w/b, ff_out w/b), out_ref]

    All activations live in vregs/VMEM for the whole stack; nothing is written
    back to HBM until the final hidden state.
    """
    it = iter(refs)
    x_ref = next(it)
    if use_rotary:
        cos_ref = next(it)
        sin_ref = next(it)
    pin_w = next(it)
    pin_b = next(it)
    layer_refs = [next(it) for _ in range(12 * depth)]
    o_ref = next(it)

    hd = heads * dh
    dh2 = dh // 2
    cdims = (((1,), (1,)), ((), ()))

    x = x_ref[0].astype(jnp.bfloat16)                              # (T, Din)
    h = (jnp.dot(x, pin_w[...].astype(jnp.bfloat16),
                 preferred_element_type=jnp.float32) + pin_b[...])  # (T, D) f32

    if use_rotary:
        cos = cos_ref[...]
        sin = sin_ref[...]

    for l in range(depth):                                         # depth is tiny: static
        (g1, b1, qkv_w, qkv_b, wo, bo, g2, b2,
         w_ag, b_ag, w_fo, b_fo) = layer_refs[12 * l: 12 * (l + 1)]

        # ---- LN1 + packed QKV projection -----------------------------------
        xn = _layer_norm(h, g1[...], b1[...]).astype(jnp.bfloat16)
        qkv = (jnp.dot(xn, qkv_w[...].astype(jnp.bfloat16),
                       preferred_element_type=jnp.float32) + qkv_b[...])  # (T, 3*H*dh)

        # ---- multi-head attention (+ in-kernel RoPE), out-proj folded in ----
        wo_f = wo[...].astype(jnp.bfloat16)
        a = jnp.zeros_like(h)
        # TODO(synk): static head unroll + full (T,T) scores is fine at H=2 and
        # T<=12; use a lax.fori_loop over pl.ds head slices and flash-style KV
        # tiling (online softmax) before scaling heads / T, esp. on v7x (64 MiB VMEM).
        for hh in range(heads):
            q = qkv[:, hh * dh:(hh + 1) * dh] * scale              # scale folded into q
            k = qkv[:, hd + hh * dh: hd + (hh + 1) * dh]
            v = qkv[:, 2 * hd + hh * dh: 2 * hd + (hh + 1) * dh]
            if use_rotary:
                # half-split RoPE: rot(q)·rot(k) split into its two half
                # contributions -> no cross-lane data movement.
                q1, q2 = q[:, :dh2], q[:, dh2:]
                k1, k2 = k[:, :dh2], k[:, dh2:]
                qa = (q1 * cos - q2 * sin).astype(jnp.bfloat16)
                qb = (q1 * sin + q2 * cos).astype(jnp.bfloat16)
                ka = (k1 * cos - k2 * sin).astype(jnp.bfloat16)
                kb = (k1 * sin + k2 * cos).astype(jnp.bfloat16)
                s = (jax.lax.dot_general(qa, ka, cdims, preferred_element_type=jnp.float32)
                     + jax.lax.dot_general(qb, kb, cdims, preferred_element_type=jnp.float32))
            else:
                s = jax.lax.dot_general(q.astype(jnp.bfloat16), k.astype(jnp.bfloat16),
                                        cdims, preferred_element_type=jnp.float32)
            s = s - jnp.max(s, axis=-1, keepdims=True)
            p = jnp.exp(s)
            p = p * pl.reciprocal(jnp.sum(p, axis=-1, keepdims=True), approx=True)
            o = jnp.dot(p.astype(jnp.bfloat16), v.astype(jnp.bfloat16),
                        preferred_element_type=jnp.float32)        # (T, dh)
            # attn @ Wo == sum_h o_h @ Wo[h*dh:(h+1)*dh, :]  (no lane concat needed)
            a = a + jnp.dot(o.astype(jnp.bfloat16), wo_f[hh * dh:(hh + 1) * dh, :],
                            preferred_element_type=jnp.float32)
        h = h + a + bo[...]                                        # residual 1

        # ---- LN2 + SwiGLU FF (ff_a | ff_g packed into ONE matmul) -----------
        xn2 = _layer_norm(h, g2[...], b2[...]).astype(jnp.bfloat16)
        ag = (jnp.dot(xn2, w_ag[...].astype(jnp.bfloat16),
                      preferred_element_type=jnp.float32) + b_ag[...])   # (T, 2*Fd)
        fd = ag.shape[-1] // 2
        a1 = ag[:, :fd]
        gt = ag[:, fd:]
        ff = (a1 * (gt * jax.nn.sigmoid(gt))).astype(jnp.bfloat16)       # x * SiLU(gate)
        h = h + (jnp.dot(ff, w_fo[...].astype(jnp.bfloat16),
                         preferred_element_type=jnp.float32) + b_fo[...])  # residual 2

    o_ref[0] = h.astype(o_ref.dtype)


def transformer_stack(p, x, use_rotary):
    """Whole pre-norm transformer stack (proj_in + all layers) in ONE pallas_call.

    x: (B, T, Din) -> (B, T, dim) bf16 hidden state (pre final LN).
    Grid over the batch axis; every weight is a VMEM-resident full block.
    """
    B, T, Din = x.shape
    dim, heads = p["dim"], p["heads"]
    dh = dim // heads
    depth = len(p["layers"])
    fd2 = p["layers"][0]["ff_ag"]["w"].shape[1]

    args = [x.astype(jnp.bfloat16)]                                 # bf16 activation in HBM
    in_specs = [pl.BlockSpec((1, T, Din), lambda i: (i, 0, 0))]

    def add_w(a):
        args.append(a)
        in_specs.append(pl.BlockSpec(a.shape, lambda i: (0, 0)))

    if use_rotary:
        cos, sin = rope_tables(T, dh // 2)
        add_w(cos)
        add_w(sin)
    add_w(p["proj_in"]["w"])
    add_w(p["proj_in"]["b"].reshape(1, dim))
    for lp in p["layers"]:
        add_w(lp["ln1"]["g"].reshape(1, dim))
        add_w(lp["ln1"]["b"].reshape(1, dim))
        add_w(lp["qkv"]["w"])
        add_w(lp["qkv"]["b"].reshape(1, 3 * dim))
        add_w(lp["attn_out"]["w"])
        add_w(lp["attn_out"]["b"].reshape(1, dim))
        add_w(lp["ln2"]["g"].reshape(1, dim))
        add_w(lp["ln2"]["b"].reshape(1, dim))
        add_w(lp["ff_ag"]["w"])
        add_w(lp["ff_ag"]["b"].reshape(1, fd2))
        add_w(lp["ff_out"]["w"])
        add_w(lp["ff_out"]["b"].reshape(1, dim))

    fd = fd2 // 2
    flops_layer = (2 * T * dim * 3 * dim + 4 * heads * T * T * dh
                   + 2 * T * dim * dim + 2 * T * dim * fd2 + 2 * T * fd * dim)
    weight_bytes = sum(int(a.size) * a.dtype.itemsize for a in args[1:])
    kern = functools.partial(_tx_stack_kernel, depth=depth, heads=heads, dh=dh,
                             scale=1.0 / math.sqrt(dh), use_rotary=use_rotary)
    return pl.pallas_call(
        kern,
        out_shape=jax.ShapeDtypeStruct((B, T, dim), jnp.bfloat16),
        grid=(B,),
        in_specs=in_specs,
        out_specs=pl.BlockSpec((1, T, dim), lambda i: (i, 0, 0)),
        compiler_params=pltpu.CompilerParams(dimension_semantics=("parallel",)),
        cost_estimate=pl.CostEstimate(
            flops=B * (2 * T * Din * dim + depth * flops_layer),
            transcendentals=B * depth * (heads * T * T + T * fd),
            bytes_accessed=2 * B * T * (Din + dim) + weight_bytes),
    )(*args)


def _ln_linear_kernel(x_ref, g_ref, b_ref, w_ref, bias_ref, o_ref):
    """Fused LayerNorm (over lanes) + Linear.  Row-tiled grid."""
    x = x_ref[...].astype(jnp.float32)
    xn = _layer_norm(x, g_ref[...], b_ref[...])
    acc = jnp.dot(xn.astype(jnp.bfloat16), w_ref[...].astype(jnp.bfloat16),
                  preferred_element_type=jnp.float32)
    o_ref[...] = (acc + bias_ref[...]).astype(o_ref.dtype)


def ln_linear(x, g, b, w, bias, out_dtype=jnp.float32):
    """x: (M, D) -> LayerNorm -> @ w (D, N) bf16 + bias -> (M, N)."""
    M, D = x.shape
    N = w.shape[1]
    tm, Mp = _row_tile(M)
    xp = _pad_rows(x, Mp)
    out = pl.pallas_call(
        _ln_linear_kernel,
        out_shape=jax.ShapeDtypeStruct((Mp, N), out_dtype),
        grid=(Mp // tm,),
        in_specs=[pl.BlockSpec((tm, D), lambda i: (i, 0)),
                  pl.BlockSpec((1, D), lambda i: (0, 0)),
                  pl.BlockSpec((1, D), lambda i: (0, 0)),
                  pl.BlockSpec((D, N), lambda i: (0, 0)),
                  pl.BlockSpec((1, N), lambda i: (0, 0))],
        out_specs=pl.BlockSpec((tm, N), lambda i: (i, 0)),
        compiler_params=pltpu.CompilerParams(dimension_semantics=("parallel",)),
        cost_estimate=pl.CostEstimate(
            flops=2 * Mp * D * N, transcendentals=0,
            bytes_accessed=xp.dtype.itemsize * Mp * D + 4 * Mp * N + 2 * D * N),
    )(xp, g.reshape(1, D), b.reshape(1, D), w, bias.reshape(1, N))
    return out[:M]


# ----------------------------------------------------------------------------
# plain-JAX glue (tiny ops XLA handles for free)
# ----------------------------------------------------------------------------

def maxpool1d(x, k):
    """x: (B, T) -> (B, T//k), kernel=stride=k, padding=0 (== F.max_pool1d)."""
    B, T = x.shape
    To = T // k
    return x[:, :To * k].reshape(B, To, k).max(axis=-1)


# ----------------------------------------------------------------------------
# Parameter init (deterministic, synthetic) — matmul weights stored bf16
# ----------------------------------------------------------------------------

def init_linear(key, k_in, k_out):
    w = (jax.random.normal(key, (k_in, k_out), jnp.float32)
         * (1.0 / math.sqrt(k_in))).astype(jnp.bfloat16)
    b = jnp.zeros((k_out,), jnp.float32)
    return {"w": w, "b": b}


def init_ln(dim):
    return {"g": jnp.ones((dim,), jnp.float32), "b": jnp.zeros((dim,), jnp.float32)}


def init_transformer(key, dim_in, dim, dim_out, depth, heads, ff_mult=4):
    keys = jax.random.split(key, 2 + depth)
    dh = dim // heads
    layers = []
    for d in range(depth):
        lk = jax.random.split(keys[2 + d], 4)
        layers.append({
            "ln1": init_ln(dim),
            "qkv": init_linear(lk[0], dim, 3 * heads * dh),
            "attn_out": init_linear(lk[1], heads * dh, dim),
            "ln2": init_ln(dim),
            # ff_a and ff_g packed side by side -> one MXU matmul in-kernel
            "ff_ag": init_linear(lk[2], dim, 2 * ff_mult * dim),
            "ff_out": init_linear(lk[3], ff_mult * dim, dim),
        })
    return {
        "proj_in": init_linear(keys[0], dim_in, dim),
        "proj_out": init_linear(keys[1], dim, dim_out),
        "final_ln": init_ln(dim),
        "layers": layers,
        "heads": heads,
        "dim": dim,
    }


def init_params(key, args):
    E = args["embedding_dim"]
    keys = jax.random.split(key, 6)
    return {
        "audio_enc": init_linear(keys[0], args["scale_factor"], E),
        "label_encoder": {
            "label_emb": init_linear(keys[1], 4, E),               # nn.Linear(4, embedding_dim)
            "tx": init_transformer(keys[2], dim_in=E,
                                   dim=args["label_encoder_dim"],
                                   dim_out=512,
                                   depth=args["label_encoder_depth"],
                                   heads=args["label_encoder_heads"]),
            "logits_head": init_linear(keys[3], 512, 1),           # unused in forward (dead compute)
        },
        "conf_tx": init_transformer(keys[4], dim_in=512, dim=128, dim_out=1, depth=2, heads=2),
        "cls_token": jax.random.normal(keys[5], (1, 1, 512), jnp.float32),
    }


# ----------------------------------------------------------------------------
# Model components
# ----------------------------------------------------------------------------

def transformer_out(p, h2d, out_dtype=jnp.float32):
    """Fused final LayerNorm + output projection, applied only to needed rows."""
    return ln_linear(h2d, p["final_ln"]["g"], p["final_ln"]["b"],
                     p["proj_out"]["w"], p["proj_out"]["b"], out_dtype=out_dtype)


def audio_encode(p, args, audio):
    # TODO(synk): the pretrained ATST timestamp-embedding encoder (torch.hub
    # checkpoint) has no Pallas equivalent; replaced by a deterministic framed
    # linear projection producing the same (batch, time/scale_factor, embedding)
    # shape.  A depth-4 contraction is left to plain XLA (a pallas_call here is
    # pure dispatch latency).
    B, S = audio.shape
    k = args["scale_factor"]
    expected = S // k
    frames = audio[:, :expected * k].reshape(B, expected, k)
    w = p["audio_enc"]["w"].astype(jnp.float32)
    return jnp.einsum("btk,ke->bte", frames, w) + p["audio_enc"]["b"]   # (B, T, E) f32


def label_encoder_fwd(p, args, sup_enc, sup_labels_ds, q_enc):
    """sup_enc: (Bc, Ts, E), q_enc: (Bc, Tq, E) -> query confidence features (Bc*Tq, 512)."""
    Bc, Ts, E = sup_enc.shape
    Tq = q_enc.shape[1]
    # one_hot(label) @ W + b == W[label] + b  (embedding gather, plain-JAX glue)
    w = p["label_emb"]["w"].astype(jnp.float32)
    b = p["label_emb"]["b"]
    sup_le = w[sup_labels_ds.astype(jnp.int32)] + b                 # (Bc, Ts, E)
    q_le = jnp.broadcast_to(w[3] + b, (Bc, Tq, E))                  # masked class 3
    x = jnp.concatenate([sup_enc + sup_le, q_enc + q_le], axis=1)   # ADD_LABEL_EMBEDDING path
    h = transformer_stack(p["tx"], x, use_rotary=True)              # (Bc, Ts+Tq, dim) bf16
    q_h = h[:, Ts:, :].reshape(Bc * Tq, p["tx"]["dim"])             # only query rows need output
    q_out = transformer_out(p["tx"], q_h, out_dtype=jnp.bfloat16)   # (Bc*Tq, 512) bf16
    # NOTE: the per-chunk logits head (512->1 Conv1d) is skipped — its output is
    # discarded in the reference forward, so it is pure dead compute.
    return q_out


def few_shot_forward(p, args, support_audio, support_labels, query_audio, query_labels=None):
    csz = int(args["sr"] * args["audio_chunk_size_sec"])
    S = support_audio.shape[1]
    pad = (csz - S % csz) % csz
    if pad > 0:  # wrap-pad with the beginning of the support clip (as in the reference)
        support_audio = jnp.concatenate([support_audio, support_audio[:, :pad]], axis=1)
        support_labels = jnp.concatenate([support_labels, support_labels[:, :pad]], axis=1)
    n_chunks = support_audio.shape[1] // csz
    sf = args["scale_factor"]

    q_enc = audio_encode(p, args, query_audio)                      # (B, Tq, E)
    B, Tq, E = q_enc.shape

    # --- batch ALL support chunks along the batch axis: one label-encoder pass ---
    sa = support_audio.reshape(B, n_chunks, csz).transpose(1, 0, 2).reshape(n_chunks * B, csz)
    sl = support_labels.reshape(B, n_chunks, csz).transpose(1, 0, 2).reshape(n_chunks * B, csz)
    s_enc = audio_encode(p, args, sa)                               # (nc*B, Ts, E)
    sl_ds = maxpool1d(sl, sf)                                       # (nc*B, Ts)
    q_rep = jnp.broadcast_to(q_enc[None], (n_chunks, B, Tq, E)).reshape(n_chunks * B, Tq, E)

    q_out = label_encoder_fwd(p["label_encoder"], args, s_enc, sl_ds, q_rep)  # (nc*B*Tq, 512) bf16
    qc = q_out.reshape(n_chunks, B, Tq, 512).transpose(1, 2, 0, 3).reshape(B * Tq, n_chunks, 512)

    cls = jnp.broadcast_to(p["cls_token"].astype(jnp.bfloat16), (B * Tq, 1, 512))
    qc = jnp.concatenate([cls, qc], axis=1)                         # (B*Tq, nc+1, 512) bf16
    h = transformer_stack(p["conf_tx"], qc, use_rotary=False)       # (B*Tq, nc+1, 128) bf16
    cls_h = h[:, 0, :]                                              # only the CLS row is consumed
    query_logits = transformer_out(p["conf_tx"], cls_h).reshape(B, Tq)

    if query_labels is not None:
        query_labels = maxpool1d(query_labels, sf)
    return query_logits, query_labels


# ----------------------------------------------------------------------------

if __name__ == "__main__":
    args = dict(
        sr=16,
        scale_factor=4,
        audio_chunk_size_sec=1.0,      # chunk = 16 samples -> 4 frames per chunk
        support_dur_sec=2.0,
        query_dur_sec=2.0,
        embedding_dim=128,
        label_encoder_dim=128,
        label_encoder_depth=1,
        label_encoder_heads=2,
    )
    key = jax.random.PRNGKey(0)
    pkey, dkey = jax.random.split(key)
    params = init_params(pkey, args)

    k1, k2, k3, k4 = jax.random.split(dkey, 4)
    B = 2
    support_audio = jax.random.normal(k1, (B, 28), jnp.float32)      # padded to 32 -> 2 chunks
    support_labels = jax.random.randint(k2, (B, 28), 0, 3).astype(jnp.float32)
    query_audio = jax.random.normal(k3, (B, 32), jnp.float32)        # 8 frames at scale_factor=4
    query_labels = jax.random.randint(k4, (B, 32), 0, 2).astype(jnp.float32)

    logits, labels_ds = few_shot_forward(params, args, support_audio, support_labels,
                                         query_audio, query_labels)
    jax.block_until_ready((logits, labels_ds))
    assert logits.shape == (B, 32 // args["scale_factor"])
    assert labels_ds.shape == (B, 32 // args["scale_factor"])
    assert bool(jnp.all(jnp.isfinite(logits)))
    print("KERNEL_OK")
</pallas_src>

<mosaic_0001>
module attributes {stable_mosaic.version = 11 : i64} {
  func.func @_tx_stack_kernel(%arg0: i32, %arg1: memref<1x12x128xbf16, #tpu.memory_space<vmem>>, %arg2: memref<12x32xf32, #tpu.memory_space<vmem>>, %arg3: memref<12x32xf32, #tpu.memory_space<vmem>>, %arg4: memref<128x128xbf16, #tpu.memory_space<vmem>>, %arg5: memref<1x128xf32, #tpu.memory_space<vmem>>, %arg6: memref<1x128xf32, #tpu.memory_space<vmem>>, %arg7: memref<1x128xf32, #tpu.memory_space<vmem>>, %arg8: memref<128x384xbf16, #tpu.memory_space<vmem>>, %arg9: memref<1x384xf32, #tpu.memory_space<vmem>>, %arg10: memref<128x128xbf16, #tpu.memory_space<vmem>>, %arg11: memref<1x128xf32, #tpu.memory_space<vmem>>, %arg12: memref<1x128xf32, #tpu.memory_space<vmem>>, %arg13: memref<1x128xf32, #tpu.memory_space<vmem>>, %arg14: memref<128x1024xbf16, #tpu.memory_space<vmem>>, %arg15: memref<1x1024xf32, #tpu.memory_space<vmem>>, %arg16: memref<512x128xbf16, #tpu.memory_space<vmem>>, %arg17: memref<1x128xf32, #tpu.memory_space<vmem>>, %arg18: memref<1x12x128xbf16, #tpu.memory_space<vmem>>) attributes {dimension_semantics = [#tpu.dimension_semantics<parallel>], iteration_bounds = array<i64: 4>, scalar_prefetch = 0 : i64, scratch_operands = 0 : i64, tpu.core_type = #tpu.core_type<tc>, window_params = [{transform_indices = @transform_0, window_bounds = array<i64: 1, 12, 128>}, {pipeline_mode = #tpu.pipeline_mode<synchronous>, transform_indices = @transform_1, window_bounds = array<i64: 12, 32>}, {pipeline_mode = #tpu.pipeline_mode<synchronous>, transform_indices = @transform_2, window_bounds = array<i64: 12, 32>}, {pipeline_mode = #tpu.pipeline_mode<synchronous>, transform_indices = @transform_3, window_bounds = array<i64: 128, 128>}, {pipeline_mode = #tpu.pipeline_mode<synchronous>, transform_indices = @transform_4, window_bounds = array<i64: 1, 128>}, {pipeline_mode = #tpu.pipeline_mode<synchronous>, transform_indices = @transform_5, window_bounds = array<i64: 1, 128>}, {pipeline_mode = #tpu.pipeline_mode<synchronous>, transform_indices = @transform_6, window_bounds = array<i64: 1, 128>}, {pipeline_mode = #tpu.pipeline_mode<synchronous>, transform_indices = @transform_7, window_bounds = array<i64: 128, 384>}, {pipeline_mode = #tpu.pipeline_mode<synchronous>, transform_indices = @transform_8, window_bounds = array<i64: 1, 384>}, {pipeline_mode = #tpu.pipeline_mode<synchronous>, transform_indices = @transform_9, window_bounds = array<i64: 128, 128>}, {pipeline_mode = #tpu.pipeline_mode<synchronous>, transform_indices = @transform_10, window_bounds = array<i64: 1, 128>}, {pipeline_mode = #tpu.pipeline_mode<synchronous>, transform_indices = @transform_11, window_bounds = array<i64: 1, 128>}, {pipeline_mode = #tpu.pipeline_mode<synchronous>, transform_indices = @transform_12, window_bounds = array<i64: 1, 128>}, {pipeline_mode = #tpu.pipeline_mode<synchronous>, transform_indices = @transform_13, window_bounds = array<i64: 128, 1024>}, {pipeline_mode = #tpu.pipeline_mode<synchronous>, transform_indices = @transform_14, window_bounds = array<i64: 1, 1024>}, {pipeline_mode = #tpu.pipeline_mode<synchronous>, transform_indices = @transform_15, window_bounds = array<i64: 512, 128>}, {pipeline_mode = #tpu.pipeline_mode<synchronous>, transform_indices = @transform_16, window_bounds = array<i64: 1, 128>}, {transform_indices = @transform_17, window_bounds = array<i64: 1, 12, 128>}]} {
    %c0 = arith.constant 0 : index
    %c0_0 = arith.constant 0 : index
    %c0_1 = arith.constant 0 : index
    %0 = vector.load %arg1[%c0, %c0_0, %c0_1] : memref<1x12x128xbf16, #tpu.memory_space<vmem>>, vector<1x12x128xbf16>
    %1 = vector.shape_cast %0 : vector<1x12x128xbf16> to vector<12x128xbf16>
    %c0_2 = arith.constant 0 : index
    %c0_3 = arith.constant 0 : index
    %2 = vector.load %arg4[%c0_2, %c0_3] : memref<128x128xbf16, #tpu.memory_space<vmem>>, vector<128x128xbf16>
    %cst = arith.constant dense<0.000000e+00> : vector<12x128xf32>
    %3 = tpu.matmul %1, %2, %cst {dimension_numbers = #tpu.dot_dimension_numbers<[1], [0], [0], [1], [0, 0, 1, 1], [], []>} : vector<12x128xbf16>, vector<128x128xbf16>, vector<12x128xf32> -> vector<12x128xf32>
    %c0_4 = arith.constant 0 : index
    %c0_5 = arith.constant 0 : index
    %4 = vector.load %arg5[%c0_4, %c0_5] : memref<1x128xf32, #tpu.memory_space<vmem>>, vector<1x128xf32>
    %5 = vector.broadcast %4 : vector<1x128xf32> to vector<12x128xf32>
    %6 = arith.addf %3, %5 : vector<12x128xf32>
    %c0_6 = arith.constant 0 : index
    %c0_7 = arith.constant 0 : index
    %7 = vector.load %arg2[%c0_6, %c0_7] : memref<12x32xf32, #tpu.memory_space<vmem>>, vector<12x32xf32>
    %c0_8 = arith.constant 0 : index
    %c0_9 = arith.constant 0 : index
    %8 = vector.load %arg3[%c0_8, %c0_9] : memref<12x32xf32, #tpu.memory_space<vmem>>, vector<12x32xf32>
    %c0_10 = arith.constant 0 : index
    %c0_11 = arith.constant 0 : index
    %9 = vector.load %arg6[%c0_10, %c0_11] : memref<1x128xf32, #tpu.memory_space<vmem>>, vector<1x128xf32>
    %c0_12 = arith.constant 0 : index
    %c0_13 = arith.constant 0 : index
    %10 = vector.load %arg7[%c0_12, %c0_13] : memref<1x128xf32, #tpu.memory_space<vmem>>, vector<1x128xf32>
    %cst_14 = arith.constant dense<0.000000e+00> : vector<12xf32>
    %11 = vector.multi_reduction <add>, %6, %cst_14 [1] : vector<12x128xf32> to vector<12xf32>
    %12 = vector.shape_cast %11 : vector<12xf32> to vector<12x1xf32>
    %cst_15 = arith.constant 1.280000e+02 : f32
    %13 = vector.broadcast %cst_15 : f32 to vector<12x1xf32>
    %14 = arith.divf %12, %13 : vector<12x1xf32>
    %15 = vector.broadcast %14 : vector<12x1xf32> to vector<12x128xf32>
    %16 = arith.subf %6, %15 : vector<12x128xf32>
    %17 = arith.mulf %16, %16 : vector<12x128xf32>
    %cst_16 = arith.constant dense<0.000000e+00> : vector<12xf32>
    %18 = vector.multi_reduction <add>, %17, %cst_16 [1] : vector<12x128xf32> to vector<12xf32>
    %19 = vector.shape_cast %18 : vector<12xf32> to vector<12x1xf32>
    %cst_17 = arith.constant 1.280000e+02 : f32
    %20 = vector.broadcast %cst_17 : f32 to vector<12x1xf32>
    %21 = arith.divf %19, %20 : vector<12x1xf32>
    %22 = vector.broadcast %14 : vector<12x1xf32> to vector<12x128xf32>
    %23 = arith.subf %6, %22 : vector<12x128xf32>
    %cst_18 = arith.constant 9.99999974E-6 : f32
    %24 = vector.broadcast %cst_18 : f32 to vector<12x1xf32>
    %25 = arith.addf %21, %24 : vector<12x1xf32>
    %26 = math.rsqrt %25 : vector<12x1xf32>
    %27 = vector.broadcast %26 : vector<12x1xf32> to vector<12x128xf32>
    %28 = arith.mulf %23, %27 : vector<12x128xf32>
    %29 = vector.broadcast %9 : vector<1x128xf32> to vector<12x128xf32>
    %30 = arith.mulf %28, %29 : vector<12x128xf32>
    %31 = vector.broadcast %10 : vector<1x128xf32> to vector<12x128xf32>
    %32 = arith.addf %30, %31 : vector<12x128xf32>
    %33 = arith.truncf %32 : vector<12x128xf32> to vector<12x128xbf16>
    %c0_19 = arith.constant 0 : index
    %c0_20 = arith.constant 0 : index
    %34 = vector.load %arg8[%c0_19, %c0_20] : memref<128x384xbf16, #tpu.memory_space<vmem>>, vector<128x384xbf16>
    %cst_21 = arith.constant dense<0.000000e+00> : vector<12x384xf32>
    %35 = tpu.matmul %33, %34, %cst_21 {dimension_numbers = #tpu.dot_dimension_numbers<[1], [0], [0], [1], [0, 0, 1, 1], [], []>} : vector<12x128xbf16>, vector<128x384xbf16>, vector<12x384xf32> -> vector<12x384xf32>
    %c0_22 = arith.constant 0 : index
    %c0_23 = arith.constant 0 : index
    %36 = vector.load %arg9[%c0_22, %c0_23] : memref<1x384xf32, #tpu.memory_space<vmem>>, vector<1x384xf32>
    %37 = vector.broadcast %36 : vector<1x384xf32> to vector<12x384xf32>
    %38 = arith.addf %35, %37 : vector<12x384xf32>
    %c0_24 = arith.constant 0 : index
    %c0_25 = arith.constant 0 : index
    %39 = vector.load %arg10[%c0_24, %c0_25] : memref<128x128xbf16, #tpu.memory_space<vmem>>, vector<128x128xbf16>
    %cst_26 = arith.constant 0.000000e+00 : f32
    %40 = vector.broadcast %cst_26 : f32 to vector<12x128xf32>
    %41 = vector.extract_strided_slice %38 {offsets = [0, 0], sizes = [12, 64], strides = [1, 1]} : vector<12x384xf32> to vector<12x64xf32>
    %cst_27 = arith.constant 1.250000e-01 : f32
    %42 = vector.broadcast %cst_27 : f32 to vector<12x64xf32>
    %43 = arith.mulf %41, %42 : vector<12x64xf32>
    %44 = vector.extract_strided_slice %38 {offsets = [0, 128], sizes = [12, 64], strides = [1, 1]} : vector<12x384xf32> to vector<12x64xf32>
    %45 = vector.extract_strided_slice %38 {offsets = [0, 256], sizes = [12, 64], strides = [1, 1]} : vector<12x384xf32> to vector<12x64xf32>
    %46 = vector.extract_strided_slice %43 {offsets = [0, 0], sizes = [12, 32], strides = [1, 1]} : vector<12x64xf32> to vector<12x32xf32>
    %47 = vector.extract_strided_slice %43 {offsets = [0, 32], sizes = [12, 32], strides = [1, 1]} : vector<12x64xf32> to vector<12x32xf32>
    %48 = vector.extract_strided_slice %44 {offsets = [0, 0], sizes = [12, 32], strides = [1, 1]} : vector<12x64xf32> to vector<12x32xf32>
    %49 = vector.extract_strided_slice %44 {offsets = [0, 32], sizes = [12, 32], strides = [1, 1]} : vector<12x64xf32> to vector<12x32xf32>
    %50 = arith.mulf %46, %7 : vector<12x32xf32>
    %51 = arith.mulf %47, %8 : vector<12x32xf32>
    %52 = arith.subf %50, %51 : vector<12x32xf32>
    %53 = arith.truncf %52 : vector<12x32xf32> to vector<12x32xbf16>
    %54 = arith.mulf %46, %8 : vector<12x32xf32>
    %55 = arith.mulf %47, %7 : vector<12x32xf32>
    %56 = arith.addf %54, %55 : vector<12x32xf32>
    %57 = arith.truncf %56 : vector<12x32xf32> to vector<12x32xbf16>
    %58 = arith.mulf %48, %7 : vector<12x32xf32>
    %59 = arith.mulf %49, %8 : vector<12x32xf32>
    %60 = arith.subf %58, %59 : vector<12x32xf32>
    %61 = arith.truncf %60 : vector<12x32xf32> to vector<12x32xbf16>
    %62 = arith.mulf %48, %8 : vector<12x32xf32>
    %63 = arith.mulf %49, %7 : vector<12x32xf32>
    %64 = arith.addf %62, %63 : vector<12x32xf32>
    %65 = arith.truncf %64 : vector<12x32xf32> to vector<12x32xbf16>
    %cst_28 = arith.constant dense<0.000000e+00> : vector<12x12xf32>
    %66 = tpu.matmul %53, %61, %cst_28 {dimension_numbers = #tpu.dot_dimension_numbers<[1], [1], [0], [0], [0, 0, 1, 0], [], []>} : vector<12x32xbf16>, vector<12x32xbf16>, vector<12x12xf32> -> vector<12x12xf32>
    %cst_29 = arith.constant dense<0.000000e+00> : vector<12x12xf32>
    %67 = tpu.matmul %57, %65, %cst_29 {dimension_numbers = #tpu.dot_dimension_numbers<[1], [1], [0], [0], [0, 0, 1, 0], [], []>} : vector<12x32xbf16>, vector<12x32xbf16>, vector<12x12xf32> -> vector<12x12xf32>
    %68 = arith.addf %66, %67 : vector<12x12xf32>
    %cst_30 = arith.constant dense<0xFF800000> : vector<12xf32>
    %69 = vector.multi_reduction <maximumf>, %68, %cst_30 [1] : vector<12x12xf32> to vector<12xf32>
    %70 = vector.shape_cast %69 : vector<12xf32> to vector<12x1xf32>
    %71 = vector.broadcast %70 : vector<12x1xf32> to vector<12x12xf32>
    %72 = arith.subf %68, %71 : vector<12x12xf32>
    %73 = math.exp %72 : vector<12x12xf32>
    %cst_31 = arith.constant dense<0.000000e+00> : vector<12xf32>
    %74 = vector.multi_reduction <add>, %73, %cst_31 [1] : vector<12x12xf32> to vector<12xf32>
    %75 = vector.shape_cast %74 : vector<12xf32> to vector<12x1xf32>
    %76 = tpu.reciprocal %75 {approx = true} : vector<12x1xf32> -> vector<12x1xf32>
    %77 = vector.broadcast %76 : vector<12x1xf32> to vector<12x12xf32>
    %78 = arith.mulf %73, %77 : vector<12x12xf32>
    %79 = arith.truncf %78 : vector<12x12xf32> to vector<12x12xbf16>
    %80 = arith.truncf %45 : vector<12x64xf32> to vector<12x64xbf16>
    %cst_32 = arith.constant dense<0.000000e+00> : vector<12x64xf32>
    %81 = tpu.matmul %79, %80, %cst_32 {dimension_numbers = #tpu.dot_dimension_numbers<[1], [0], [0], [1], [0, 0, 1, 1], [], []>} : vector<12x12xbf16>, vector<12x64xbf16>, vector<12x64xf32> -> vector<12x64xf32>
    %82 = arith.truncf %81 : vector<12x64xf32> to vector<12x64xbf16>
    %83 = vector.extract_strided_slice %39 {offsets = [0, 0], sizes = [64, 128], strides = [1, 1]} : vector<128x128xbf16> to vector<64x128xbf16>
    %cst_33 = arith.constant dense<0.000000e+00> : vector<12x128xf32>
    %84 = tpu.matmul %82, %83, %cst_33 {dimension_numbers = #tpu.dot_dimension_numbers<[1], [0], [0], [1], [0, 0, 1, 1], [], []>} : vector<12x64xbf16>, vector<64x128xbf16>, vector<12x128xf32> -> vector<12x128xf32>
    %85 = arith.addf %40, %84 : vector<12x128xf32>
    %86 = vector.extract_strided_slice %38 {offsets = [0, 64], sizes = [12, 64], strides = [1, 1]} : vector<12x384xf32> to vector<12x64xf32>
    %cst_34 = arith.constant 1.250000e-01 : f32
    %87 = vector.broadcast %cst_34 : f32 to vector<12x64xf32>
    %88 = arith.mulf %86, %87 : vector<12x64xf32>
    %89 = vector.extract_strided_slice %38 {offsets = [0, 192], sizes = [12, 64], strides = [1, 1]} : vector<12x384xf32> to vector<12x64xf32>
    %90 = vector.extract_strided_slice %38 {offsets = [0, 320], sizes = [12, 64], strides = [1, 1]} : vector<12x384xf32> to vector<12x64xf32>
    %91 = vector.extract_strided_slice %88 {offsets = [0, 0], sizes = [12, 32], strides = [1, 1]} : vector<12x64xf32> to vector<12x32xf32>
    %92 = vector.extract_strided_slice %88 {offsets = [0, 32], sizes = [12, 32], strides = [1, 1]} : vector<12x64xf32> to vector<12x32xf32>
    %93 = vector.extract_strided_slice %89 {offsets = [0, 0], sizes = [12, 32], strides = [1, 1]} : vector<12x64xf32> to vector<12x32xf32>
    %94 = vector.extract_strided_slice %89 {offsets = [0, 32], sizes = [12, 32], strides = [1, 1]} : vector<12x64xf32> to vector<12x32xf32>
    %95 = arith.mulf %91, %7 : vector<12x32xf32>
    %96 = arith.mulf %92, %8 : vector<12x32xf32>
    %97 = arith.subf %95, %96 : vector<12x32xf32>
    %98 = arith.truncf %97 : vector<12x32xf32> to vector<12x32xbf16>
    %99 = arith.mulf %91, %8 : vector<12x32xf32>
    %100 = arith.mulf %92, %7 : vector<12x32xf32>
    %101 = arith.addf %99, %100 : vector<12x32xf32>
    %102 = arith.truncf %101 : vector<12x32xf32> to vector<12x32xbf16>
    %103 = arith.mulf %93, %7 : vector<12x32xf32>
    %104 = arith.mulf %94, %8 : vector<12x32xf32>
    %105 = arith.subf %103, %104 : vector<12x32xf32>
    %106 = arith.truncf %105 : vector<12x32xf32> to vector<12x32xbf16>
    %107 = arith.mulf %93, %8 : vector<12x32xf32>
    %108 = arith.mulf %94, %7 : vector<12x32xf32>
    %109 = arith.addf %107, %108 : vector<12x32xf32>
    %110 = arith.truncf %109 : vector<12x32xf32> to vector<12x32xbf16>
    %cst_35 = arith.constant dense<0.000000e+00> : vector<12x12xf32>
    %111 = tpu.matmul %98, %106, %cst_35 {dimension_numbers = #tpu.dot_dimension_numbers<[1], [1], [0], [0], [0, 0, 1, 0], [], []>} : vector<12x32xbf16>, vector<12x32xbf16>, vector<12x12xf32> -> vector<12x12xf32>
    %cst_36 = arith.constant dense<0.000000e+00> : vector<12x12xf32>
    %112 = tpu.matmul %102, %110, %cst_36 {dimension_numbers = #tpu.dot_dimension_numbers<[1], [1], [0], [0], [0, 0, 1, 0], [], []>} : vector<12x32xbf16>, vector<12x32xbf16>, vector<12x12xf32> -> vector<12x12xf32>
    %113 = arith.addf %111, %112 : vector<12x12xf32>
    %cst_37 = arith.constant dense<0xFF800000> : vector<12xf32>
    %114 = vector.multi_reduction <maximumf>, %113, %cst_37 [1] : vector<12x12xf32> to vector<12xf32>
    %115 = vector.shape_cast %114 : vector<12xf32> to vector<12x1xf32>
    %116 = vector.broadcast %115 : vector<12x1xf32> to vector<12x12xf32>
    %117 = arith.subf %113, %116 : vector<12x12xf32>
    %118 = math.exp %117 : vector<12x12xf32>
    %cst_38 = arith.constant dense<0.000000e+00> : vector<12xf32>
    %119 = vector.multi_reduction <add>, %118, %cst_38 [1] : vector<12x12xf32> to vector<12xf32>
    %120 = vector.shape_cast %119 : vector<12xf32> to vector<12x1xf32>
    %121 = tpu.reciprocal %120 {approx = true} : vector<12x1xf32> -> vector<12x1xf32>
    %122 = vector.broadcast %121 : vector<12x1xf32> to vector<12x12xf32>
    %123 = arith.mulf %118, %122 : vector<12x12xf32>
    %124 = arith.truncf %123 : vector<12x12xf32> to vector<12x12xbf16>
    %125 = arith.truncf %90 : vector<12x64xf32> to vector<12x64xbf16>
    %cst_39 = arith.constant dense<0.000000e+00> : vector<12x64xf32>
    %126 = tpu.matmul %124, %125, %cst_39 {dimension_numbers = #tpu.dot_dimension_numbers<[1], [0], [0], [1], [0, 0, 1, 1], [], []>} : vector<12x12xbf16>, vector<12x64xbf16>, vector<12x64xf32> -> vector<12x64xf32>
    %127 = arith.truncf %126 : vector<12x64xf32> to vector<12x64xbf16>
    %128 = vector.extract_strided_slice %39 {offsets = [64, 0], sizes = [64, 128], strides = [1, 1]} : vector<128x128xbf16> to vector<64x128xbf16>
    %cst_40 = arith.constant dense<0.000000e+00> : vector<12x128xf32>
    %129 = tpu.matmul %127, %128, %cst_40 {dimension_numbers = #tpu.dot_dimension_numbers<[1], [0], [0], [1], [0, 0, 1, 1], [], []>} : vector<12x64xbf16>, vector<64x128xbf16>, vector<12x128xf32> -> vector<12x128xf32>
    %130 = arith.addf %85, %129 : vector<12x128xf32>
    %131 = arith.addf %6, %130 : vector<12x128xf32>
    %c0_41 = arith.constant 0 : index
    %c0_42 = arith.constant 0 : index
    %132 = vector.load %arg11[%c0_41, %c0_42] : memref<1x128xf32, #tpu.memory_space<vmem>>, vector<1x128xf32>
    %133 = vector.broadcast %132 : vector<1x128xf32> to vector<12x128xf32>
    %134 = arith.addf %131, %133 : vector<12x128xf32>
    %c0_43 = arith.constant 0 : index
    %c0_44 = arith.constant 0 : index
    %135 = vector.load %arg12[%c0_43, %c0_44] : memref<1x128xf32, #tpu.memory_space<vmem>>, vector<1x128xf32>
    %c0_45 = arith.constant 0 : index
    %c0_46 = arith.constant 0 : index
    %136 = vector.load %arg13[%c0_45, %c0_46] : memref<1x128xf32, #tpu.memory_space<vmem>>, vector<1x128xf32>
    %cst_47 = arith.constant dense<0.000000e+00> : vector<12xf32>
    %137 = vector.multi_reduction <add>, %134, %cst_47 [1] : vector<12x128xf32> to vector<12xf32>
    %138 = vector.shape_cast %137 : vector<12xf32> to vector<12x1xf32>
    %cst_48 = arith.constant 1.280000e+02 : f32
    %139 = vector.broadcast %cst_48 : f32 to vector<12x1xf32>
    %140 = arith.divf %138, %139 : vector<12x1xf32>
    %141 = vector.broadcast %140 : vector<12x1xf32> to vector<12x128xf32>
    %142 = arith.subf %134, %141 : vector<12x128xf32>
    %143 = arith.mulf %142, %142 : vector<12x128xf32>
    %cst_49 = arith.constant dense<0.000000e+00> : vector<12xf32>
    %144 = vector.multi_reduction <add>, %143, %cst_49 [1] : vector<12x128xf32> to vector<12xf32>
    %145 = vector.shape_cast %144 : vector<12xf32> to vector<12x1xf32>
    %cst_50 = arith.constant 1.280000e+02 : f32
    %146 = vector.broadcast %cst_50 : f32 to vector<12x1xf32>
    %147 = arith.divf %145, %146 : vector<12x1xf32>
    %148 = vector.broadcast %140 : vector<12x1xf32> to vector<12x128xf32>
    %149 = arith.subf %134, %148 : vector<12x128xf32>
    %cst_51 = arith.constant 9.99999974E-6 : f32
    %150 = vector.broadcast %cst_51 : f32 to vector<12x1xf32>
    %151 = arith.addf %147, %150 : vector<12x1xf32>
    %152 = math.rsqrt %151 : vector<12x1xf32>
    %153 = vector.broadcast %152 : vector<12x1xf32> to vector<12x128xf32>
    %154 = arith.mulf %149, %153 : vector<12x128xf32>
    %155 = vector.broadcast %135 : vector<1x128xf32> to vector<12x128xf32>
    %156 = arith.mulf %154, %155 : vector<12x128xf32>
    %157 = vector.broadcast %136 : vector<1x128xf32> to vector<12x128xf32>
    %158 = arith.addf %156, %157 : vector<12x128xf32>
    %159 = arith.truncf %158 : vector<12x128xf32> to vector<12x128xbf16>
    %c0_52 = arith.constant 0 : index
    %c0_53 = arith.constant 0 : index
    %160 = vector.load %arg14[%c0_52, %c0_53] : memref<128x1024xbf16, #tpu.memory_space<vmem>>, vector<128x1024xbf16>
    %cst_54 = arith.constant dense<0.000000e+00> : vector<12x1024xf32>
    %161 = tpu.matmul %159, %160, %cst_54 {dimension_numbers = #tpu.dot_dimension_numbers<[1], [0], [0], [1], [0, 0, 1, 1], [], []>} : vector<12x128xbf16>, vector<128x1024xbf16>, vector<12x1024xf32> -> vector<12x1024xf32>
    %c0_55 = arith.constant 0 : index
    %c0_56 = arith.constant 0 : index
    %162 = vector.load %arg15[%c0_55, %c0_56] : memref<1x1024xf32, #tpu.memory_space<vmem>>, vector<1x1024xf32>
    %163 = vector.broadcast %162 : vector<1x1024xf32> to vector<12x1024xf32>
    %164 = arith.addf %161, %163 : vector<12x1024xf32>
    %165 = vector.extract_strided_slice %164 {offsets = [0, 0], sizes = [12, 512], strides = [1, 1]} : vector<12x1024xf32> to vector<12x512xf32>
    %166 = vector.extract_strided_slice %164 {offsets = [0, 512], sizes = [12, 512], strides = [1, 1]} : vector<12x1024xf32> to vector<12x512xf32>
    %167 = arith.negf %166 : vector<12x512xf32>
    %168 = math.exp %167 : vector<12x512xf32>
    %cst_57 = arith.constant 1.000000e+00 : f32
    %169 = vector.broadcast %cst_57 : f32 to vector<12x512xf32>
    %170 = arith.addf %169, %168 : vector<12x512xf32>
    %171 = arith.divf %169, %170 : vector<12x512xf32>
    %172 = arith.mulf %166, %171 : vector<12x512xf32>
    %173 = arith.mulf %165, %172 : vector<12x512xf32>
    %174 = arith.truncf %173 : vector<12x512xf32> to vector<12x512xbf16>
    %c0_58 = arith.constant 0 : index
    %c0_59 = arith.constant 0 : index
    %175 = vector.load %arg16[%c0_58, %c0_59] : memref<512x128xbf16, #tpu.memory_space<vmem>>, vector<512x128xbf16>
    %cst_60 = arith.constant dense<0.000000e+00> : vector<12x128xf32>
    %176 = tpu.matmul %174, %175, %cst_60 {dimension_numbers = #tpu.dot_dimension_numbers<[1], [0], [0], [1], [0, 0, 1, 1], [], []>} : vector<12x512xbf16>, vector<512x128xbf16>, vector<12x128xf32> -> vector<12x128xf32>
    %c0_61 = arith.constant 0 : index
    %c0_62 = arith.constant 0 : index
    %177 = vector.load %arg17[%c0_61, %c0_62] : memref<1x128xf32, #tpu.memory_space<vmem>>, vector<1x128xf32>
    %178 = vector.broadcast %177 : vector<1x128xf32> to vector<12x128xf32>
    %179 = arith.addf %176, %178 : vector<12x128xf32>
    %180 = arith.addf %134, %179 : vector<12x128xf32>
    %181 = arith.truncf %180 : vector<12x128xf32> to vector<12x128xbf16>
    %c0_63 = arith.constant 0 : index
    %c0_64 = arith.constant 0 : index
    %c0_65 = arith.constant 0 : index
    %182 = vector.load %arg18[%c0_63, %c0_64, %c0_65] : memref<1x12x128xbf16, #tpu.memory_space<vmem>>, vector<1x12x128xbf16>
    %183 = vector.shape_cast %182 : vector<1x12x128xbf16> to vector<12x128xbf16>
    %184 = vector.shape_cast %181 : vector<12x128xbf16> to vector<1x12x128xbf16>
    tpu.vector_store %arg18[%c0_63, %c0_64, %c0_65], %184 {strides = array<i32>} : memref<1x12x128xbf16, #tpu.memory_space<vmem>>, vector<1x12x128xbf16>,
    return
  }
  func.func @transform_0(%arg0: i32) -> (i32, i32, i32) {
    %c0_i32 = arith.constant 0 : i32
    %c0_i32_0 = arith.constant 0 : i32
    %c0_i32_1 = arith.constant 0 : i32
    return %arg0, %c0_i32, %c0_i32_0 : i32, i32, i32
  }
  func.func @transform_1(%arg0: i32) -> (i32, i32) {
    %c0_i32 = arith.constant 0 : i32
    %c0_i32_0 = arith.constant 0 : i32
    %c0_i32_1 = arith.constant 0 : i32
    return %c0_i32, %c0_i32_0 : i32, i32
  }
  func.func @transform_2(%arg0: i32) -> (i32, i32) {
    %c0_i32 = arith.constant 0 : i32
    %c0_i32_0 = arith.constant 0 : i32
    %c0_i32_1 = arith.constant 0 : i32
    return %c0_i32, %c0_i32_0 : i32, i32
  }
  func.func @transform_3(%arg0: i32) -> (i32, i32) {
    %c0_i32 = arith.constant 0 : i32
    %c0_i32_0 = arith.constant 0 : i32
    %c0_i32_1 = arith.constant 0 : i32
    return %c0_i32, %c0_i32_0 : i32, i32
  }
  func.func @transform_4(%arg0: i32) -> (i32, i32) {
    %c0_i32 = arith.constant 0 : i32
    %c0_i32_0 = arith.constant 0 : i32
    %c0_i32_1 = arith.constant 0 : i32
    return %c0_i32, %c0_i32_0 : i32, i32
  }
  func.func @transform_5(%arg0: i32) -> (i32, i32) {
    %c0_i32 = arith.constant 0 : i32
    %c0_i32_0 = arith.constant 0 : i32
    %c0_i32_1 = arith.constant 0 : i32
    return %c0_i32, %c0_i32_0 : i32, i32
  }
  func.func @transform_6(%arg0: i32) -> (i32, i32) {
    %c0_i32 = arith.constant 0 : i32
    %c0_i32_0 = arith.constant 0 : i32
    %c0_i32_1 = arith.constant 0 : i32
    return %c0_i32, %c0_i32_0 : i32, i32
  }
  func.func @transform_7(%arg0: i32) -> (i32, i32) {
    %c0_i32 = arith.constant 0 : i32
    %c0_i32_0 = arith.constant 0 : i32
    %c0_i32_1 = arith.constant 0 : i32
    return %c0_i32, %c0_i32_0 : i32, i32
  }
  func.func @transform_8(%arg0: i32) -> (i32, i32) {
    %c0_i32 = arith.constant 0 : i32
    %c0_i32_0 = arith.constant 0 : i32
    %c0_i32_1 = arith.constant 0 : i32
    return %c0_i32, %c0_i32_0 : i32, i32
  }
  func.func @transform_9(%arg0: i32) -> (i32, i32) {
    %c0_i32 = arith.constant 0 : i32
    %c0_i32_0 = arith.constant 0 : i32
    %c0_i32_1 = arith.constant 0 : i32
    return %c0_i32, %c0_i32_0 : i32, i32
  }
  func.func @transform_10(%arg0: i32) -> (i32, i32) {
    %c0_i32 = arith.constant 0 : i32
    %c0_i32_0 = arith.constant 0 : i32
    %c0_i32_1 = arith.constant 0 : i32
    return %c0_i32, %c0_i32_0 : i32, i32
  }
  func.func @transform_11(%arg0: i32) -> (i32, i32) {
    %c0_i32 = arith.constant 0 : i32
    %c0_i32_0 = arith.constant 0 : i32
    %c0_i32_1 = arith.constant 0 : i32
    return %c0_i32, %c0_i32_0 : i32, i32
  }
  func.func @transform_12(%arg0: i32) -> (i32, i32) {
    %c0_i32 = arith.constant 0 : i32
    %c0_i32_0 = arith.constant 0 : i32
    %c0_i32_1 = arith.constant 0 : i32
    return %c0_i32, %c0_i32_0 : i32, i32
  }
  func.func @transform_13(%arg0: i32) -> (i32, i32) {
    %c0_i32 = arith.constant 0 : i32
    %c0_i32_0 = arith.constant 0 : i32
    %c0_i32_1 = arith.constant 0 : i32
    return %c0_i32, %c0_i32_0 : i32, i32
  }
  func.func @transform_14(%arg0: i32) -> (i32, i32) {
    %c0_i32 = arith.constant 0 : i32
    %c0_i32_0 = arith.constant 0 : i32
    %c0_i32_1 = arith.constant 0 : i32
    return %c0_i32, %c0_i32_0 : i32, i32
  }
  func.func @transform_15(%arg0: i32) -> (i32, i32) {
    %c0_i32 = arith.constant 0 : i32
    %c0_i32_0 = arith.constant 0 : i32
    %c0_i32_1 = arith.constant 0 : i32
    return %c0_i32, %c0_i32_0 : i32, i32
  }
  func.func @transform_16(%arg0: i32) -> (i32, i32) {
    %c0_i32 = arith.constant 0 : i32
    %c0_i32_0 = arith.constant 0 : i32
    %c0_i32_1 = arith.constant 0 : i32
    return %c0_i32, %c0_i32_0 : i32, i32
  }
  func.func @transform_17(%arg0: i32) -> (i32, i32, i32) {
    %c0_i32 = arith.constant 0 : i32
    %c0_i32_0 = arith.constant 0 : i32
    %c0_i32_1 = arith.constant 0 : i32
    return %arg0, %c0_i32, %c0_i32_0 : i32, i32, i32
  }
}

</mosaic_0001>

<llo_original>
// kernel: tpu_custom_call.1
$region0: #{tpu_custom_call.1}
  #allocation0 [shape = 'u32[]', space=smem, size = 0x4, offset = 0x4, fixed_abs, tag = 'smem constant byte address 0x4 - core index']
  #allocation1 [shape = 'u32[144,128]{1,0:T(1,128)}', space=vmem, size = 0x12000, scoped, tag = 'internal scratch']
  %s0 = inlined_call_operand.vmem [shape: bf16[4,12,128], index: 0, kind: input, shape index: {}]
  %s1 = inlined_call_operand.hbm [shape: f32[12,32], index: 1, kind: input, shape index: {}]
  %s2 = inlined_call_operand.hbm [shape: f32[12,32], index: 2, kind: input, shape index: {}]
  %s3 = inlined_call_operand.vmem [shape: bf16[128,128], index: 3, kind: input, shape index: {}]
  %s4 = inlined_call_operand.vmem [shape: f32[1,128], index: 4, kind: input, shape index: {}]
  %s5 = inlined_call_operand.vmem [shape: f32[1,128], index: 5, kind: input, shape index: {}]
  %s6 = inlined_call_operand.vmem [shape: f32[1,128], index: 6, kind: input, shape index: {}]
  %s7 = inlined_call_operand.hbm [shape: bf16[128,384], index: 7, kind: input, shape index: {}]
  %s8 = inlined_call_operand.vmem [shape: f32[1,384], index: 8, kind: input, shape index: {}]
  %s9 = inlined_call_operand.hbm [shape: bf16[128,128], index: 9, kind: input, shape index: {}]
  %s10 = inlined_call_operand.vmem [shape: f32[1,128], index: 10, kind: input, shape index: {}]
  %s11 = inlined_call_operand.vmem [shape: f32[1,128], index: 11, kind: input, shape index: {}]
  %s12 = inlined_call_operand.vmem [shape: f32[1,128], index: 12, kind: input, shape index: {}]
  %s13 = inlined_call_operand.hbm [shape: bf16[128,1024], index: 13, kind: input, shape index: {}]
  %s14 = inlined_call_operand.vmem [shape: f32[1,1024], index: 14, kind: input, shape index: {}]
  %s15 = inlined_call_operand.hbm [shape: bf16[512,128], index: 15, kind: input, shape index: {}]
  %s16 = inlined_call_operand.vmem [shape: f32[1,128], index: 16, kind: input, shape index: {}]
  %s17 = inlined_call_operand.vmem [shape: bf16[4,12,128], index: 17, kind: output, shape index: {}]
  %s18 = sld [smem:[#allocation0]]
  $region125: #{tpu_custom_call.1} parent=0
    _
  %s20 = ssub.s32 1, %s18
  %s21 = scalar_select 0, %s20, %s18
  $region1: #{tpu_custom_call.1} parent=0
    #allocation2 [shape = 'u8[8192]{0}', space=vmem, size = 0x2000, scoped, tag = 'input window, operand 1, single buffered']
    #allocation3 [shape = 's32[2]{0}', space=sflag, size = 0x8, scoped, tag = 'scoped memory for tpu_custom_call.1']
    #allocation4 [shape = 'u8[8192]{0}', space=vmem, size = 0x2000, scoped, tag = 'input window, operand 2, single buffered']
    #allocation5 [shape = 's32[1]{0}', space=sflag, size = 0x4, scoped, tag = 'scoped memory for tpu_custom_call.1']
    #allocation6 [shape = 'u8[98304]{0}', space=vmem, size = 0x18000, scoped, tag = 'input window, operand 7, single buffered']
    #allocation7 [shape = 'u8[32768]{0}', space=vmem, size = 0x8000, scoped, tag = 'input window, operand 9, single buffered']
    #allocation8 [shape = 's32[1]{0}', space=sflag, size = 0x4, scoped, tag = 'scoped memory for tpu_custom_call.1']
    #allocation9 [shape = 'u8[262144]{0}', space=vmem, size = 0x40000, scoped, tag = 'input window, operand 13, single buffered']
    #allocation10 [shape = 'u8[131072]{0}', space=vmem, size = 0x20000, scoped, tag = 'input window, operand 15, single buffered']
    #allocation11 [shape = 's32[1]{0}', space=sflag, size = 0x4, scoped, tag = 'scoped memory for tpu_custom_call.1']
    %22 = vsyncpa [#allocation3], 0
    %23 = vsyncpa [#allocation5], 0
    %24 = vsyncpa [#allocation8], 0
    %25 = vsyncpa [#allocation11], 0
    loop: start=0, step=1, limit=6
    $region2: #{tpu_custom_call.1} parent=1 // loop_pre_header
      _
    $region3: #{tpu_custom_call.1} parent=1 // loop_header
      %s27 = sphi 0, %s31
      %p28 = scmp.ge.s32.totalorder %s27, 6
      %s37 = sphi 0, %s39
      %s40 = sphi 0, %s37
      %s41 = sphi 0, %s40
      %s57 = sphi 0, %s41
      %s61 = sphi 0, %s61
      %s63 = sphi 0, %s61
      %s64 = sphi 0, %s63
      %s78 = sphi 0, %s64
      %s82 = sphi 0, %s82
      %s84 = sphi 0, %s82
      %s85 = sphi 0, %s84
      %s99 = sphi 0, %s85
      %s103 = sphi 0, %s103
      %s105 = sphi 0, %s103
      %s106 = sphi 0, %s105
      %s120 = sphi 0, %s106
      %s124 = sphi 0, %s124
      %s126 = sphi 0, %s124
      %s127 = sphi 0, %s126
      %s141 = sphi 0, %s127
      %s145 = sphi 0, %s145
      %s147 = sphi 0, %s145
      %s148 = sphi 0, %s147
      %s162 = sphi 0, %s148
      %s166 = sphi 0, %s166
      %s168 = sphi 0, %s166
      %s169 = sphi 0, %s168
      %s183 = sphi 0, %s169
      %s187 = sphi 0, %s187
      %s189 = sphi 0, %s187
      %s190 = sphi 0, %s189
      %s204 = sphi 0, %s190
      %s208 = sphi 0, %s208
      %s210 = sphi 0, %s208
      %s211 = sphi 0, %s210
      %s225 = sphi 0, %s211
      %s229 = sphi 0, %s229
      %s231 = sphi 0, %s229
      %s232 = sphi 0, %s231
      %s246 = sphi 0, %s232
      %s250 = sphi 0, %s250
      %s252 = sphi 0, %s250
      %s253 = sphi 0, %s252
      %s267 = sphi 0, %s253
      %s271 = sphi 0, %s271
      %s273 = sphi 0, %s271
      %s274 = sphi 0, %s273
      %s288 = sphi 0, %s274
      %s292 = sphi 0, %s292
      %s294 = sphi 0, %s292
      %s295 = sphi 0, %s294
      %s309 = sphi 0, %s295
      %s313 = sphi 0, %s313
      %s315 = sphi 0, %s313
      %s316 = sphi 0, %s315
      %s330 = sphi 0, %s316
      %s334 = sphi 0, %s334
      %s336 = sphi 0, %s334
      %s337 = sphi 0, %s336
      %s351 = sphi 0, %s337
      %s355 = sphi 0, %s355
      %s357 = sphi 0, %s355
      %s358 = sphi 0, %s357
      %s372 = sphi 0, %s358
      %s376 = sphi 0, %s376
      %s378 = sphi 0, %s376
      %s379 = sphi 0, %s378
      %s393 = sphi 0, %s379
      %s399 = sphi 0, %s401
      %s402 = sphi 0, %s399
      %s403 = sphi 0, %s402
      %s419 = sphi 0, %s403
    $region4: #{tpu_custom_call.1} parent=1 // loop_header_branch
      %30 = sbr.rel (%p28) target = $region8
    $region5: #{tpu_custom_call.1} parent=1 // loop_body
      %s32 = ssub.s32 %s27, 1
      %s33 = ssub.s32 %s27, 2
      %s34 = sadd.s32 %s27, 1
      %s35 = ssub.s32 %s27, %s34
      %p36 = scmp.eq.s32.totalorder %s35, 0
      %s38 = sadd.s32 %s37, 1
      %s39 = scalar_select %p36, %s37, %s38
      %p42 = pneg %p36
      %p43 = scmp.eq.s32.totalorder %s27, 3
      %p44 = por %p42, %p43
      %p45 = scmp.ne.s32.totalorder %s37, %s40
      %p46 = scmp.eq.s32.totalorder %s27, 0
      %p47 = por %p45, %p46
      %p48 = scmp.ne.s32.totalorder %s37, %s40
      %p49 = scmp.eq.s32.totalorder %s32, 3
      %p50 = por %p48, %p49
      %p51 = scmp.ne.s32.totalorder %s40, %s41
      %p52 = scmp.eq.s32.totalorder %s32, 0
      %p53 = por %p51, %p52
      %p54 = scmp.ne.s32.totalorder %s40, %s41
      %p55 = scmp.eq.s32.totalorder %s33, 3
      %p56 = por %p54, %p55
      %p58 = scmp.ne.s32.totalorder %s41, %s57
      %p59 = scmp.eq.s32.totalorder %s33, 0
      %p60 = por %p58, %p59
      %s62 = sadd.s32 %s61, 1
      %p65 = scmp.eq.s32.totalorder %s27, 3
      %p66 = scmp.ne.s32.totalorder %s61, %s63
      %p67 = scmp.eq.s32.totalorder %s27, 0
      %p68 = por %p66, %p67
      %p69 = scmp.ne.s32.totalorder %s61, %s63
      %p70 = scmp.eq.s32.totalorder %s32, 3
      %p71 = por %p69, %p70
      %p72 = scmp.ne.s32.totalorder %s63, %s64
      %p73 = scmp.eq.s32.totalorder %s32, 0
      %p74 = por %p72, %p73
      %p75 = scmp.ne.s32.totalorder %s63, %s64
      %p76 = scmp.eq.s32.totalorder %s33, 3
      %p77 = por %p75, %p76
      %p79 = scmp.ne.s32.totalorder %s64, %s78
      %p80 = scmp.eq.s32.totalorder %s33, 0
      %p81 = por %p79, %p80
      %s83 = sadd.s32 %s82, 1
      %p86 = scmp.eq.s32.totalorder %s27, 3
      %p87 = scmp.ne.s32.totalorder %s82, %s84
      %p88 = scmp.eq.s32.totalorder %s27, 0
      %p89 = por %p87, %p88
      %p90 = scmp.ne.s32.totalorder %s82, %s84
      %p91 = scmp.eq.s32.totalorder %s32, 3
      %p92 = por %p90, %p91
      %p93 = scmp.ne.s32.totalorder %s84, %s85
      %p94 = scmp.eq.s32.totalorder %s32, 0
      %p95 = por %p93, %p94
      %p96 = scmp.ne.s32.totalorder %s84, %s85
      %p97 = scmp.eq.s32.totalorder %s33, 3
      %p98 = por %p96, %p97
      %p100 = scmp.ne.s32.totalorder %s85, %s99
      %p101 = scmp.eq.s32.totalorder %s33, 0
      %p102 = por %p100, %p101
      %s104 = sadd.s32 %s103, 1
      %p107 = scmp.eq.s32.totalorder %s27, 3
      %p108 = scmp.ne.s32.totalorder %s103, %s105
      %p109 = scmp.eq.s32.totalorder %s27, 0
      %p110 = por %p108, %p109
      %p111 = scmp.ne.s32.totalorder %s103, %s105
      %p112 = scmp.eq.s32.totalorder %s32, 3
      %p113 = por %p111, %p112
      %p114 = scmp.ne.s32.totalorder %s105, %s106
      %p115 = scmp.eq.s32.totalorder %s32, 0
      %p116 = por %p114, %p115
      %p117 = scmp.ne.s32.totalorder %s105, %s106
      %p118 = scmp.eq.s32.totalorder %s33, 3
      %p119 = por %p117, %p118
      %p121 = scmp.ne.s32.totalorder %s106, %s120
      %p122 = scmp.eq.s32.totalorder %s33, 0
      %p123 = por %p121, %p122
      %s125 = sadd.s32 %s124, 1
      %p128 = scmp.eq.s32.totalorder %s27, 3
      %p129 = scmp.ne.s32.totalorder %s124, %s126
      %p130 = scmp.eq.s32.totalorder %s27, 0
      %p131 = por %p129, %p130
      %p132 = scmp.ne.s32.totalorder %s124, %s126
      %p133 = scmp.eq.s32.totalorder %s32, 3
      %p134 = por %p132, %p133
      %p135 = scmp.ne.s32.totalorder %s126, %s127
      %p136 = scmp.eq.s32.totalorder %s32, 0
      %p137 = por %p135, %p136
      %p138 = scmp.ne.s32.totalorder %s126, %s127
      %p139 = scmp.eq.s32.totalorder %s33, 3
      %p140 = por %p138, %p139
      %p142 = scmp.ne.s32.totalorder %s127, %s141
      %p143 = scmp.eq.s32.totalorder %s33, 0
      %p144 = por %p142, %p143
      %s146 = sadd.s32 %s145, 1
      %p149 = scmp.eq.s32.totalorder %s27, 3
      %p150 = scmp.ne.s32.totalorder %s145, %s147
      %p151 = scmp.eq.s32.totalorder %s27, 0
      %p152 = por %p150, %p151
      %p153 = scmp.ne.s32.totalorder %s145, %s147
      %p154 = scmp.eq.s32.totalorder %s32, 3
      %p155 = por %p153, %p154
      %p156 = scmp.ne.s32.totalorder %s147, %s148
      %p157 = scmp.eq.s32.totalorder %s32, 0
      %p158 = por %p156, %p157
      %p159 = scmp.ne.s32.totalorder %s147, %s148
      %p160 = scmp.eq.s32.totalorder %s33, 3
      %p161 = por %p159, %p160
      %p163 = scmp.ne.s32.totalorder %s148, %s162
      %p164 = scmp.eq.s32.totalorder %s33, 0
      %p165 = por %p163, %p164
      %s167 = sadd.s32 %s166, 1
      %p170 = scmp.eq.s32.totalorder %s27, 3
      %p171 = scmp.ne.s32.totalorder %s166, %s168
      %p172 = scmp.eq.s32.totalorder %s27, 0
      %p173 = por %p171, %p172
      %p174 = scmp.ne.s32.totalorder %s166, %s168
      %p175 = scmp.eq.s32.totalorder %s32, 3
      %p176 = por %p174, %p175
      %p177 = scmp.ne.s32.totalorder %s168, %s169
      %p178 = scmp.eq.s32.totalorder %s32, 0
      %p179 = por %p177, %p178
      %p180 = scmp.ne.s32.totalorder %s168, %s169
      %p181 = scmp.eq.s32.totalorder %s33, 3
      %p182 = por %p180, %p181
      %p184 = scmp.ne.s32.totalorder %s169, %s183
      %p185 = scmp.eq.s32.totalorder %s33, 0
      %p186 = por %p184, %p185
      %s188 = sadd.s32 %s187, 1
      %p191 = scmp.eq.s32.totalorder %s27, 3
      %p192 = scmp.ne.s32.totalorder %s187, %s189
      %p193 = scmp.eq.s32.totalorder %s27, 0
      %p194 = por %p192, %p193
      %p195 = scmp.ne.s32.totalorder %s187, %s189
      %p196 = scmp.eq.s32.totalorder %s32, 3
      %p197 = por %p195, %p196
      %p198 = scmp.ne.s32.totalorder %s189, %s190
      %p199 = scmp.eq.s32.totalorder %s32, 0
      %p200 = por %p198, %p199
      %p201 = scmp.ne.s32.totalorder %s189, %s190
      %p202 = scmp.eq.s32.totalorder %s33, 3
      %p203 = por %p201, %p202
      %p205 = scmp.ne.s32.totalorder %s190, %s204
      %p206 = scmp.eq.s32.totalorder %s33, 0
      %p207 = por %p205, %p206
      %s209 = sadd.s32 %s208, 1
      %p212 = scmp.eq.s32.totalorder %s27, 3
      %p213 = scmp.ne.s32.totalorder %s208, %s210
      %p214 = scmp.eq.s32.totalorder %s27, 0
      %p215 = por %p213, %p214
      %p216 = scmp.ne.s32.totalorder %s208, %s210
      %p217 = scmp.eq.s32.totalorder %s32, 3
      %p218 = por %p216, %p217
      %p219 = scmp.ne.s32.totalorder %s210, %s211
      %p220 = scmp.eq.s32.totalorder %s32, 0
      %p221 = por %p219, %p220
      %p222 = scmp.ne.s32.totalorder %s210, %s211
      %p223 = scmp.eq.s32.totalorder %s33, 3
      %p224 = por %p222, %p223
      %p226 = scmp.ne.s32.totalorder %s211, %s225
      %p227 = scmp.eq.s32.totalorder %s33, 0
      %p228 = por %p226, %p227
      %s230 = sadd.s32 %s229, 1
      %p233 = scmp.eq.s32.totalorder %s27, 3
      %p234 = scmp.ne.s32.totalorder %s229, %s231
      %p235 = scmp.eq.s32.totalorder %s27, 0
      %p236 = por %p234, %p235
      %p237 = scmp.ne.s32.totalorder %s229, %s231
      %p238 = scmp.eq.s32.totalorder %s32, 3
      %p239 = por %p237, %p238
      %p240 = scmp.ne.s32.totalorder %s231, %s232
      %p241 = scmp.eq.s32.totalorder %s32, 0
      %p242 = por %p240, %p241
      %p243 = scmp.ne.s32.totalorder %s231, %s232
      %p244 = scmp.eq.s32.totalorder %s33, 3
      %p245 = por %p243, %p244
      %p247 = scmp.ne.s32.totalorder %s232, %s246
      %p248 = scmp.eq.s32.totalorder %s33, 0
      %p249 = por %p247, %p248
      %s251 = sadd.s32 %s250, 1
      %p254 = scmp.eq.s32.totalorder %s27, 3
      %p255 = scmp.ne.s32.totalorder %s250, %s252
      %p256 = scmp.eq.s32.totalorder %s27, 0
      %p257 = por %p255, %p256
      %p258 = scmp.ne.s32.totalorder %s250, %s252
      %p259 = scmp.eq.s32.totalorder %s32, 3
      %p260 = por %p258, %p259
      %p261 = scmp.ne.s32.totalorder %s252, %s253
      %p262 = scmp.eq.s32.totalorder %s32, 0
      %p263 = por %p261, %p262
      %p264 = scmp.ne.s32.totalorder %s252, %s253
      %p265 = scmp.eq.s32.totalorder %s33, 3
      %p266 = por %p264, %p265
      %p268 = scmp.ne.s32.totalorder %s253, %s267
      %p269 = scmp.eq.s32.totalorder %s33, 0
      %p270 = por %p268, %p269
      %s272 = sadd.s32 %s271, 1
      %p275 = scmp.eq.s32.totalorder %s27, 3
      %p276 = scmp.ne.s32.totalorder %s271, %s273
      %p277 = scmp.eq.s32.totalorder %s27, 0
      %p278 = por %p276, %p277
      %p279 = scmp.ne.s32.totalorder %s271, %s273
      %p280 = scmp.eq.s32.totalorder %s32, 3
      %p281 = por %p279, %p280
      %p282 = scmp.ne.s32.totalorder %s273, %s274
      %p283 = scmp.eq.s32.totalorder %s32, 0
      %p284 = por %p282, %p283
      %p285 = scmp.ne.s32.totalorder %s273, %s274
      %p286 = scmp.eq.s32.totalorder %s33, 3
      %p287 = por %p285, %p286
      %p289 = scmp.ne.s32.totalorder %s274, %s288
      %p290 = scmp.eq.s32.totalorder %s33, 0
      %p291 = por %p289, %p290
      %s293 = sadd.s32 %s292, 1
      %p296 = scmp.eq.s32.totalorder %s27, 3
      %p297 = scmp.ne.s32.totalorder %s292, %s294
      %p298 = scmp.eq.s32.totalorder %s27, 0
      %p299 = por %p297, %p298
      %p300 = scmp.ne.s32.totalorder %s292, %s294
      %p301 = scmp.eq.s32.totalorder %s32, 3
      %p302 = por %p300, %p301
      %p303 = scmp.ne.s32.totalorder %s294, %s295
      %p304 = scmp.eq.s32.totalorder %s32, 0
      %p305 = por %p303, %p304
      %p306 = scmp.ne.s32.totalorder %s294, %s295
      %p307 = scmp.eq.s32.totalorder %s33, 3
      %p308 = por %p306, %p307
      %p310 = scmp.ne.s32.totalorder %s295, %s309
      %p311 = scmp.eq.s32.totalorder %s33, 0
      %p312 = por %p310, %p311
      %s314 = sadd.s32 %s313, 1
      %p317 = scmp.eq.s32.totalorder %s27, 3
      %p318 = scmp.ne.s32.totalorder %s313, %s315
      %p319 = scmp.eq.s32.totalorder %s27, 0
      %p320 = por %p318, %p319
      %p321 = scmp.ne.s32.totalorder %s313, %s315
      %p322 = scmp.eq.s32.totalorder %s32, 3
      %p323 = por %p321, %p322
      %p324 = scmp.ne.s32.totalorder %s315, %s316
      %p325 = scmp.eq.s32.totalorder %s32, 0
      %p326 = por %p324, %p325
      %p327 = scmp.ne.s32.totalorder %s315, %s316
      %p328 = scmp.eq.s32.totalorder %s33, 3
      %p329 = por %p327, %p328
      %p331 = scmp.ne.s32.totalorder %s316, %s330
      %p332 = scmp.eq.s32.totalorder %s33, 0
      %p333 = por %p331, %p332
      %s335 = sadd.s32 %s334, 1
      %p338 = scmp.eq.s32.totalorder %s27, 3
      %p339 = scmp.ne.s32.totalorder %s334, %s336
      %p340 = scmp.eq.s32.totalorder %s27, 0
      %p341 = por %p339, %p340
      %p342 = scmp.ne.s32.totalorder %s334, %s336
      %p343 = scmp.eq.s32.totalorder %s32, 3
      %p344 = por %p342, %p343
      %p345 = scmp.ne.s32.totalorder %s336, %s337
      %p346 = scmp.eq.s32.totalorder %s32, 0
      %p347 = por %p345, %p346
      %p348 = scmp.ne.s32.totalorder %s336, %s337
      %p349 = scmp.eq.s32.totalorder %s33, 3
      %p350 = por %p348, %p349
      %p352 = scmp.ne.s32.totalorder %s337, %s351
      %p353 = scmp.eq.s32.totalorder %s33, 0
      %p354 = por %p352, %p353
      %s356 = sadd.s32 %s355, 1
      %p359 = scmp.eq.s32.totalorder %s27, 3
      %p360 = scmp.ne.s32.totalorder %s355, %s357
      %p361 = scmp.eq.s32.totalorder %s27, 0
      %p362 = por %p360, %p361
      %p363 = scmp.ne.s32.totalorder %s355, %s357
      %p364 = scmp.eq.s32.totalorder %s32, 3
      %p365 = por %p363, %p364
      %p366 = scmp.ne.s32.totalorder %s357, %s358
      %p367 = scmp.eq.s32.totalorder %s32, 0
      %p368 = por %p366, %p367
      %p369 = scmp.ne.s32.totalorder %s357, %s358
      %p370 = scmp.eq.s32.totalorder %s33, 3
      %p371 = por %p369, %p370
      %p373 = scmp.ne.s32.totalorder %s358, %s372
      %p374 = scmp.eq.s32.totalorder %s33, 0
      %p375 = por %p373, %p374
      %s377 = sadd.s32 %s376, 1
      %p380 = scmp.eq.s32.totalorder %s27, 3
      %p381 = scmp.ne.s32.totalorder %s376, %s378
      %p382 = scmp.eq.s32.totalorder %s27, 0
      %p383 = por %p381, %p382
      %p384 = scmp.ne.s32.totalorder %s376, %s378
      %p385 = scmp.eq.s32.totalorder %s32, 3
      %p386 = por %p384, %p385
      %p387 = scmp.ne.s32.totalorder %s378, %s379
      %p388 = scmp.eq.s32.totalorder %s32, 0
      %p389 = por %p387, %p388
      %p390 = scmp.ne.s32.totalorder %s378, %s379
      %p391 = scmp.eq.s32.totalorder %s33, 3
      %p392 = por %p390, %p391
      %p394 = scmp.ne.s32.totalorder %s379, %s393
      %p395 = scmp.eq.s32.totalorder %s33, 0
      %p396 = por %p394, %p395
      %s397 = ssub.s32 %s27, %s34
      %p398 = scmp.eq.s32.totalorder %s397, 0
      %s400 = sadd.s32 %s399, 1
      %s401 = scalar_select %p398, %s399, %s400
      %p404 = pneg %p398
      %p405 = scmp.eq.s32.totalorder %s27, 3
      %p406 = por %p404, %p405
      %p407 = scmp.ne.s32.totalorder %s399, %s402
      %p408 = scmp.eq.s32.totalorder %s27, 0
      %p409 = por %p407, %p408
      %p410 = scmp.ne.s32.totalorder %s399, %s402
      %p411 = scmp.eq.s32.totalorder %s32, 3
      %p412 = por %p410, %p411
      %p413 = scmp.ne.s32.totalorder %s402, %s403
      %p414 = scmp.eq.s32.totalorder %s32, 0
      %p415 = por %p413, %p414
      %p416 = scmp.ne.s32.totalorder %s402, %s403
      %p417 = scmp.eq.s32.totalorder %s33, 3
      %p418 = por %p416, %p417
      %p420 = scmp.ne.s32.totalorder %s403, %s419
      %p421 = scmp.eq.s32.totalorder %s33, 0
      %p422 = por %p420, %p421
      %p423 = scmp.le.s32.totalorder 1, %s27
      %p424 = scmp.lt.s32.totalorder %s27, 5
      %p425 = pnand %p423, %p424
      %p426 = pneg %p425
      // Predicated region
      $region9: #{tpu_custom_call.1} parent=5 // pred_check
        _
      $region10: #{tpu_custom_call.1} parent=5 // pred_check_branch
        %428 = sbr.rel (%p425) target = $region12
      $region11: #{tpu_custom_call.1} parent=5 // pred_region
        %s429 = ssub.s32 %s27, 1
        // Predicated region
        $region13: #{tpu_custom_call.1} parent=11 // pred_check
          %p430 = pneg %p74
        $region14: #{tpu_custom_call.1} parent=11 // pred_check_branch
          %432 = sbr.rel (%p430) target = $region16
        $region15: #{tpu_custom_call.1} parent=11 // pred_region
          %s434 = ssub.s32 256, 256
          %435 = vsyncadd [#allocation3], %s434
          %s436 = sshll.u32 [#allocation2], 4
          %s437 = int_to_ptr.vmem [resolvable:$true] %s436
          %442 = dma.hbm_to_vmem [thread:$0]  %s1, 256, %s437, [#allocation3], 128, 128, 8
        $region16: #{tpu_custom_call.1} parent=11 // pred_fallthru
          _
        // Predicated region
        $region17: #{tpu_custom_call.1} parent=11 // pred_check
          %p443 = pneg %p95
        $region18: #{tpu_custom_call.1} parent=11 // pred_check_branch
          %445 = sbr.rel (%p443) target = $region20
        $region19: #{tpu_custom_call.1} parent=11 // pred_region
          %s447 = ssub.s32 256, 256
          %448 = vsyncadd [#allocation5], %s447
          %s449 = sshll.u32 [#allocation4], 4
          %s450 = int_to_ptr.vmem [resolvable:$true] %s449
          %455 = dma.hbm_to_vmem [thread:$0]  %s2, 256, %s450, [#allocation5], 128, 128, 8
        $region20: #{tpu_custom_call.1} parent=11 // pred_fallthru
          _
        // Predicated region
        $region21: #{tpu_custom_call.1} parent=11 // pred_check
          %p456 = pneg %p116
        $region22: #{tpu_custom_call.1} parent=11 // pred_check_branch
          %458 = sbr.rel (%p456) target = $region24
        $region23: #{tpu_custom_call.1} parent=11 // pred_region
          _
        $region24: #{tpu_custom_call.1} parent=11 // pred_fallthru
          _
        // Predicated region
        $region25: #{tpu_custom_call.1} parent=11 // pred_check
          %p459 = pneg %p137
        $region26: #{tpu_custom_call.1} parent=11 // pred_check_branch
          %461 = sbr.rel (%p459) target = $region28
        $region27: #{tpu_custom_call.1} parent=11 // pred_region
          _
        $region28: #{tpu_custom_call.1} parent=11 // pred_fallthru
          _
        // Predicated region
        $region29: #{tpu_custom_call.1} parent=11 // pred_check
          %p462 = pneg %p158
        $region30: #{tpu_custom_call.1} parent=11 // pred_check_branch
          %464 = sbr.rel (%p462) target = $region32
        $region31: #{tpu_custom_call.1} parent=11 // pred_region
          _
        $region32: #{tpu_custom_call.1} parent=11 // pred_fallthru
          _
        // Predicated region
        $region33: #{tpu_custom_call.1} parent=11 // pred_check
          %p465 = pneg %p179
        $region34: #{tpu_custom_call.1} parent=11 // pred_check_branch
          %467 = sbr.rel (%p465) target = $region36
        $region35: #{tpu_custom_call.1} parent=11 // pred_region
          _
        $region36: #{tpu_custom_call.1} parent=11 // pred_fallthru
          _
        // Predicated region
        $region37: #{tpu_custom_call.1} parent=11 // pred_check
          %p468 = pneg %p200
        $region38: #{tpu_custom_call.1} parent=11 // pred_check_branch
          %470 = sbr.rel (%p468) target = $region40
        $region39: #{tpu_custom_call.1} parent=11 // pred_region
          %s472 = ssub.s32 3072, 3072
          %473 = vsyncadd [#allocation5], %s472
          %s474 = sshll.u32 [#allocation6], 4
          %s475 = int_to_ptr.vmem [resolvable:$true] %s474
          %480 = dma.hbm_to_vmem [thread:$0]  %s7, 3072, %s475, [#allocation5], 192, 192, 12
        $region40: #{tpu_custom_call.1} parent=11 // pred_fallthru
          _
        // Predicated region
        $region41: #{tpu_custom_call.1} parent=11 // pred_check
          %p481 = pneg %p221
        $region42: #{tpu_custom_call.1} parent=11 // pred_check_branch
          %483 = sbr.rel (%p481) target = $region44
        $region43: #{tpu_custom_call.1} parent=11 // pred_region
          _
        $region44: #{tpu_custom_call.1} parent=11 // pred_fallthru
          _
        // Predicated region
        $region45: #{tpu_custom_call.1} parent=11 // pred_check
          %p484 = pneg %p242
        $region46: #{tpu_custom_call.1} parent=11 // pred_check_branch
          %486 = sbr.rel (%p484) target = $region48
        $region47: #{tpu_custom_call.1} parent=11 // pred_region
          %s488 = ssub.s32 1024, 1024
          %489 = vsyncadd [#allocation8], %s488
          %s490 = sshll.u32 [#allocation7], 4
          %s491 = int_to_ptr.vmem [resolvable:$true] %s490
          %496 = dma.hbm_to_vmem [thread:$0]  %s9, 1024, %s491, [#allocation8], 64, 64, 4
        $region48: #{tpu_custom_call.1} parent=11 // pred_fallthru
          _
        // Predicated region
        $region49: #{tpu_custom_call.1} parent=11 // pred_check
          %p497 = pneg %p263
        $region50: #{tpu_custom_call.1} parent=11 // pred_check_branch
          %499 = sbr.rel (%p497) target = $region52
        $region51: #{tpu_custom_call.1} parent=11 // pred_region
          _
        $region52: #{tpu_custom_call.1} parent=11 // pred_fallthru
          _
        // Predicated region
        $region53: #{tpu_custom_call.1} parent=11 // pred_check
          %p500 = pneg %p284
        $region54: #{tpu_custom_call.1} parent=11 // pred_check_branch
          %502 = sbr.rel (%p500) target = $region56
        $region55: #{tpu_custom_call.1} parent=11 // pred_region
          _
        $region56: #{tpu_custom_call.1} parent=11 // pred_fallthru
          _
        // Predicated region
        $region57: #{tpu_custom_call.1} parent=11 // pred_check
          %p503 = pneg %p305
        $region58: #{tpu_custom_call.1} parent=11 // pred_check_branch
          %505 = sbr.rel (%p503) target = $region60
        $region59: #{tpu_custom_call.1} parent=11 // pred_region
          _
        $region60: #{tpu_custom_call.1} parent=11 // pred_fallthru
          _
        // Predicated region
        $region61: #{tpu_custom_call.1} parent=11 // pred_check
          %p506 = pneg %p326
        $region62: #{tpu_custom_call.1} parent=11 // pred_check_branch
          %508 = sbr.rel (%p506) target = $region64
        $region63: #{tpu_custom_call.1} parent=11 // pred_region
          %s510 = ssub.s32 8192, 8192
          %511 = vsyncadd [#allocation8], %s510
          %s512 = sshll.u32 [#allocation9], 4
          %s513 = int_to_ptr.vmem [resolvable:$true] %s512
          %518 = dma.hbm_to_vmem [thread:$0]  %s13, 8192, %s513, [#allocation8], 512, 512, 32
        $region64: #{tpu_custom_call.1} parent=11 // pred_fallthru
          _
        // Predicated region
        $region65: #{tpu_custom_call.1} parent=11 // pred_check
          %p519 = pneg %p347
        $region66: #{tpu_custom_call.1} parent=11 // pred_check_branch
          %521 = sbr.rel (%p519) target = $region68
        $region67: #{tpu_custom_call.1} parent=11 // pred_region
          _
        $region68: #{tpu_custom_call.1} parent=11 // pred_fallthru
          _
        // Predicated region
        $region69: #{tpu_custom_call.1} parent=11 // pred_check
          %p522 = pneg %p368
        $region70: #{tpu_custom_call.1} parent=11 // pred_check_branch
          %524 = sbr.rel (%p522) target = $region72
        $region71: #{tpu_custom_call.1} parent=11 // pred_region
          %s526 = ssub.s32 4096, 4096
          %527 = vsyncadd [#allocation11], %s526
          %s528 = sshll.u32 [#allocation10], 4
          %s529 = int_to_ptr.vmem [resolvable:$true] %s528
          %534 = dma.hbm_to_vmem [thread:$0]  %s15, 4096, %s529, [#allocation11], 64, 64, 4
        $region72: #{tpu_custom_call.1} parent=11 // pred_fallthru
          _
        // Predicated region
        $region73: #{tpu_custom_call.1} parent=11 // pred_check
          %p535 = pneg %p389
        $region74: #{tpu_custom_call.1} parent=11 // pred_check_branch
          %537 = sbr.rel (%p535) target = $region76
        $region75: #{tpu_custom_call.1} parent=11 // pred_region
          _
        $region76: #{tpu_custom_call.1} parent=11 // pred_fallthru
          _
      $region12: #{tpu_custom_call.1} parent=5 // pred_fallthru
        _
      %p538 = scmp.lt.s32.totalorder %s27, 4
      // Predicated region
      $region77: #{tpu_custom_call.1} parent=5 // pred_check
        %p539 = pneg %p538
      $region78: #{tpu_custom_call.1} parent=5 // pred_check_branch
        %541 = sbr.rel (%p539) target = $region80
      $region79: #{tpu_custom_call.1} parent=5 // pred_region
        // Predicated region
        $region81: #{tpu_custom_call.1} parent=79 // pred_check
          %p542 = pneg %p47
        $region82: #{tpu_custom_call.1} parent=79 // pred_check_branch
          %544 = sbr.rel (%p542) target = $region84
        $region83: #{tpu_custom_call.1} parent=79 // pred_region
          %p545 = scmp.lt.s32.totalorder %s27, 3
          %s546 = scalar_select %p545, %s27, 3
          %s547 = smul.addr %s546, 2
          %s548 = smul.addr %s547, 4
          %s549 = scalar_lea.vmem %s0, %s548
        $region84: #{tpu_custom_call.1} parent=79 // pred_fallthru
          _
      $region80: #{tpu_custom_call.1} parent=5 // pred_fallthru
        _
      %p550 = scmp.le.s32.totalorder 1, %s27
      %p551 = scmp.lt.s32.totalorder %s27, 5
      %p552 = pnand %p550, %p551
      %p553 = pneg %p552
      // Predicated region
      $region85: #{tpu_custom_call.1} parent=5 // pred_check
        _
      $region86: #{tpu_custom_call.1} parent=5 // pred_check_branch
        %555 = sbr.rel (%p552) target = $region88
      $region87: #{tpu_custom_call.1} parent=5 // pred_region
        %s556 = ssub.s32 %s27, 1
        // Predicated region
        $region89: #{tpu_custom_call.1} parent=87 // pred_check
          %p557 = pneg %p74
        $region90: #{tpu_custom_call.1} parent=87 // pred_check_branch
          %559 = sbr.rel (%p557) target = $region92
        $region91: #{tpu_custom_call.1} parent=87 // pred_region
          %560 = dma.done [#allocation3], 256
        $region92: #{tpu_custom_call.1} parent=87 // pred_fallthru
          _
        // Predicated region
        $region93: #{tpu_custom_call.1} parent=87 // pred_check
          %p561 = pneg %p95
        $region94: #{tpu_custom_call.1} parent=87 // pred_check_branch
          %563 = sbr.rel (%p561) target = $region96
        $region95: #{tpu_custom_call.1} parent=87 // pred_region
          %564 = dma.done [#allocation5], 256
        $region96: #{tpu_custom_call.1} parent=87 // pred_fallthru
          _
        // Predicated region
        $region97: #{tpu_custom_call.1} parent=87 // pred_check
          %p565 = pneg %p200
        $region98: #{tpu_custom_call.1} parent=87 // pred_check_branch
          %567 = sbr.rel (%p565) target = $region100
        $region99: #{tpu_custom_call.1} parent=87 // pred_region
          %568 = dma.done [#allocation5], 3072
        $region100: #{tpu_custom_call.1} parent=87 // pred_fallthru
          _
        // Predicated region
        $region101: #{tpu_custom_call.1} parent=87 // pred_check
          %p569 = pneg %p242
        $region102: #{tpu_custom_call.1} parent=87 // pred_check_branch
          %571 = sbr.rel (%p569) target = $region104
        $region103: #{tpu_custom_call.1} parent=87 // pred_region
          %572 = dma.done [#allocation8], 1024
        $region104: #{tpu_custom_call.1} parent=87 // pred_fallthru
          _
        // Predicated region
        $region105: #{tpu_custom_call.1} parent=87 // pred_check
          %p573 = pneg %p326
        $region106: #{tpu_custom_call.1} parent=87 // pred_check_branch
          %575 = sbr.rel (%p573) target = $region108
        $region107: #{tpu_custom_call.1} parent=87 // pred_region
          %576 = dma.done [#allocation8], 8192
        $region108: #{tpu_custom_call.1} parent=87 // pred_fallthru
          _
        // Predicated region
        $region109: #{tpu_custom_call.1} parent=87 // pred_check
          %p577 = pneg %p368
        $region110: #{tpu_custom_call.1} parent=87 // pred_check_branch
          %579 = sbr.rel (%p577) target = $region112
        $region111: #{tpu_custom_call.1} parent=87 // pred_region
          %580 = dma.done [#allocation11], 4096
        $region112: #{tpu_custom_call.1} parent=87 // pred_fallthru
          _
        %p581 = scmp.lt.s32.totalorder %s32, 3
        %s582 = scalar_select %p581, %s32, 3
        %s583 = smul.addr %s582, 2
        %s584 = smul.addr %s583, 4
        %s585 = scalar_lea.vmem %s0, %s584
        %p586 = pneg %p53
        %p587 = pneg %p50
        %p588 = pneg %p74
        %p589 = pneg %p71
        %p590 = pneg %p95
        %p591 = pneg %p92
        %p592 = pneg %p116
        %p593 = pneg %p113
        %p594 = pneg %p137
        %p595 = pneg %p134
        %p596 = pneg %p158
        %p597 = pneg %p155
        %p598 = pneg %p179
        %p599 = pneg %p176
        %p600 = pneg %p200
        %p601 = pneg %p197
        %p602 = pneg %p221
        %p603 = pneg %p218
        %p604 = pneg %p242
        %p605 = pneg %p239
        %p606 = pneg %p263
        %p607 = pneg %p260
        %p608 = pneg %p284
        %p609 = pneg %p281
        %p610 = pneg %p305
        %p611 = pneg %p302
        %p612 = pneg %p326
        %p613 = pneg %p323
        %p614 = pneg %p347
        %p615 = pneg %p344
        %p616 = pneg %p368
        %p617 = pneg %p365
        %p618 = pneg %p389
        %p619 = pneg %p386
        %p620 = pneg %p415
        %p621 = pneg %p412
        %p622 = scmp.lt.s32.totalorder %s32, 3
        %s623 = scalar_select %p622, %s32, 3
        %s624 = smul.addr %s623, 2
        %s625 = smul.addr %s624, 4
        %s626 = scalar_lea.vmem %s17, %s625
        %p627 = scmp.lt.s32.totalorder %s32, 3
        %s628 = scalar_select %p627, %s32, 3
        %s629 = smul.addr %s628, 2
        %s630 = smul.addr %s629, 4
        %s631 = scalar_lea.vmem %s0, %s630
        %p632 = scmp.lt.s32.totalorder %s32, 3
        %s633 = scalar_select %p632, %s32, 3
        %s634 = smul.addr %s633, 2
        %s635 = smul.addr %s634, 4
        %s636 = scalar_lea.vmem %s17, %s635
        %v638 = vld [vmem:[%s631] sm:$0xf]
        %v639 = vld [vmem:[%s631 + $0x4] sm:$0x3]
        %v640 = vld [vmem:[%s3] sm:$0xf]
        %v641 = vld [vmem:[%s3 + $0x4] sm:$0xf]
        %v642 = vld [vmem:[%s3 + $0x8] sm:$0xf]
        %v643 = vld [vmem:[%s3 + $0xc] sm:$0xf]
        %v644 = vld [vmem:[%s3 + $0x10] sm:$0xf]
        %v645 = vld [vmem:[%s3 + $0x14] sm:$0xf]
        %v646 = vld [vmem:[%s3 + $0x18] sm:$0xf]
        %v647 = vld [vmem:[%s3 + $0x1c] sm:$0xf]
        %v648 = vld [vmem:[%s3 + $0x20] sm:$0xf]
        %v649 = vld [vmem:[%s3 + $0x24] sm:$0xf]
        %v650 = vld [vmem:[%s3 + $0x28] sm:$0xf]
        %v651 = vld [vmem:[%s3 + $0x2c] sm:$0xf]
        %v652 = vld [vmem:[%s3 + $0x30] sm:$0xf]
        %v653 = vld [vmem:[%s3 + $0x34] sm:$0xf]
        %v654 = vld [vmem:[%s3 + $0x38] sm:$0xf]
        %v655 = vld [vmem:[%s3 + $0x3c] sm:$0xf]
        %v656 = vld [vmem:[%s4] sm:$0x1]
        %v658 = vlaneseq
        %v659 = vshrl.u32 %v658, 7
        %v660 = vsub.s32 0, %v659
        %v661 = vrot.slane %v656, %v660
        %v665 = vunpack.c.l.b16 %v638
        %v666 = vunpack.c.l.b16 %v639
        %v667 = vpack.c.b16 %v666, %v665
        %v685 = vunpack.c.l.b16 %v640
        %v686 = vunpack.c.l.b16 %v641
        %v687 = vunpack.c.l.b16 %v642
        %v688 = vunpack.c.l.b16 %v643
        %v689 = vunpack.c.l.b16 %v644
        %v690 = vunpack.c.l.b16 %v645
        %v691 = vunpack.c.l.b16 %v646
        %v692 = vunpack.c.l.b16 %v647
        %v693 = vunpack.c.l.b16 %v648
        %v694 = vunpack.c.l.b16 %v649
        %v695 = vunpack.c.l.b16 %v650
        %v696 = vunpack.c.l.b16 %v651
        %v697 = vunpack.c.l.b16 %v652
        %v698 = vunpack.c.l.b16 %v653
        %v699 = vunpack.c.l.b16 %v654
        %v700 = vunpack.c.l.b16 %v655
        %v701 = vpack.c.b16 %v686, %v685
        %v702 = vpack.c.b16 %v688, %v687
        %v703 = vpack.c.b16 %v690, %v689
        %v704 = vpack.c.b16 %v692, %v691
        %v705 = vpack.c.b16 %v694, %v693
        %v706 = vpack.c.b16 %v696, %v695
        %v707 = vpack.c.b16 %v698, %v697
        %v708 = vpack.c.b16 %v700, %v699
        %717 = vmatprep.subr.bf16.mxu0 0
        %718 = vmatpush1.bf16.msra.mxu0 %v701
        %719 = vmatprep.subr.bf16.mxu0 0
        %720 = vmatpush1.bf16.msra.mxu0 %v702
        %721 = vmatprep.subr.bf16.mxu0 0
        %722 = vmatpush1.bf16.msra.mxu0 %v703
        %723 = vmatprep.subr.bf16.mxu0 0
        %724 = vmatpush1.bf16.msra.mxu0 %v704
        %725 = vmatprep.subr.bf16.mxu0 0
        %726 = vmatpush1.bf16.msra.mxu0 %v705
        %727 = vmatprep.subr.bf16.mxu0 0
        %728 = vmatpush1.bf16.msra.mxu0 %v706
        %729 = vmatprep.subr.bf16.mxu0 0
        %730 = vmatpush1.bf16.msra.mxu0 %v707
        %731 = vmatprep.subr.bf16.mxu0 0
        %732 = vmatpush1.bf16.msra.mxu0 %v708
        %733 = vmatprep.subr.bf16.mxu0 0
        %734 = vmatpush1.bf16.msra.mxu0 0
        %735 = vmatprep.subr.bf16.mxu0 0
        %736 = vmatpush1.bf16.msra.mxu0 0
        %737 = vmatprep.subr.bf16.mxu0 0
        %738 = vmatpush1.bf16.msra.mxu0 0
        %739 = vmatprep.subr.bf16.mxu0 0
        %740 = vmatpush1.bf16.msra.mxu0 0
        %741 = vmatprep.subr.bf16.mxu0 0
        %742 = vmatpush1.bf16.msra.mxu0 0
        %743 = vmatprep.subr.bf16.mxu0 0
        %744 = vmatpush1.bf16.msra.mxu0 0
        %745 = vmatprep.subr.bf16.mxu0 0
        %746 = vmatpush1.bf16.msra.mxu0 0
        %747 = vmatprep.subr.bf16.mxu0 0
        %748 = vmatpush1.bf16.msra.mxu0 0
        %749 = vmatprep.mubr.bf16.mxu0 0
        %750 = vmatmul.mubr.bf16.gmra.mrb[0].mxu0 %v667
        %v751 = vpop.f32.mrb[0].mxu0
        %v752 = vadd.f32 %v661, %v751
        %v753 = vpop.f32.mrb[0].mxu0
        %v754 = vpop.f32.mrb[0].mxu0
        %v755 = vadd.f32 %v661, %v754
        %v756 = vpop.f32.mrb[0].mxu0
        %757 = vdwg.mxu0
        %v758 = vld [vmem:[#allocation2] sm:$0xff]
        %v759 = vld [vmem:[#allocation2 + $0x8] sm:$0xf]
        %v760 = vld [vmem:[#allocation4] sm:$0xff]
        %v761 = vld [vmem:[#allocation4 + $0x8] sm:$0xf]
        %v762 = vld [vmem:[%s5] sm:$0x1]
        %v763 = vld [vmem:[%s6] sm:$0x1]
        %764 = vadd.xlane.f32.xlu0 %v752
        %v765 = vpop.xlane.xlu0 %764
        %vm766 = vcmask 1043456
        %v767 = vsel %vm766, %v755, 0.0
        %768 = vadd.xlane.f32.xlu0 %v767
        %v769 = vpop.xlane.xlu0 %768
        %v770 = vrcp.pop 128.0
        %v771 = vmul.f32 %v765, %v770
        %v772 = vmul.f32 %v769, %v770
        %v773 = vsub.f32 %v752, %v771
        %v774 = vsub.f32 %v755, %v772
        %v775 = vmul.f32 %v773, %v773
        %v776 = vmul.f32 %v774, %v774
        %777 = vadd.xlane.f32.xlu0 %v775
        %v778 = vpop.xlane.xlu0 %777
        %v779 = vsel %vm766, %v776, 0.0
        %780 = vadd.xlane.f32.xlu0 %v779
        %v781 = vpop.xlane.xlu0 %780
        %v782 = vmul.f32 %v778, %v770
        %v783 = vmul.f32 %v781, %v770
        %v784 = vadd.f32 %v782, 1e-05
        %v785 = vadd.f32 %v783, 1e-05
        %v786 = vrsqrt.pop %v784
        %v787 = vrsqrt.pop %v785
        %v788 = vmul.f32 %v773, %v786
        %v789 = vmul.f32 %v774, %v787
        %v791 = vlaneseq
        %v792 = vshrl.u32 %v791, 7
        %v793 = vsub.s32 0, %v792
        %v794 = vrot.slane %v762, %v793
        %v796 = vmul.f32 %v788, %v794
        %v797 = vmul.f32 %v789, %v794
        %v799 = vlaneseq
        %v800 = vshrl.u32 %v799, 7
        %v801 = vsub.s32 0, %v800
        %v802 = vrot.slane %v763, %v801
        %v804 = vadd.f32 %v796, %v802
        %v805 = vadd.f32 %v797, %v802
        %v806 = vpack.c.bf16 %v805, %v804
        %v807 = vld [vmem:[#allocation6] sm:$0xff]
        %v808 = vld [vmem:[#allocation6 + $0x8] sm:$0xf]
        %v809 = vld [vmem:[#allocation6 + $0xc] sm:$0xff]
        %v810 = vld [vmem:[#allocation6 + $0x14] sm:$0xf]
        %v811 = vld [vmem:[#allocation6 + $0x18] sm:$0xff]
        %v812 = vld [vmem:[#allocation6 + $0x20] sm:$0xf]
        %v813 = vld [vmem:[#allocation6 + $0x24] sm:$0xff]
        %v814 = vld [vmem:[#allocation6 + $0x2c] sm:$0xf]
        %v815 = vld [vmem:[#allocation6 + $0x30] sm:$0xff]
        %v816 = vld [vmem:[#allocation6 + $0x38] sm:$0xf]
        %v817 = vld [vmem:[#allocation6 + $0x3c] sm:$0xff]
        %v818 = vld [vmem:[#allocation6 + $0x44] sm:$0xf]
        %v819 = vld [vmem:[#allocation6 + $0x48] sm:$0xff]
        %v820 = vld [vmem:[#allocation6 + $0x50] sm:$0xf]
        %v821 = vld [vmem:[#allocation6 + $0x54] sm:$0xff]
        %v822 = vld [vmem:[#allocation6 + $0x5c] sm:$0xf]
        %v823 = vld [vmem:[#allocation6 + $0x60] sm:$0xff]
        %v824 = vld [vmem:[#allocation6 + $0x68] sm:$0xf]
        %v825 = vld [vmem:[#allocation6 + $0x6c] sm:$0xff]
        %v826 = vld [vmem:[#allocation6 + $0x74] sm:$0xf]
        %v827 = vld [vmem:[#allocation6 + $0x78] sm:$0xff]
        %v828 = vld [vmem:[#allocation6 + $0x80] sm:$0xf]
        %v829 = vld [vmem:[#allocation6 + $0x84] sm:$0xff]
        %v830 = vld [vmem:[#allocation6 + $0x8c] sm:$0xf]
        %v831 = vld [vmem:[#allocation6 + $0x90] sm:$0xff]
        %v832 = vld [vmem:[#allocation6 + $0x98] sm:$0xf]
        %v833 = vld [vmem:[#allocation6 + $0x9c] sm:$0xff]
        %v834 = vld [vmem:[#allocation6 + $0xa4] sm:$0xf]
        %v835 = vld [vmem:[#allocation6 + $0xa8] sm:$0xff]
        %v836 = vld [vmem:[#allocation6 + $0xb0] sm:$0xf]
        %v837 = vld [vmem:[#allocation6 + $0xb4] sm:$0xff]
        %v838 = vld [vmem:[#allocation6 + $0xbc] sm:$0xf]
        %v839 = vld [vmem:[%s8] sm:$0x7]
        %v841 = vlaneseq
        %v842 = vshrl.u32 %v841, 7
        %v843 = vsub.s32 0, %v842
        %v844 = vrot.slane %v839, %v843
        %v845 = vlaneseq
        %v846 = vshrl.u32 %v845, 7
        %v847 = vsub.s32 1, %v846
        %v848 = vrot.slane %v839, %v847
        %v849 = vlaneseq
        %v850 = vshrl.u32 %v849, 7
        %v851 = vsub.s32 2, %v850
        %v852 = vrot.slane %v839, %v851
        %v888 = vunpack.c.l.b16 %v807
        %v889 = vunpack.c.h.b16 %v807
        %v890 = vunpack.c.l.b16 %v808
        %v891 = vunpack.c.l.b16 %v809
        %v892 = vunpack.c.h.b16 %v809
        %v893 = vunpack.c.l.b16 %v810
        %v894 = vunpack.c.l.b16 %v811
        %v895 = vunpack.c.h.b16 %v811
        %v896 = vunpack.c.l.b16 %v812
        %v897 = vunpack.c.l.b16 %v813
        %v898 = vunpack.c.h.b16 %v813
        %v899 = vunpack.c.l.b16 %v814
        %v900 = vunpack.c.l.b16 %v815
        %v901 = vunpack.c.h.b16 %v815
        %v902 = vunpack.c.l.b16 %v816
        %v903 = vunpack.c.l.b16 %v817
        %v904 = vunpack.c.h.b16 %v817
        %v905 = vunpack.c.l.b16 %v818
        %v906 = vunpack.c.l.b16 %v819
        %v907 = vunpack.c.h.b16 %v819
        %v908 = vunpack.c.l.b16 %v820
        %v909 = vunpack.c.l.b16 %v821
        %v910 = vunpack.c.h.b16 %v821
        %v911 = vunpack.c.l.b16 %v822
        %v912 = vunpack.c.l.b16 %v823
        %v913 = vunpack.c.h.b16 %v823
        %v914 = vunpack.c.l.b16 %v824
        %v915 = vunpack.c.l.b16 %v825
        %v916 = vunpack.c.h.b16 %v825
        %v917 = vunpack.c.l.b16 %v826
        %v918 = vunpack.c.l.b16 %v827
        %v919 = vunpack.c.h.b16 %v827
        %v920 = vunpack.c.l.b16 %v828
        %v921 = vunpack.c.l.b16 %v829
        %v922 = vunpack.c.h.b16 %v829
        %v923 = vunpack.c.l.b16 %v830
        %v924 = vunpack.c.l.b16 %v831
        %v925 = vunpack.c.h.b16 %v831
        %v926 = vunpack.c.l.b16 %v832
        %v927 = vunpack.c.l.b16 %v833
        %v928 = vunpack.c.h.b16 %v833
        %v929 = vunpack.c.l.b16 %v834
        %v930 = vunpack.c.l.b16 %v835
        %v931 = vunpack.c.h.b16 %v835
        %v932 = vunpack.c.l.b16 %v836
        %v933 = vunpack.c.l.b16 %v837
        %v934 = vunpack.c.h.b16 %v837
        %v935 = vunpack.c.l.b16 %v838
        %v936 = vpack.c.b16 %v891, %v888
        %v937 = vpack.c.b16 %v892, %v889
        %v938 = vpack.c.b16 %v893, %v890
        %v939 = vpack.c.b16 %v897, %v894
        %v940 = vpack.c.b16 %v898, %v895
        %v941 = vpack.c.b16 %v899, %v896
        %v942 = vpack.c.b16 %v903, %v900
        %v943 = vpack.c.b16 %v904, %v901
        %v944 = vpack.c.b16 %v905, %v902
        %v945 = vpack.c.b16 %v909, %v906
        %v946 = vpack.c.b16 %v910, %v907
        %v947 = vpack.c.b16 %v911, %v908
        %v948 = vpack.c.b16 %v915, %v912
        %v949 = vpack.c.b16 %v916, %v913
        %v950 = vpack.c.b16 %v917, %v914
        %v951 = vpack.c.b16 %v921, %v918
        %v952 = vpack.c.b16 %v922, %v919
        %v953 = vpack.c.b16 %v923, %v920
        %v954 = vpack.c.b16 %v927, %v924
        %v955 = vpack.c.b16 %v928, %v925
        %v956 = vpack.c.b16 %v929, %v926
        %v957 = vpack.c.b16 %v933, %v930
        %v958 = vpack.c.b16 %v934, %v931
        %v959 = vpack.c.b16 %v935, %v932
        %984 = vmatprep.subr.bf16.mxu0 %v937
        %985 = vmatpush1.bf16.msra.mxu0 %v936
        %986 = vmatprep.subr.bf16.mxu0 %v940
        %987 = vmatpush1.bf16.msra.mxu0 %v939
        %988 = vmatprep.subr.bf16.mxu0 %v943
        %989 = vmatpush1.bf16.msra.mxu0 %v942
        %990 = vmatprep.subr.bf16.mxu0 %v946
        %991 = vmatpush1.bf16.msra.mxu0 %v945
        %992 = vmatprep.subr.bf16.mxu0 %v949
        %993 = vmatpush1.bf16.msra.mxu0 %v948
        %994 = vmatprep.subr.bf16.mxu0 %v952
        %995 = vmatpush1.bf16.msra.mxu0 %v951
        %996 = vmatprep.subr.bf16.mxu0 %v955
        %997 = vmatpush1.bf16.msra.mxu0 %v954
        %998 = vmatprep.subr.bf16.mxu0 %v958
        %999 = vmatpush1.bf16.msra.mxu0 %v957
        %1000 = vmatprep.subr.bf16.mxu0 0
        %1001 = vmatpush1.bf16.msra.mxu0 0
        %1002 = vmatprep.subr.bf16.mxu0 0
        %1003 = vmatpush1.bf16.msra.mxu0 0
        %1004 = vmatprep.subr.bf16.mxu0 0
        %1005 = vmatpush1.bf16.msra.mxu0 0
        %1006 = vmatprep.subr.bf16.mxu0 0
        %1007 = vmatpush1.bf16.msra.mxu0 0
        %1008 = vmatprep.subr.bf16.mxu0 0
        %1009 = vmatpush1.bf16.msra.mxu0 0
        %1010 = vmatprep.subr.bf16.mxu0 0
        %1011 = vmatpush1.bf16.msra.mxu0 0
        %1012 = vmatprep.subr.bf16.mxu0 0
        %1013 = vmatpush1.bf16.msra.mxu0 0
        %1014 = vmatprep.subr.bf16.mxu0 0
        %1015 = vmatpush1.bf16.msra.mxu0 0
        %1016 = vmatprep.mubr.bf16.mxu0 0
        %1017 = vmatmul.mubr.bf16.gmra.mrb[0].mxu0 %v806
        %v1018 = vpop.f32.mrb[0].mxu0
        %v1019 = vadd.f32 %v844, %v1018
        %v1020 = vpop.f32.mrb[0].mxu0
        %v1021 = vadd.f32 %v848, %v1020
        %v1022 = vpop.f32.mrb[0].mxu0
        %v1023 = vadd.f32 %v844, %v1022
        %v1024 = vpop.f32.mrb[0].mxu0
        %v1025 = vadd.f32 %v848, %v1024
        %1026 = vdwg.mxu0
        %1027 = vmatprep.subr.bf16.mxu0 0
        %1028 = vmatpush1.bf16.msra.mxu0 %v938
        %1029 = vmatprep.subr.bf16.mxu0 0
        %1030 = vmatpush1.bf16.msra.mxu0 %v941
        %1031 = vmatprep.subr.bf16.mxu0 0
        %1032 = vmatpush1.bf16.msra.mxu0 %v944
        %1033 = vmatprep.subr.bf16.mxu0 0
        %1034 = vmatpush1.bf16.msra.mxu0 %v947
        %1035 = vmatprep.subr.bf16.mxu0 0
        %1036 = vmatpush1.bf16.msra.mxu0 %v950
        %1037 = vmatprep.subr.bf16.mxu0 0
        %1038 = vmatpush1.bf16.msra.mxu0 %v953
        %1039 = vmatprep.subr.bf16.mxu0 0
        %1040 = vmatpush1.bf16.msra.mxu0 %v956
        %1041 = vmatprep.subr.bf16.mxu0 0
        %1042 = vmatpush1.bf16.msra.mxu0 %v959
        %1043 = vmatprep.subr.bf16.mxu0 0
        %1044 = vmatpush1.bf16.msra.mxu0 0
        %1045 = vmatprep.subr.bf16.mxu0 0
        %1046 = vmatpush1.bf16.msra.mxu0 0
        %1047 = vmatprep.subr.bf16.mxu0 0
        %1048 = vmatpush1.bf16.msra.mxu0 0
        %1049 = vmatprep.subr.bf16.mxu0 0
        %1050 = vmatpush1.bf16.msra.mxu0 0
        %1051 = vmatprep.subr.bf16.mxu0 0
        %1052 = vmatpush1.bf16.msra.mxu0 0
        %1053 = vmatprep.subr.bf16.mxu0 0
        %1054 = vmatpush1.bf16.msra.mxu0 0
        %1055 = vmatprep.subr.bf16.mxu0 0
        %1056 = vmatpush1.bf16.msra.mxu0 0
        %1057 = vmatprep.subr.bf16.mxu0 0
        %1058 = vmatpush1.bf16.msra.mxu0 0
        %1059 = vmatprep.mubr.bf16.mxu0 0
        %1060 = vmatmul.mubr.bf16.gmra.mrb[0].mxu0 %v806
        %v1061 = vpop.f32.mrb[0].mxu0
        %v1062 = vadd.f32 %v852, %v1061
        %v1063 = vpop.f32.mrb[0].mxu0
        %v1064 = vpop.f32.mrb[0].mxu0
        %v1065 = vadd.f32 %v852, %v1064
        %v1066 = vpop.f32.mrb[0].mxu0
        %1067 = vdwg.mxu0
        %v1068 = vld [vmem:[#allocation7] sm:$0xf]
        %v1069 = vld [vmem:[#allocation7 + $0x4] sm:$0xf]
        %v1070 = vld [vmem:[#allocation7 + $0x8] sm:$0xf]
        %v1071 = vld [vmem:[#allocation7 + $0xc] sm:$0xf]
        %v1072 = vld [vmem:[#allocation7 + $0x10] sm:$0xf]
        %v1073 = vld [vmem:[#allocation7 + $0x14] sm:$0xf]
        %v1074 = vld [vmem:[#allocation7 + $0x18] sm:$0xf]
        %v1075 = vld [vmem:[#allocation7 + $0x1c] sm:$0xf]
        %v1076 = vld [vmem:[#allocation7 + $0x20] sm:$0xf]
        %v1077 = vld [vmem:[#allocation7 + $0x24] sm:$0xf]
        %v1078 = vld [vmem:[#allocation7 + $0x28] sm:$0xf]
        %v1079 = vld [vmem:[#allocation7 + $0x2c] sm:$0xf]
        %v1080 = vld [vmem:[#allocation7 + $0x30] sm:$0xf]
        %v1081 = vld [vmem:[#allocation7 + $0x34] sm:$0xf]
        %v1082 = vld [vmem:[#allocation7 + $0x38] sm:$0xf]
        %v1083 = vld [vmem:[#allocation7 + $0x3c] sm:$0xf]
        %v1084 = vmul.f32 %v1019, 0.125
        %v1085 = vmul.f32 %v1023, 0.125
        %v1086 = vmul.f32 %v1084, %v758
        %v1087 = vmul.f32 %v1085, %v759
        %1090 = vrot.lane.b32.xlu0 %v760, 32
        %v1091 = vpop.permute.xlu0 %1090
        %1092 = vrot.lane.b32.xlu0 %v761, 32
        %v1093 = vpop.permute.xlu0 %1092
        %v1096 = vmul.f32 %v1084, %v1091
        %v1097 = vmul.f32 %v1085, %v1093
        %1100 = vrot.lane.b32.xlu0 %v1096, 96
        %v1101 = vpop.permute.xlu0 %1100
        %1102 = vrot.lane.b32.xlu0 %v1097, 96
        %v1103 = vpop.permute.xlu0 %1102
        %v1106 = vsub.f32 %v1086, %v1101
        %v1107 = vsub.f32 %v1087, %v1103
        %v1108 = vpack.c.bf16 %v1107, %v1106
        %v1109 = vmul.f32 %v1084, %v760
        %v1110 = vmul.f32 %v1085, %v761
        %1113 = vrot.lane.b32.xlu0 %v758, 32
        %v1114 = vpop.permute.xlu0 %1113
        %1115 = vrot.lane.b32.xlu0 %v759, 32
        %v1116 = vpop.permute.xlu0 %1115
        %v1119 = vmul.f32 %v1084, %v1114
        %v1120 = vmul.f32 %v1085, %v1116
        %1123 = vrot.lane.b32.xlu0 %v1119, 96
        %v1124 = vpop.permute.xlu0 %1123
        %1125 = vrot.lane.b32.xlu0 %v1120, 96
        %v1126 = vpop.permute.xlu0 %1125
        %v1129 = vadd.f32 %v1109, %v1124
        %v1130 = vadd.f32 %v1110, %v1126
        %v1131 = vpack.c.bf16 %v1130, %v1129
        %v1132 = vmul.f32 %v1021, %v758
        %v1133 = vmul.f32 %v1025, %v759
        %v1134 = vmul.f32 %v1021, %v1091
        %v1135 = vmul.f32 %v1025, %v1093
        %1138 = vrot.lane.b32.xlu0 %v1134, 96
        %v1139 = vpop.permute.xlu0 %1138
        %1140 = vrot.lane.b32.xlu0 %v1135, 96
        %v1141 = vpop.permute.xlu0 %1140
        %v1144 = vsub.f32 %v1132, %v1139
        %v1145 = vsub.f32 %v1133, %v1141
        %v1146 = vpack.c.bf16 %v1145, %v1144
        %v1147 = vmul.f32 %v1021, %v760
        %v1148 = vmul.f32 %v1025, %v761
        %v1149 = vmul.f32 %v1021, %v1114
        %v1150 = vmul.f32 %v1025, %v1116
        %1153 = vrot.lane.b32.xlu0 %v1149, 96
        %v1154 = vpop.permute.xlu0 %1153
        %1155 = vrot.lane.b32.xlu0 %v1150, 96
        %v1156 = vpop.permute.xlu0 %1155
        %v1159 = vadd.f32 %v1147, %v1154
        %v1160 = vadd.f32 %v1148, %v1156
        %v1161 = vpack.c.bf16 %v1160, %v1159
        %vm1162 = vcmask 261120
        %v1164 = vsel %vm1162, %v1131, 0
        %v1167 = vsel %vm1162, %v1161, 0
        %1169 = vmatprep.subr.bf16.mxu0 0
        %1170 = vmatpush1.bf16.xpose.msra.mxu0 %v1167
        %1171 = vmatprep.subr.bf16.mxu0 0
        %1172 = vmatpush1.bf16.xpose.msra.mxu0 0
        %1173 = vmatprep.subr.bf16.mxu0 0
        %1174 = vmatpush1.bf16.xpose.msra.mxu0 0
        %1175 = vmatprep.subr.bf16.mxu0 0
        %1176 = vmatpush1.bf16.xpose.msra.mxu0 0
        %1177 = vmatprep.subr.bf16.mxu0 0
        %1178 = vmatpush1.bf16.xpose.msra.mxu0 0
        %1179 = vmatprep.subr.bf16.mxu0 0
        %1180 = vmatpush1.bf16.xpose.msra.mxu0 0
        %1181 = vmatprep.subr.bf16.mxu0 0
        %1182 = vmatpush1.bf16.xpose.msra.mxu0 0
        %1183 = vmatprep.subr.bf16.mxu0 0
        %1184 = vmatpush1.bf16.xpose.msra.mxu0 0
        %1185 = vmatprep.subr.bf16.mxu0 0
        %1186 = vmatpush1.bf16.xpose.msra.mxu0 0
        %1187 = vmatprep.subr.bf16.mxu0 0
        %1188 = vmatpush1.bf16.xpose.msra.mxu0 0
        %1189 = vmatprep.subr.bf16.mxu0 0
        %1190 = vmatpush1.bf16.xpose.msra.mxu0 0
        %1191 = vmatprep.subr.bf16.mxu0 0
        %1192 = vmatpush1.bf16.xpose.msra.mxu0 0
        %1193 = vmatprep.subr.bf16.mxu0 0
        %1194 = vmatpush1.bf16.xpose.msra.mxu0 0
        %1195 = vmatprep.subr.bf16.mxu0 0
        %1196 = vmatpush1.bf16.xpose.msra.mxu0 0
        %1197 = vmatprep.subr.bf16.mxu0 0
        %1198 = vmatpush1.bf16.xpose.msra.mxu0 0
        %1199 = vmatprep.subr.bf16.mxu0 0
        %1200 = vmatpush1.bf16.xpose.msra.mxu0 0
        %1201 = vmatprep.mubr.bf16.mxu0 0
        %1202 = vmatmul.mubr.bf16.gmra.mrb[0].mxu0 %v1164
        %v1203 = vpop.f32.mrb[0].mxu0
        %v1204 = vadd.f32 0.0, %v1203
        %v1205 = vpop.f32.mrb[0].mxu0
        %v1206 = vpop.f32.mrb[0].mxu0
        %v1207 = vadd.f32 0.0, %v1206
        %v1208 = vpop.f32.mrb[0].mxu0
        %1209 = vdwg.mxu0
        %v1211 = vsel %vm1162, %v1108, 0
        %v1214 = vsel %vm1162, %v1146, 0
        %1216 = vmatprep.subr.bf16.mxu0 0
        %1217 = vmatpush1.bf16.xpose.msra.mxu0 %v1214
        %1218 = vmatprep.subr.bf16.mxu0 0
        %1219 = vmatpush1.bf16.xpose.msra.mxu0 0
        %1220 = vmatprep.subr.bf16.mxu0 0
        %1221 = vmatpush1.bf16.xpose.msra.mxu0 0
        %1222 = vmatprep.subr.bf16.mxu0 0
        %1223 = vmatpush1.bf16.xpose.msra.mxu0 0
        %1224 = vmatprep.subr.bf16.mxu0 0
        %1225 = vmatpush1.bf16.xpose.msra.mxu0 0
        %1226 = vmatprep.subr.bf16.mxu0 0
        %1227 = vmatpush1.bf16.xpose.msra.mxu0 0
        %1228 = vmatprep.subr.bf16.mxu0 0
        %1229 = vmatpush1.bf16.xpose.msra.mxu0 0
        %1230 = vmatprep.subr.bf16.mxu0 0
        %1231 = vmatpush1.bf16.xpose.msra.mxu0 0
        %1232 = vmatprep.subr.bf16.mxu0 0
        %1233 = vmatpush1.bf16.xpose.msra.mxu0 0
        %1234 = vmatprep.subr.bf16.mxu0 0
        %1235 = vmatpush1.bf16.xpose.msra.mxu0 0
        %1236 = vmatprep.subr.bf16.mxu0 0
        %1237 = vmatpush1.bf16.xpose.msra.mxu0 0
        %1238 = vmatprep.subr.bf16.mxu0 0
        %1239 = vmatpush1.bf16.xpose.msra.mxu0 0
        %1240 = vmatprep.subr.bf16.mxu0 0
        %1241 = vmatpush1.bf16.xpose.msra.mxu0 0
        %1242 = vmatprep.subr.bf16.mxu0 0
        %1243 = vmatpush1.bf16.xpose.msra.mxu0 0
        %1244 = vmatprep.subr.bf16.mxu0 0
        %1245 = vmatpush1.bf16.xpose.msra.mxu0 0
        %1246 = vmatprep.subr.bf16.mxu0 0
        %1247 = vmatpush1.bf16.xpose.msra.mxu0 0
        %1248 = vmatprep.mubr.bf16.mxu0 0
        %1249 = vmatmul.mubr.bf16.gmra.mrb[0].mxu0 %v1211
        %v1250 = vpop.f32.mrb[0].mxu0
        %v1251 = vadd.f32 %v1204, %v1250
        %v1252 = vpop.f32.mrb[0].mxu0
        %v1253 = vpop.f32.mrb[0].mxu0
        %v1254 = vadd.f32 %v1207, %v1253
        %v1255 = vpop.f32.mrb[0].mxu0
        %1256 = vdwg.mxu0
        %vm1257 = vcmask 97280
        %v1258 = vsel %vm1257, %v1251, -inf
        %1259 = vmax.xlane.f32.xlu0 %v1258
        %v1260 = vpop.xlane.xlu0 %1259
        %vm1261 = vcmask 93184
        %v1262 = vsel %vm1261, %v1254, -inf
        %1263 = vmax.xlane.f32.xlu0 %v1262
        %v1264 = vpop.xlane.xlu0 %1263
        %v1265 = vsub.f32 %v1251, %v1260
        %v1266 = vsub.f32 %v1254, %v1264
        %v1267 = vmul.f32 %v1265, 1.442695
        %v1268 = vpow.pop %v1267
        %v1269 = vmul.f32 %v1266, 1.442695
        %v1270 = vpow.pop %v1269
        %v1271 = vsel %vm1257, %v1268, 0.0
        %1272 = vadd.xlane.f32.xlu0 %v1271
        %v1273 = vpop.xlane.xlu0 %1272
        %v1274 = vsel %vm1261, %v1270, 0.0
        %1275 = vadd.xlane.f32.xlu0 %v1274
        %v1276 = vpop.xlane.xlu0 %1275
        %v1277 = vrcp.pop %v1273
        %v1278 = vrcp.pop %v1276
        %v1279 = vmul.f32 %v1268, %v1277
        %v1280 = vmul.f32 %v1270, %v1278
        %v1281 = vpack.c.bf16 %v1280, %v1279
        %v1282 = vpack.c.bf16 %v1065, %v1062
        %v1284 = vsel %vm1257, %v1281, 0
        %vm1286 = vcmask 1045504
        %v1288 = vsel %vm1286, %v1282, 0
        %1290 = vmatprep.subr.bf16.mxu0 0
        %1291 = vmatpush1.bf16.msra.mxu0 %v1288
        %1292 = vmatprep.subr.bf16.mxu0 0
        %1293 = vmatpush1.bf16.msra.mxu0 0
        %1294 = vmatprep.subr.bf16.mxu0 0
        %1295 = vmatpush1.bf16.msra.mxu0 0
        %1296 = vmatprep.subr.bf16.mxu0 0
        %1297 = vmatpush1.bf16.msra.mxu0 0
        %1298 = vmatprep.subr.bf16.mxu0 0
        %1299 = vmatpush1.bf16.msra.mxu0 0
        %1300 = vmatprep.subr.bf16.mxu0 0
        %1301 = vmatpush1.bf16.msra.mxu0 0
        %1302 = vmatprep.subr.bf16.mxu0 0
        %1303 = vmatpush1.bf16.msra.mxu0 0
        %1304 = vmatprep.subr.bf16.mxu0 0
        %1305 = vmatpush1.bf16.msra.mxu0 0
        %1306 = vmatprep.subr.bf16.mxu0 0
        %1307 = vmatpush1.bf16.msra.mxu0 0
        %1308 = vmatprep.subr.bf16.mxu0 0
        %1309 = vmatpush1.bf16.msra.mxu0 0
        %1310 = vmatprep.subr.bf16.mxu0 0
        %1311 = vmatpush1.bf16.msra.mxu0 0
        %1312 = vmatprep.subr.bf16.mxu0 0
        %1313 = vmatpush1.bf16.msra.mxu0 0
        %1314 = vmatprep.subr.bf16.mxu0 0
        %1315 = vmatpush1.bf16.msra.mxu0 0
        %1316 = vmatprep.subr.bf16.mxu0 0
        %1317 = vmatpush1.bf16.msra.mxu0 0
        %1318 = vmatprep.subr.bf16.mxu0 0
        %1319 = vmatpush1.bf16.msra.mxu0 0
        %1320 = vmatprep.subr.bf16.mxu0 0
        %1321 = vmatpush1.bf16.msra.mxu0 0
        %1322 = vmatprep.mubr.bf16.mxu0 0
        %1323 = vmatmul.mubr.bf16.gmra.mrb[0].mxu0 %v1284
        %v1324 = vpop.f32.mrb[0].mxu0
        %v1325 = vadd.f32 0.0, %v1324
        %v1326 = vpop.f32.mrb[0].mxu0
        %v1327 = vpop.f32.mrb[0].mxu0
        %v1328 = vadd.f32 0.0, %v1327
        %v1329 = vpop.f32.mrb[0].mxu0
        %1330 = vdwg.mxu0
        %v1331 = vpack.c.bf16 %v1328, %v1325
        %1332 = vrot.lane.b32.xlu0 %v758, 64
        %v1333 = vpop.permute.xlu0 %1332
        %1334 = vrot.lane.b32.xlu0 %v759, 64
        %v1335 = vpop.permute.xlu0 %1334
        %v1338 = vmul.f32 %v1084, %v1333
        %v1339 = vmul.f32 %v1085, %v1335
        %1340 = vrot.lane.b32.xlu0 %v760, 96
        %v1341 = vpop.permute.xlu0 %1340
        %1342 = vrot.lane.b32.xlu0 %v761, 96
        %v1343 = vpop.permute.xlu0 %1342
        %v1346 = vmul.f32 %v1084, %v1341
        %v1347 = vmul.f32 %v1085, %v1343
        %1350 = vrot.lane.b32.xlu0 %v1346, 96
        %v1351 = vpop.permute.xlu0 %1350
        %1352 = vrot.lane.b32.xlu0 %v1347, 96
        %v1353 = vpop.permute.xlu0 %1352
        %v1356 = vsub.f32 %v1338, %v1351
        %v1357 = vsub.f32 %v1339, %v1353
        %v1358 = vpack.c.bf16 %v1357, %v1356
        %1359 = vrot.lane.b32.xlu0 %v760, 64
        %v1360 = vpop.permute.xlu0 %1359
        %1361 = vrot.lane.b32.xlu0 %v761, 64
        %v1362 = vpop.permute.xlu0 %1361
        %v1365 = vmul.f32 %v1084, %v1360
        %v1366 = vmul.f32 %v1085, %v1362
        %1367 = vrot.lane.b32.xlu0 %v758, 96
        %v1368 = vpop.permute.xlu0 %1367
        %1369 = vrot.lane.b32.xlu0 %v759, 96
        %v1370 = vpop.permute.xlu0 %1369
        %v1373 = vmul.f32 %v1084, %v1368
        %v1374 = vmul.f32 %v1085, %v1370
        %1377 = vrot.lane.b32.xlu0 %v1373, 96
        %v1378 = vpop.permute.xlu0 %1377
        %1379 = vrot.lane.b32.xlu0 %v1374, 96
        %v1380 = vpop.permute.xlu0 %1379
        %v1383 = vadd.f32 %v1365, %v1378
        %v1384 = vadd.f32 %v1366, %v1380
        %v1385 = vpack.c.bf16 %v1384, %v1383
        %v1386 = vmul.f32 %v1021, %v1333
        %v1387 = vmul.f32 %v1025, %v1335
        %v1388 = vmul.f32 %v1021, %v1341
        %v1389 = vmul.f32 %v1025, %v1343
        %1392 = vrot.lane.b32.xlu0 %v1388, 96
        %v1393 = vpop.permute.xlu0 %1392
        %1394 = vrot.lane.b32.xlu0 %v1389, 96
        %v1395 = vpop.permute.xlu0 %1394
        %v1398 = vsub.f32 %v1386, %v1393
        %v1399 = vsub.f32 %v1387, %v1395
        %v1400 = vpack.c.bf16 %v1399, %v1398
        %v1401 = vmul.f32 %v1021, %v1360
        %v1402 = vmul.f32 %v1025, %v1362
        %v1403 = vmul.f32 %v1021, %v1368
        %v1404 = vmul.f32 %v1025, %v1370
        %1407 = vrot.lane.b32.xlu0 %v1403, 96
        %v1408 = vpop.permute.xlu0 %1407
        %1409 = vrot.lane.b32.xlu0 %v1404, 96
        %v1410 = vpop.permute.xlu0 %1409
        %v1413 = vadd.f32 %v1401, %v1408
        %v1414 = vadd.f32 %v1402, %v1410
        %v1415 = vpack.c.bf16 %v1414, %v1413
        %1417 = vrot.lane.b32.xlu0 %v1385, 64
        %v1418 = vpop.permute.xlu0 %1417
        %1420 = vrot.lane.b32.xlu0 %v1415, 64
        %v1421 = vpop.permute.xlu0 %1420
        %v1423 = vsel %vm1162, %v1418, 0
        %v1426 = vsel %vm1162, %v1421, 0
        %1428 = vmatprep.subr.bf16.mxu0 0
        %1429 = vmatpush1.bf16.xpose.msra.mxu0 %v1426
        %1430 = vmatprep.subr.bf16.mxu0 0
        %1431 = vmatpush1.bf16.xpose.msra.mxu0 0
        %1432 = vmatprep.subr.bf16.mxu0 0
        %1433 = vmatpush1.bf16.xpose.msra.mxu0 0
        %1434 = vmatprep.subr.bf16.mxu0 0
        %1435 = vmatpush1.bf16.xpose.msra.mxu0 0
        %1436 = vmatprep.subr.bf16.mxu0 0
        %1437 = vmatpush1.bf16.xpose.msra.mxu0 0
        %1438 = vmatprep.subr.bf16.mxu0 0
        %1439 = vmatpush1.bf16.xpose.msra.mxu0 0
        %1440 = vmatprep.subr.bf16.mxu0 0
        %1441 = vmatpush1.bf16.xpose.msra.mxu0 0
        %1442 = vmatprep.subr.bf16.mxu0 0
        %1443 = vmatpush1.bf16.xpose.msra.mxu0 0
        %1444 = vmatprep.subr.bf16.mxu0 0
        %1445 = vmatpush1.bf16.xpose.msra.mxu0 0
        %1446 = vmatprep.subr.bf16.mxu0 0
        %1447 = vmatpush1.bf16.xpose.msra.mxu0 0
        %1448 = vmatprep.subr.bf16.mxu0 0
        %1449 = vmatpush1.bf16.xpose.msra.mxu0 0
        %1450 = vmatprep.subr.bf16.mxu0 0
        %1451 = vmatpush1.bf16.xpose.msra.mxu0 0
        %1452 = vmatprep.subr.bf16.mxu0 0
        %1453 = vmatpush1.bf16.xpose.msra.mxu0 0
        %1454 = vmatprep.subr.bf16.mxu0 0
        %1455 = vmatpush1.bf16.xpose.msra.mxu0 0
        %1456 = vmatprep.subr.bf16.mxu0 0
        %1457 = vmatpush1.bf16.xpose.msra.mxu0 0
        %1458 = vmatprep.subr.bf16.mxu0 0
        %1459 = vmatpush1.bf16.xpose.msra.mxu0 0
        %1460 = vmatprep.mubr.bf16.mxu0 0
        %1461 = vmatmul.mubr.bf16.gmra.mrb[0].mxu0 %v1423
        %v1462 = vpop.f32.mrb[0].mxu0
        %v1463 = vadd.f32 0.0, %v1462
        %v1464 = vpop.f32.mrb[0].mxu0
        %v1465 = vpop.f32.mrb[0].mxu0
        %v1466 = vadd.f32 0.0, %v1465
        %v1467 = vpop.f32.mrb[0].mxu0
        %1468 = vdwg.mxu0
        %1470 = vrot.lane.b32.xlu0 %v1358, 64
        %v1471 = vpop.permute.xlu0 %1470
        %1473 = vrot.lane.b32.xlu0 %v1400, 64
        %v1474 = vpop.permute.xlu0 %1473
        %v1476 = vsel %vm1162, %v1471, 0
        %v1479 = vsel %vm1162, %v1474, 0
        %1481 = vmatprep.subr.bf16.mxu0 0
        %1482 = vmatpush1.bf16.xpose.msra.mxu0 %v1479
        %1483 = vmatprep.subr.bf16.mxu0 0
        %1484 = vmatpush1.bf16.xpose.msra.mxu0 0
        %1485 = vmatprep.subr.bf16.mxu0 0
        %1486 = vmatpush1.bf16.xpose.msra.mxu0 0
        %1487 = vmatprep.subr.bf16.mxu0 0
        %1488 = vmatpush1.bf16.xpose.msra.mxu0 0
        %1489 = vmatprep.subr.bf16.mxu0 0
        %1490 = vmatpush1.bf16.xpose.msra.mxu0 0
        %1491 = vmatprep.subr.bf16.mxu0 0
        %1492 = vmatpush1.bf16.xpose.msra.mxu0 0
        %1493 = vmatprep.subr.bf16.mxu0 0
        %1494 = vmatpush1.bf16.xpose.msra.mxu0 0
        %1495 = vmatprep.subr.bf16.mxu0 0
        %1496 = vmatpush1.bf16.xpose.msra.mxu0 0
        %1497 = vmatprep.subr.bf16.mxu0 0
        %1498 = vmatpush1.bf16.xpose.msra.mxu0 0
        %1499 = vmatprep.subr.bf16.mxu0 0
        %1500 = vmatpush1.bf16.xpose.msra.mxu0 0
        %1501 = vmatprep.subr.bf16.mxu0 0
        %1502 = vmatpush1.bf16.xpose.msra.mxu0 0
        %1503 = vmatprep.subr.bf16.mxu0 0
        %1504 = vmatpush1.bf16.xpose.msra.mxu0 0
        %1505 = vmatprep.subr.bf16.mxu0 0
        %1506 = vmatpush1.bf16.xpose.msra.mxu0 0
        %1507 = vmatprep.subr.bf16.mxu0 0
        %1508 = vmatpush1.bf16.xpose.msra.mxu0 0
        %1509 = vmatprep.subr.bf16.mxu0 0
        %1510 = vmatpush1.bf16.xpose.msra.mxu0 0
        %1511 = vmatprep.subr.bf16.mxu0 0
        %1512 = vmatpush1.bf16.xpose.msra.mxu0 0
        %1513 = vmatprep.mubr.bf16.mxu0 0
        %1514 = vmatmul.mubr.bf16.gmra.mrb[0].mxu0 %v1476
        %v1515 = vpop.f32.mrb[0].mxu0
        %v1516 = vadd.f32 %v1463, %v1515
        %v1517 = vpop.f32.mrb[0].mxu0
        %v1518 = vpop.f32.mrb[0].mxu0
        %v1519 = vadd.f32 %v1466, %v1518
        %v1520 = vpop.f32.mrb[0].mxu0
        %1521 = vdwg.mxu0
        %v1522 = vsel %vm1257, %v1516, -inf
        %1523 = vmax.xlane.f32.xlu0 %v1522
        %v1524 = vpop.xlane.xlu0 %1523
        %v1525 = vsel %vm1261, %v1519, -inf
        %1526 = vmax.xlane.f32.xlu0 %v1525
        %v1527 = vpop.xlane.xlu0 %1526
        %v1528 = vsub.f32 %v1516, %v1524
        %v1529 = vsub.f32 %v1519, %v1527
        %v1530 = vmul.f32 %v1528, 1.442695
        %v1531 = vpow.pop %v1530
        %v1532 = vmul.f32 %v1529, 1.442695
        %v1533 = vpow.pop %v1532
        %v1534 = vsel %vm1257, %v1531, 0.0
        %1535 = vadd.xlane.f32.xlu0 %v1534
        %v1536 = vpop.xlane.xlu0 %1535
        %v1537 = vsel %vm1261, %v1533, 0.0
        %1538 = vadd.xlane.f32.xlu0 %v1537
        %v1539 = vpop.xlane.xlu0 %1538
        %v1540 = vrcp.pop %v1536
        %v1541 = vrcp.pop %v1539
        %v1542 = vmul.f32 %v1531, %v1540
        %v1543 = vmul.f32 %v1533, %v1541
        %v1544 = vpack.c.bf16 %v1543, %v1542
        %1546 = vrot.lane.b32.xlu0 %v1282, 64
        %v1547 = vpop.permute.xlu0 %1546
        %v1549 = vsel %vm1257, %v1544, 0
        %v1552 = vsel %vm1286, %v1547, 0
        %1554 = vmatprep.subr.bf16.mxu0 0
        %1555 = vmatpush1.bf16.msra.mxu0 %v1552
        %1556 = vmatprep.subr.bf16.mxu0 0
        %1557 = vmatpush1.bf16.msra.mxu0 0
        %1558 = vmatprep.subr.bf16.mxu0 0
        %1559 = vmatpush1.bf16.msra.mxu0 0
        %1560 = vmatprep.subr.bf16.mxu0 0
        %1561 = vmatpush1.bf16.msra.mxu0 0
        %1562 = vmatprep.subr.bf16.mxu0 0
        %1563 = vmatpush1.bf16.msra.mxu0 0
        %1564 = vmatprep.subr.bf16.mxu0 0
        %1565 = vmatpush1.bf16.msra.mxu0 0
        %1566 = vmatprep.subr.bf16.mxu0 0
        %1567 = vmatpush1.bf16.msra.mxu0 0
        %1568 = vmatprep.subr.bf16.mxu0 0
        %1569 = vmatpush1.bf16.msra.mxu0 0
        %1570 = vmatprep.subr.bf16.mxu0 0
        %1571 = vmatpush1.bf16.msra.mxu0 0
        %1572 = vmatprep.subr.bf16.mxu0 0
        %1573 = vmatpush1.bf16.msra.mxu0 0
        %1574 = vmatprep.subr.bf16.mxu0 0
        %1575 = vmatpush1.bf16.msra.mxu0 0
        %1576 = vmatprep.subr.bf16.mxu0 0
        %1577 = vmatpush1.bf16.msra.mxu0 0
        %1578 = vmatprep.subr.bf16.mxu0 0
        %1579 = vmatpush1.bf16.msra.mxu0 0
        %1580 = vmatprep.subr.bf16.mxu0 0
        %1581 = vmatpush1.bf16.msra.mxu0 0
        %1582 = vmatprep.subr.bf16.mxu0 0
        %1583 = vmatpush1.bf16.msra.mxu0 0
        %1584 = vmatprep.subr.bf16.mxu0 0
        %1585 = vmatpush1.bf16.msra.mxu0 0
        %1586 = vmatprep.mubr.bf16.mxu0 0
        %1587 = vmatmul.mubr.bf16.gmra.mrb[0].mxu0 %v1549
        %v1588 = vpop.f32.mrb[0].mxu0
        %v1589 = vadd.f32 0.0, %v1588
        %v1590 = vpop.f32.mrb[0].mxu0
        %v1591 = vpop.f32.mrb[0].mxu0
        %v1592 = vadd.f32 0.0, %v1591
        %v1593 = vpop.f32.mrb[0].mxu0
        %1594 = vdwg.mxu0
        %v1595 = vpack.c.bf16 %v1592, %v1589
        %v1604 = vunpack.c.l.b16 %v1076
        %v1605 = vunpack.c.l.b16 %v1077
        %v1606 = vunpack.c.l.b16 %v1078
        %v1607 = vunpack.c.l.b16 %v1079
        %v1608 = vunpack.c.l.b16 %v1080
        %v1609 = vunpack.c.l.b16 %v1081
        %v1610 = vunpack.c.l.b16 %v1082
        %v1611 = vunpack.c.l.b16 %v1083
        %v1612 = vpack.c.b16 %v1605, %v1604
        %v1613 = vpack.c.b16 %v1607, %v1606
        %v1614 = vpack.c.b16 %v1609, %v1608
        %v1615 = vpack.c.b16 %v1611, %v1610
        %vm1620 = vcmask 523264
        %v1622 = vsel %vm1620, %v1595, 0
        %1624 = vmatprep.subr.bf16.mxu0 0
        %1625 = vmatpush1.bf16.msra.mxu0 %v1612
        %1626 = vmatprep.subr.bf16.mxu0 0
        %1627 = vmatpush1.bf16.msra.mxu0 %v1613
        %1628 = vmatprep.subr.bf16.mxu0 0
        %1629 = vmatpush1.bf16.msra.mxu0 %v1614
        %1630 = vmatprep.subr.bf16.mxu0 0
        %1631 = vmatpush1.bf16.msra.mxu0 %v1615
        %1632 = vmatprep.subr.bf16.mxu0 0
        %1633 = vmatpush1.bf16.msra.mxu0 0
        %1634 = vmatprep.subr.bf16.mxu0 0
        %1635 = vmatpush1.bf16.msra.mxu0 0
        %1636 = vmatprep.subr.bf16.mxu0 0
        %1637 = vmatpush1.bf16.msra.mxu0 0
        %1638 = vmatprep.subr.bf16.mxu0 0
        %1639 = vmatpush1.bf16.msra.mxu0 0
        %1640 = vmatprep.subr.bf16.mxu0 0
        %1641 = vmatpush1.bf16.msra.mxu0 0
        %1642 = vmatprep.subr.bf16.mxu0 0
        %1643 = vmatpush1.bf16.msra.mxu0 0
        %1644 = vmatprep.subr.bf16.mxu0 0
        %1645 = vmatpush1.bf16.msra.mxu0 0
        %1646 = vmatprep.subr.bf16.mxu0 0
        %1647 = vmatpush1.bf16.msra.mxu0 0
        %1648 = vmatprep.subr.bf16.mxu0 0
        %1649 = vmatpush1.bf16.msra.mxu0 0
        %1650 = vmatprep.subr.bf16.mxu0 0
        %1651 = vmatpush1.bf16.msra.mxu0 0
        %1652 = vmatprep.subr.bf16.mxu0 0
        %1653 = vmatpush1.bf16.msra.mxu0 0
        %1654 = vmatprep.subr.bf16.mxu0 0
        %1655 = vmatpush1.bf16.msra.mxu0 0
        %1656 = vmatprep.mubr.bf16.mxu0 0
        %1657 = vmatmul.mubr.bf16.gmra.mrb[0].mxu0 %v1622
        %v1658 = vpop.f32.mrb[0].mxu0
        %v1659 = vadd.f32 0.0, %v1658
        %v1660 = vpop.f32.mrb[0].mxu0
        %v1661 = vpop.f32.mrb[0].mxu0
        %v1662 = vadd.f32 0.0, %v1661
        %v1663 = vpop.f32.mrb[0].mxu0
        %1664 = vdwg.mxu0
        %v1673 = vunpack.c.l.b16 %v1068
        %v1674 = vunpack.c.l.b16 %v1069
        %v1675 = vunpack.c.l.b16 %v1070
        %v1676 = vunpack.c.l.b16 %v1071
        %v1677 = vunpack.c.l.b16 %v1072
        %v1678 = vunpack.c.l.b16 %v1073
        %v1679 = vunpack.c.l.b16 %v1074
        %v1680 = vunpack.c.l.b16 %v1075
        %v1681 = vpack.c.b16 %v1674, %v1673
        %v1682 = vpack.c.b16 %v1676, %v1675
        %v1683 = vpack.c.b16 %v1678, %v1677
        %v1684 = vpack.c.b16 %v1680, %v1679
        %v1690 = vsel %vm1620, %v1331, 0
        %1692 = vmatprep.subr.bf16.mxu0 0
        %1693 = vmatpush1.bf16.msra.mxu0 %v1681
        %1694 = vmatprep.subr.bf16.mxu0 0
        %1695 = vmatpush1.bf16.msra.mxu0 %v1682
        %1696 = vmatprep.subr.bf16.mxu0 0
        %1697 = vmatpush1.bf16.msra.mxu0 %v1683
        %1698 = vmatprep.subr.bf16.mxu0 0
        %1699 = vmatpush1.bf16.msra.mxu0 %v1684
        %1700 = vmatprep.subr.bf16.mxu0 0
        %1701 = vmatpush1.bf16.msra.mxu0 0
        %1702 = vmatprep.subr.bf16.mxu0 0
        %1703 = vmatpush1.bf16.msra.mxu0 0
        %1704 = vmatprep.subr.bf16.mxu0 0
        %1705 = vmatpush1.bf16.msra.mxu0 0
        %1706 = vmatprep.subr.bf16.mxu0 0
        %1707 = vmatpush1.bf16.msra.mxu0 0
        %1708 = vmatprep.subr.bf16.mxu0 0
        %1709 = vmatpush1.bf16.msra.mxu0 0
        %1710 = vmatprep.subr.bf16.mxu0 0
        %1711 = vmatpush1.bf16.msra.mxu0 0
        %1712 = vmatprep.subr.bf16.mxu0 0
        %1713 = vmatpush1.bf16.msra.mxu0 0
        %1714 = vmatprep.subr.bf16.mxu0 0
        %1715 = vmatpush1.bf16.msra.mxu0 0
        %1716 = vmatprep.subr.bf16.mxu0 0
        %1717 = vmatpush1.bf16.msra.mxu0 0
        %1718 = vmatprep.subr.bf16.mxu0 0
        %1719 = vmatpush1.bf16.msra.mxu0 0
        %1720 = vmatprep.subr.bf16.mxu0 0
        %1721 = vmatpush1.bf16.msra.mxu0 0
        %1722 = vmatprep.subr.bf16.mxu0 0
        %1723 = vmatpush1.bf16.msra.mxu0 0
        %1724 = vmatprep.mubr.bf16.mxu0 0
        %1725 = vmatmul.mubr.bf16.gmra.mrb[0].mxu0 %v1690
        %v1726 = vpop.f32.mrb[0].mxu0
        %v1727 = vadd.f32 %v1659, %v1726
        %v1728 = vpop.f32.mrb[0].mxu0
        %v1729 = vpop.f32.mrb[0].mxu0
        %v1730 = vadd.f32 %v1662, %v1729
        %v1731 = vpop.f32.mrb[0].mxu0
        %1732 = vdwg.mxu0
        %v1733 = vadd.f32 %v752, %v1727
        %v1734 = vadd.f32 %v755, %v1730
        %v1735 = vld [vmem:[%s10] sm:$0x1]
        %v1737 = vlaneseq
        %v1738 = vshrl.u32 %v1737, 7
        %v1739 = vsub.s32 0, %v1738
        %v1740 = vrot.slane %v1735, %v1739
        %v1742 = vadd.f32 %v1733, %v1740
        %v1743 = vadd.f32 %v1734, %v1740
        %v1744 = vld [vmem:[%s11] sm:$0x1]
        %v1745 = vld [vmem:[%s12] sm:$0x1]
        %1746 = vadd.xlane.f32.xlu0 %v1742
        %v1747 = vpop.xlane.xlu0 %1746
        %v1748 = vsel %vm766, %v1743, 0.0
        %1749 = vadd.xlane.f32.xlu0 %v1748
        %v1750 = vpop.xlane.xlu0 %1749
        %v1751 = vmul.f32 %v1747, %v770
        %v1752 = vmul.f32 %v1750, %v770
        %v1753 = vsub.f32 %v1742, %v1751
        %v1754 = vsub.f32 %v1743, %v1752
        %v1755 = vmul.f32 %v1753, %v1753
        %v1756 = vmul.f32 %v1754, %v1754
        %1757 = vadd.xlane.f32.xlu0 %v1755
        %v1758 = vpop.xlane.xlu0 %1757
        %v1759 = vsel %vm766, %v1756, 0.0
        %1760 = vadd.xlane.f32.xlu0 %v1759
        %v1761 = vpop.xlane.xlu0 %1760
        %v1762 = vmul.f32 %v1758, %v770
        %v1763 = vmul.f32 %v1761, %v770
        %v1764 = vadd.f32 %v1762, 1e-05
        %v1765 = vadd.f32 %v1763, 1e-05
        %v1766 = vrsqrt.pop %v1764
        %v1767 = vrsqrt.pop %v1765
        %v1768 = vmul.f32 %v1753, %v1766
        %v1769 = vmul.f32 %v1754, %v1767
        %v1771 = vlaneseq
        %v1772 = vshrl.u32 %v1771, 7
        %v1773 = vsub.s32 0, %v1772
        %v1774 = vrot.slane %v1744, %v1773
        %v1776 = vmul.f32 %v1768, %v1774
        %v1777 = vmul.f32 %v1769, %v1774
        %v1779 = vlaneseq
        %v1780 = vshrl.u32 %v1779, 7
        %v1781 = vsub.s32 0, %v1780
        %v1782 = vrot.slane %v1745, %v1781
        %v1784 = vadd.f32 %v1776, %v1782
        %v1785 = vadd.f32 %v1777, %v1782
        %v1786 = vpack.c.bf16 %v1785, %v1784
        %v1787 = vld [vmem:[#allocation9] sm:$0xff]
        %v1788 = vld [vmem:[#allocation9 + $0x8] sm:$0xff]
        %v1789 = vld [vmem:[#allocation9 + $0x10] sm:$0xff]
        %v1790 = vld [vmem:[#allocation9 + $0x18] sm:$0xff]
        %v1791 = vld [vmem:[#allocation9 + $0x20] sm:$0xff]
        %v1792 = vld [vmem:[#allocation9 + $0x28] sm:$0xff]
        %v1793 = vld [vmem:[#allocation9 + $0x30] sm:$0xff]
        %v1794 = vld [vmem:[#allocation9 + $0x38] sm:$0xff]
        %v1795 = vld [vmem:[#allocation9 + $0x40] sm:$0xff]
        %v1796 = vld [vmem:[#allocation9 + $0x48] sm:$0xff]
        %v1797 = vld [vmem:[#allocation9 + $0x50] sm:$0xff]
        %v1798 = vld [vmem:[#allocation9 + $0x58] sm:$0xff]
        %v1799 = vld [vmem:[#allocation9 + $0x60] sm:$0xff]
        %v1800 = vld [vmem:[#allocation9 + $0x68] sm:$0xff]
        %v1801 = vld [vmem:[#allocation9 + $0x70] sm:$0xff]
        %v1802 = vld [vmem:[#allocation9 + $0x78] sm:$0xff]
        %v1803 = vld [vmem:[#allocation9 + $0x80] sm:$0xff]
        %v1804 = vld [vmem:[#allocation9 + $0x88] sm:$0xff]
        %v1805 = vld [vmem:[#allocation9 + $0x90] sm:$0xff]
        %v1806 = vld [vmem:[#allocation9 + $0x98] sm:$0xff]
        %v1807 = vld [vmem:[#allocation9 + $0xa0] sm:$0xff]
        %v1808 = vld [vmem:[#allocation9 + $0xa8] sm:$0xff]
        %v1809 = vld [vmem:[#allocation9 + $0xb0] sm:$0xff]
        %v1810 = vld [vmem:[#allocation9 + $0xb8] sm:$0xff]
        %v1811 = vld [vmem:[#allocation9 + $0xc0] sm:$0xff]
        %v1812 = vld [vmem:[#allocation9 + $0xc8] sm:$0xff]
        %v1813 = vld [vmem:[#allocation9 + $0xd0] sm:$0xff]
        %v1814 = vld [vmem:[#allocation9 + $0xd8] sm:$0xff]
        %v1815 = vld [vmem:[#allocation9 + $0xe0] sm:$0xff]
        %v1816 = vld [vmem:[#allocation9 + $0xe8] sm:$0xff]
        %v1817 = vld [vmem:[#allocation9 + $0xf0] sm:$0xff]
        %v1818 = vld [vmem:[#allocation9 + $0xf8] sm:$0xff]
        %v1819 = vld [vmem:[#allocation9 + $0x100] sm:$0xff]
        %v1820 = vld [vmem:[#allocation9 + $0x108] sm:$0xff]
        %v1821 = vld [vmem:[#allocation9 + $0x110] sm:$0xff]
        %v1822 = vld [vmem:[#allocation9 + $0x118] sm:$0xff]
        %v1823 = vld [vmem:[#allocation9 + $0x120] sm:$0xff]
        %v1824 = vld [vmem:[#allocation9 + $0x128] sm:$0xff]
        %v1825 = vld [vmem:[#allocation9 + $0x130] sm:$0xff]
        %v1826 = vld [vmem:[#allocation9 + $0x138] sm:$0xff]
        %v1827 = vld [vmem:[#allocation9 + $0x140] sm:$0xff]
        %v1828 = vld [vmem:[#allocation9 + $0x148] sm:$0xff]
        %v1829 = vld [vmem:[#allocation9 + $0x150] sm:$0xff]
        %v1830 = vld [vmem:[#allocation9 + $0x158] sm:$0xff]
        %v1831 = vld [vmem:[#allocation9 + $0x160] sm:$0xff]
        %v1832 = vld [vmem:[#allocation9 + $0x168] sm:$0xff]
        %v1833 = vld [vmem:[#allocation9 + $0x170] sm:$0xff]
        %v1834 = vld [vmem:[#allocation9 + $0x178] sm:$0xff]
        %v1835 = vld [vmem:[#allocation9 + $0x180] sm:$0xff]
        %v1836 = vld [vmem:[#allocation9 + $0x188] sm:$0xff]
        %v1837 = vld [vmem:[#allocation9 + $0x190] sm:$0xff]
        %v1838 = vld [vmem:[#allocation9 + $0x198] sm:$0xff]
        %v1839 = vld [vmem:[#allocation9 + $0x1a0] sm:$0xff]
        %v1840 = vld [vmem:[#allocation9 + $0x1a8] sm:$0xff]
        %v1841 = vld [vmem:[#allocation9 + $0x1b0] sm:$0xff]
        %v1842 = vld [vmem:[#allocation9 + $0x1b8] sm:$0xff]
        %v1843 = vld [vmem:[#allocation9 + $0x1c0] sm:$0xff]
        %v1844 = vld [vmem:[#allocation9 + $0x1c8] sm:$0xff]
        %v1845 = vld [vmem:[#allocation9 + $0x1d0] sm:$0xff]
        %v1846 = vld [vmem:[#allocation9 + $0x1d8] sm:$0xff]
        %v1847 = vld [vmem:[#allocation9 + $0x1e0] sm:$0xff]
        %v1848 = vld [vmem:[#allocation9 + $0x1e8] sm:$0xff]
        %v1849 = vld [vmem:[#allocation9 + $0x1f0] sm:$0xff]
        %v1850 = vld [vmem:[#allocation9 + $0x1f8] sm:$0xff]
        %v1851 = vld [vmem:[%s14] sm:$0xff]
        %v1853 = vlaneseq
        %v1854 = vshrl.u32 %v1853, 7
        %v1855 = vsub.s32 0, %v1854
        %v1856 = vrot.slane %v1851, %v1855
        %v1857 = vlaneseq
        %v1858 = vshrl.u32 %v1857, 7
        %v1859 = vsub.s32 1, %v1858
        %v1860 = vrot.slane %v1851, %v1859
        %v1861 = vlaneseq
        %v1862 = vshrl.u32 %v1861, 7
        %v1863 = vsub.s32 2, %v1862
        %v1864 = vrot.slane %v1851, %v1863
        %v1865 = vlaneseq
        %v1866 = vshrl.u32 %v1865, 7
        %v1867 = vsub.s32 3, %v1866
        %v1868 = vrot.slane %v1851, %v1867
        %v1869 = vlaneseq
        %v1870 = vshrl.u32 %v1869, 7
        %v1871 = vsub.s32 4, %v1870
        %v1872 = vrot.slane %v1851, %v1871
        %v1873 = vlaneseq
        %v1874 = vshrl.u32 %v1873, 7
        %v1875 = vsub.s32 5, %v1874
        %v1876 = vrot.slane %v1851, %v1875
        %v1877 = vlaneseq
        %v1878 = vshrl.u32 %v1877, 7
        %v1879 = vsub.s32 6, %v1878
        %v1880 = vrot.slane %v1851, %v1879
        %v1881 = vlaneseq
        %v1882 = vshrl.u32 %v1881, 7
        %v1883 = vsub.s32 7, %v1882
        %v1884 = vrot.slane %v1851, %v1883
        %v1957 = vunpack.c.l.b16 %v1787
        %v1958 = vunpack.c.h.b16 %v1787
        %v1959 = vunpack.c.l.b16 %v1788
        %v1960 = vunpack.c.h.b16 %v1788
        %v1961 = vunpack.c.l.b16 %v1789
        %v1962 = vunpack.c.h.b16 %v1789
        %v1963 = vunpack.c.l.b16 %v1790
        %v1964 = vunpack.c.h.b16 %v1790
        %v1965 = vunpack.c.l.b16 %v1791
        %v1966 = vunpack.c.h.b16 %v1791
        %v1967 = vunpack.c.l.b16 %v1792
        %v1968 = vunpack.c.h.b16 %v1792
        %v1969 = vunpack.c.l.b16 %v1793
        %v1970 = vunpack.c.h.b16 %v1793
        %v1971 = vunpack.c.l.b16 %v1794
        %v1972 = vunpack.c.h.b16 %v1794
        %v1973 = vunpack.c.l.b16 %v1795
        %v1974 = vunpack.c.h.b16 %v1795
        %v1975 = vunpack.c.l.b16 %v1796
        %v1976 = vunpack.c.h.b16 %v1796
        %v1977 = vunpack.c.l.b16 %v1797
        %v1978 = vunpack.c.h.b16 %v1797
        %v1979 = vunpack.c.l.b16 %v1798
        %v1980 = vunpack.c.h.b16 %v1798
        %v1981 = vunpack.c.l.b16 %v1799
        %v1982 = vunpack.c.h.b16 %v1799
        %v1983 = vunpack.c.l.b16 %v1800
        %v1984 = vunpack.c.h.b16 %v1800
        %v1985 = vunpack.c.l.b16 %v1801
        %v1986 = vunpack.c.h.b16 %v1801
        %v1987 = vunpack.c.l.b16 %v1802
        %v1988 = vunpack.c.h.b16 %v1802
        %v1989 = vunpack.c.l.b16 %v1803
        %v1990 = vunpack.c.h.b16 %v1803
        %v1991 = vunpack.c.l.b16 %v1804
        %v1992 = vunpack.c.h.b16 %v1804
        %v1993 = vunpack.c.l.b16 %v1805
        %v1994 = vunpack.c.h.b16 %v1805
        %v1995 = vunpack.c.l.b16 %v1806
        %v1996 = vunpack.c.h.b16 %v1806
        %v1997 = vunpack.c.l.b16 %v1807
        %v1998 = vunpack.c.h.b16 %v1807
        %v1999 = vunpack.c.l.b16 %v1808
        %v2000 = vunpack.c.h.b16 %v1808
        %v2001 = vunpack.c.l.b16 %v1809
        %v2002 = vunpack.c.h.b16 %v1809
        %v2003 = vunpack.c.l.b16 %v1810
        %v2004 = vunpack.c.h.b16 %v1810
        %v2005 = vunpack.c.l.b16 %v1811
        %v2006 = vunpack.c.h.b16 %v1811
        %v2007 = vunpack.c.l.b16 %v1812
        %v2008 = vunpack.c.h.b16 %v1812
        %v2009 = vunpack.c.l.b16 %v1813
        %v2010 = vunpack.c.h.b16 %v1813
        %v2011 = vunpack.c.l.b16 %v1814
        %v2012 = vunpack.c.h.b16 %v1814
        %v2013 = vunpack.c.l.b16 %v1815
        %v2014 = vunpack.c.h.b16 %v1815
        %v2015 = vunpack.c.l.b16 %v1816
        %v2016 = vunpack.c.h.b16 %v1816
        %v2017 = vunpack.c.l.b16 %v1817
        %v2018 = vunpack.c.h.b16 %v1817
        %v2019 = vunpack.c.l.b16 %v1818
        %v2020 = vunpack.c.h.b16 %v1818
        %v2021 = vunpack.c.l.b16 %v1819
        %v2022 = vunpack.c.h.b16 %v1819
        %v2023 = vunpack.c.l.b16 %v1820
        %v2024 = vunpack.c.h.b16 %v1820
        %v2025 = vunpack.c.l.b16 %v1821
        %v2026 = vunpack.c.h.b16 %v1821
        %v2027 = vunpack.c.l.b16 %v1822
        %v2028 = vunpack.c.h.b16 %v1822
        %v2029 = vunpack.c.l.b16 %v1823
        %v2030 = vunpack.c.h.b16 %v1823
        %v2031 = vunpack.c.l.b16 %v1824
        %v2032 = vunpack.c.h.b16 %v1824
        %v2033 = vunpack.c.l.b16 %v1825
        %v2034 = vunpack.c.h.b16 %v1825
        %v2035 = vunpack.c.l.b16 %v1826
        %v2036 = vunpack.c.h.b16 %v1826
        %v2037 = vunpack.c.l.b16 %v1827
        %v2038 = vunpack.c.h.b16 %v1827
        %v2039 = vunpack.c.l.b16 %v1828
        %v2040 = vunpack.c.h.b16 %v1828
        %v2041 = vunpack.c.l.b16 %v1829
        %v2042 = vunpack.c.h.b16 %v1829
        %v2043 = vunpack.c.l.b16 %v1830
        %v2044 = vunpack.c.h.b16 %v1830
        %v2045 = vunpack.c.l.b16 %v1831
        %v2046 = vunpack.c.h.b16 %v1831
        %v2047 = vunpack.c.l.b16 %v1832
        %v2048 = vunpack.c.h.b16 %v1832
        %v2049 = vunpack.c.l.b16 %v1833
        %v2050 = vunpack.c.h.b16 %v1833
        %v2051 = vunpack.c.l.b16 %v1834
        %v2052 = vunpack.c.h.b16 %v1834
        %v2053 = vunpack.c.l.b16 %v1835
        %v2054 = vunpack.c.h.b16 %v1835
        %v2055 = vunpack.c.l.b16 %v1836
        %v2056 = vunpack.c.h.b16 %v1836
        %v2057 = vunpack.c.l.b16 %v1837
        %v2058 = vunpack.c.h.b16 %v1837
        %v2059 = vunpack.c.l.b16 %v1838
        %v2060 = vunpack.c.h.b16 %v1838
        %v2061 = vunpack.c.l.b16 %v1839
        %v2062 = vunpack.c.h.b16 %v1839
        %v2063 = vunpack.c.l.b16 %v1840
        %v2064 = vunpack.c.h.b16 %v1840
        %v2065 = vunpack.c.l.b16 %v1841
        %v2066 = vunpack.c.h.b16 %v1841
        %v2067 = vunpack.c.l.b16 %v1842
        %v2068 = vunpack.c.h.b16 %v1842
        %v2069 = vunpack.c.l.b16 %v1843
        %v2070 = vunpack.c.h.b16 %v1843
        %v2071 = vunpack.c.l.b16 %v1844
        %v2072 = vunpack.c.h.b16 %v1844
        %v2073 = vunpack.c.l.b16 %v1845
        %v2074 = vunpack.c.h.b16 %v1845
        %v2075 = vunpack.c.l.b16 %v1846
        %v2076 = vunpack.c.h.b16 %v1846
        %v2077 = vunpack.c.l.b16 %v1847
        %v2078 = vunpack.c.h.b16 %v1847
        %v2079 = vunpack.c.l.b16 %v1848
        %v2080 = vunpack.c.h.b16 %v1848
        %v2081 = vunpack.c.l.b16 %v1849
        %v2082 = vunpack.c.h.b16 %v1849
        %v2083 = vunpack.c.l.b16 %v1850
        %v2084 = vunpack.c.h.b16 %v1850
        %v2085 = vpack.c.b16 %v1965, %v1957
        %v2086 = vpack.c.b16 %v1966, %v1958
        %v2087 = vpack.c.b16 %v1967, %v1959
        %v2088 = vpack.c.b16 %v1968, %v1960
        %v2089 = vpack.c.b16 %v1969, %v1961
        %v2090 = vpack.c.b16 %v1970, %v1962
        %v2091 = vpack.c.b16 %v1971, %v1963
        %v2092 = vpack.c.b16 %v1972, %v1964
        %v2093 = vpack.c.b16 %v1981, %v1973
        %v2094 = vpack.c.b16 %v1982, %v1974
        %v2095 = vpack.c.b16 %v1983, %v1975
        %v2096 = vpack.c.b16 %v1984, %v1976
        %v2097 = vpack.c.b16 %v1985, %v1977
        %v2098 = vpack.c.b16 %v1986, %v1978
        %v2099 = vpack.c.b16 %v1987, %v1979
        %v2100 = vpack.c.b16 %v1988, %v1980
        %v2101 = vpack.c.b16 %v1997, %v1989
        %v2102 = vpack.c.b16 %v1998, %v1990
        %v2103 = vpack.c.b16 %v1999, %v1991
        %v2104 = vpack.c.b16 %v2000, %v1992
        %v2105 = vpack.c.b16 %v2001, %v1993
        %v2106 = vpack.c.b16 %v2002, %v1994
        %v2107 = vpack.c.b16 %v2003, %v1995
        %v2108 = vpack.c.b16 %v2004, %v1996
        %v2109 = vpack.c.b16 %v2013, %v2005
        %v2110 = vpack.c.b16 %v2014, %v2006
        %v2111 = vpack.c.b16 %v2015, %v2007
        %v2112 = vpack.c.b16 %v2016, %v2008
        %v2113 = vpack.c.b16 %v2017, %v2009
        %v2114 = vpack.c.b16 %v2018, %v2010
        %v2115 = vpack.c.b16 %v2019, %v2011
        %v2116 = vpack.c.b16 %v2020, %v2012
        %v2117 = vpack.c.b16 %v2029, %v2021
        %v2118 = vpack.c.b16 %v2030, %v2022
        %v2119 = vpack.c.b16 %v2031, %v2023
        %v2120 = vpack.c.b16 %v2032, %v2024
        %v2121 = vpack.c.b16 %v2033, %v2025
        %v2122 = vpack.c.b16 %v2034, %v2026
        %v2123 = vpack.c.b16 %v2035, %v2027
        %v2124 = vpack.c.b16 %v2036, %v2028
        %v2125 = vpack.c.b16 %v2045, %v2037
        %v2126 = vpack.c.b16 %v2046, %v2038
        %v2127 = vpack.c.b16 %v2047, %v2039
        %v2128 = vpack.c.b16 %v2048, %v2040
        %v2129 = vpack.c.b16 %v2049, %v2041
        %v2130 = vpack.c.b16 %v2050, %v2042
        %v2131 = vpack.c.b16 %v2051, %v2043
        %v2132 = vpack.c.b16 %v2052, %v2044
        %v2133 = vpack.c.b16 %v2061, %v2053
        %v2134 = vpack.c.b16 %v2062, %v2054
        %v2135 = vpack.c.b16 %v2063, %v2055
        %v2136 = vpack.c.b16 %v2064, %v2056
        %v2137 = vpack.c.b16 %v2065, %v2057
        %v2138 = vpack.c.b16 %v2066, %v2058
        %v2139 = vpack.c.b16 %v2067, %v2059
        %v2140 = vpack.c.b16 %v2068, %v2060
        %v2141 = vpack.c.b16 %v2077, %v2069
        %v2142 = vpack.c.b16 %v2078, %v2070
        %v2143 = vpack.c.b16 %v2079, %v2071
        %v2144 = vpack.c.b16 %v2080, %v2072
        %v2145 = vpack.c.b16 %v2081, %v2073
        %v2146 = vpack.c.b16 %v2082, %v2074
        %v2147 = vpack.c.b16 %v2083, %v2075
        %v2148 = vpack.c.b16 %v2084, %v2076
        %2213 = vmatprep.subr.bf16.mxu0 %v2086
        %2214 = vmatpush1.bf16.msra.mxu0 %v2085
        %2215 = vmatprep.subr.bf16.mxu0 %v2094
        %2216 = vmatpush1.bf16.msra.mxu0 %v2093
        %2217 = vmatprep.subr.bf16.mxu0 %v2102
        %2218 = vmatpush1.bf16.msra.mxu0 %v2101
        %2219 = vmatprep.subr.bf16.mxu0 %v2110
        %2220 = vmatpush1.bf16.msra.mxu0 %v2109
        %2221 = vmatprep.subr.bf16.mxu0 %v2118
        %2222 = vmatpush1.bf16.msra.mxu0 %v2117
        %2223 = vmatprep.subr.bf16.mxu0 %v2126
        %2224 = vmatpush1.bf16.msra.mxu0 %v2125
        %2225 = vmatprep.subr.bf16.mxu0 %v2134
        %2226 = vmatpush1.bf16.msra.mxu0 %v2133
        %2227 = vmatprep.subr.bf16.mxu0 %v2142
        %2228 = vmatpush1.bf16.msra.mxu0 %v2141
        %2229 = vmatprep.subr.bf16.mxu0 0
        %2230 = vmatpush1.bf16.msra.mxu0 0
        %2231 = vmatprep.subr.bf16.mxu0 0
        %2232 = vmatpush1.bf16.msra.mxu0 0
        %2233 = vmatprep.subr.bf16.mxu0 0
        %2234 = vmatpush1.bf16.msra.mxu0 0
        %2235 = vmatprep.subr.bf16.mxu0 0
        %2236 = vmatpush1.bf16.msra.mxu0 0
        %2237 = vmatprep.subr.bf16.mxu0 0
        %2238 = vmatpush1.bf16.msra.mxu0 0
        %2239 = vmatprep.subr.bf16.mxu0 0
        %2240 = vmatpush1.bf16.msra.mxu0 0
        %2241 = vmatprep.subr.bf16.mxu0 0
        %2242 = vmatpush1.bf16.msra.mxu0 0
        %2243 = vmatprep.subr.bf16.mxu0 0
        %2244 = vmatpush1.bf16.msra.mxu0 0
        %2245 = vmatprep.mubr.bf16.mxu0 0
        %2246 = vmatmul.mubr.bf16.gmra.mrb[0].mxu0 %v1786
        %v2247 = vpop.f32.mrb[0].mxu0
        %v2248 = vadd.f32 %v1856, %v2247
        %v2249 = vpop.f32.mrb[0].mxu0
        %v2250 = vadd.f32 %v1860, %v2249
        %v2251 = vpop.f32.mrb[0].mxu0
        %v2252 = vadd.f32 %v1856, %v2251
        %v2253 = vpop.f32.mrb[0].mxu0
        %v2254 = vadd.f32 %v1860, %v2253
        %2255 = vdwg.mxu0
        %2256 = vmatprep.subr.bf16.mxu0 %v2088
        %2257 = vmatpush1.bf16.msra.mxu0 %v2087
        %2258 = vmatprep.subr.bf16.mxu0 %v2096
        %2259 = vmatpush1.bf16.msra.mxu0 %v2095
        %2260 = vmatprep.subr.bf16.mxu0 %v2104
        %2261 = vmatpush1.bf16.msra.mxu0 %v2103
        %2262 = vmatprep.subr.bf16.mxu0 %v2112
        %2263 = vmatpush1.bf16.msra.mxu0 %v2111
        %2264 = vmatprep.subr.bf16.mxu0 %v2120
        %2265 = vmatpush1.bf16.msra.mxu0 %v2119
        %2266 = vmatprep.subr.bf16.mxu0 %v2128
        %2267 = vmatpush1.bf16.msra.mxu0 %v2127
        %2268 = vmatprep.subr.bf16.mxu0 %v2136
        %2269 = vmatpush1.bf16.msra.mxu0 %v2135
        %2270 = vmatprep.subr.bf16.mxu0 %v2144
        %2271 = vmatpush1.bf16.msra.mxu0 %v2143
        %2272 = vmatprep.subr.bf16.mxu0 0
        %2273 = vmatpush1.bf16.msra.mxu0 0
        %2274 = vmatprep.subr.bf16.mxu0 0
        %2275 = vmatpush1.bf16.msra.mxu0 0
        %2276 = vmatprep.subr.bf16.mxu0 0
        %2277 = vmatpush1.bf16.msra.mxu0 0
        %2278 = vmatprep.subr.bf16.mxu0 0
        %2279 = vmatpush1.bf16.msra.mxu0 0
        %2280 = vmatprep.subr.bf16.mxu0 0
        %2281 = vmatpush1.bf16.msra.mxu0 0
        %2282 = vmatprep.subr.bf16.mxu0 0
        %2283 = vmatpush1.bf16.msra.mxu0 0
        %2284 = vmatprep.subr.bf16.mxu0 0
        %2285 = vmatpush1.bf16.msra.mxu0 0
        %2286 = vmatprep.subr.bf16.mxu0 0
        %2287 = vmatpush1.bf16.msra.mxu0 0
        %2288 = vmatprep.mubr.bf16.mxu0 0
        %2289 = vmatmul.mubr.bf16.gmra.mrb[0].mxu0 %v1786
        %v2290 = vpop.f32.mrb[0].mxu0
        %v2291 = vadd.f32 %v1864, %v2290
        %v2292 = vpop.f32.mrb[0].mxu0
        %v2293 = vadd.f32 %v1868, %v2292
        %v2294 = vpop.f32.mrb[0].mxu0
        %v2295 = vadd.f32 %v1864, %v2294
        %v2296 = vpop.f32.mrb[0].mxu0
        %v2297 = vadd.f32 %v1868, %v2296
        %2298 = vdwg.mxu0
        %2299 = vmatprep.subr.bf16.mxu0 %v2090
        %2300 = vmatpush1.bf16.msra.mxu0 %v2089
        %2301 = vmatprep.subr.bf16.mxu0 %v2098
        %2302 = vmatpush1.bf16.msra.mxu0 %v2097
        %2303 = vmatprep.subr.bf16.mxu0 %v2106
        %2304 = vmatpush1.bf16.msra.mxu0 %v2105
        %2305 = vmatprep.subr.bf16.mxu0 %v2114
        %2306 = vmatpush1.bf16.msra.mxu0 %v2113
        %2307 = vmatprep.subr.bf16.mxu0 %v2122
        %2308 = vmatpush1.bf16.msra.mxu0 %v2121
        %2309 = vmatprep.subr.bf16.mxu0 %v2130
        %2310 = vmatpush1.bf16.msra.mxu0 %v2129
        %2311 = vmatprep.subr.bf16.mxu0 %v2138
        %2312 = vmatpush1.bf16.msra.mxu0 %v2137
        %2313 = vmatprep.subr.bf16.mxu0 %v2146
        %2314 = vmatpush1.bf16.msra.mxu0 %v2145
        %2315 = vmatprep.subr.bf16.mxu0 0
        %2316 = vmatpush1.bf16.msra.mxu0 0
        %2317 = vmatprep.subr.bf16.mxu0 0
        %2318 = vmatpush1.bf16.msra.mxu0 0
        %2319 = vmatprep.subr.bf16.mxu0 0
        %2320 = vmatpush1.bf16.msra.mxu0 0
        %2321 = vmatprep.subr.bf16.mxu0 0
        %2322 = vmatpush1.bf16.msra.mxu0 0
        %2323 = vmatprep.subr.bf16.mxu0 0
        %2324 = vmatpush1.bf16.msra.mxu0 0
        %2325 = vmatprep.subr.bf16.mxu0 0
        %2326 = vmatpush1.bf16.msra.mxu0 0
        %2327 = vmatprep.subr.bf16.mxu0 0
        %2328 = vmatpush1.bf16.msra.mxu0 0
        %2329 = vmatprep.subr.bf16.mxu0 0
        %2330 = vmatpush1.bf16.msra.mxu0 0
        %2331 = vmatprep.mubr.bf16.mxu0 0
        %2332 = vmatmul.mubr.bf16.gmra.mrb[0].mxu0 %v1786
        %v2333 = vpop.f32.mrb[0].mxu0
        %v2334 = vadd.f32 %v1872, %v2333
        %v2335 = vpop.f32.mrb[0].mxu0
        %v2336 = vadd.f32 %v1876, %v2335
        %v2337 = vpop.f32.mrb[0].mxu0
        %v2338 = vadd.f32 %v1872, %v2337
        %v2339 = vpop.f32.mrb[0].mxu0
        %v2340 = vadd.f32 %v1876, %v2339
        %2341 = vdwg.mxu0
        %2342 = vmatprep.subr.bf16.mxu0 %v2092
        %2343 = vmatpush1.bf16.msra.mxu0 %v2091
        %2344 = vmatprep.subr.bf16.mxu0 %v2100
        %2345 = vmatpush1.bf16.msra.mxu0 %v2099
        %2346 = vmatprep.subr.bf16.mxu0 %v2108
        %2347 = vmatpush1.bf16.msra.mxu0 %v2107
        %2348 = vmatprep.subr.bf16.mxu0 %v2116
        %2349 = vmatpush1.bf16.msra.mxu0 %v2115
        %2350 = vmatprep.subr.bf16.mxu0 %v2124
        %2351 = vmatpush1.bf16.msra.mxu0 %v2123
        %2352 = vmatprep.subr.bf16.mxu0 %v2132
        %2353 = vmatpush1.bf16.msra.mxu0 %v2131
        %2354 = vmatprep.subr.bf16.mxu0 %v2140
        %2355 = vmatpush1.bf16.msra.mxu0 %v2139
        %2356 = vmatprep.subr.bf16.mxu0 %v2148
        %2357 = vmatpush1.bf16.msra.mxu0 %v2147
        %2358 = vmatprep.subr.bf16.mxu0 0
        %2359 = vmatpush1.bf16.msra.mxu0 0
        %2360 = vmatprep.subr.bf16.mxu0 0
        %2361 = vmatpush1.bf16.msra.mxu0 0
        %2362 = vmatprep.subr.bf16.mxu0 0
        %2363 = vmatpush1.bf16.msra.mxu0 0
        %2364 = vmatprep.subr.bf16.mxu0 0
        %2365 = vmatpush1.bf16.msra.mxu0 0
        %2366 = vmatprep.subr.bf16.mxu0 0
        %2367 = vmatpush1.bf16.msra.mxu0 0
        %2368 = vmatprep.subr.bf16.mxu0 0
        %2369 = vmatpush1.bf16.msra.mxu0 0
        %2370 = vmatprep.subr.bf16.mxu0 0
        %2371 = vmatpush1.bf16.msra.mxu0 0
        %2372 = vmatprep.subr.bf16.mxu0 0
        %2373 = vmatpush1.bf16.msra.mxu0 0
        %2374 = vmatprep.mubr.bf16.mxu0 0
        %2375 = vmatmul.mubr.bf16.gmra.mrb[0].mxu0 %v1786
        %v2376 = vpop.f32.mrb[0].mxu0
        %v2377 = vadd.f32 %v1880, %v2376
        %v2378 = vpop.f32.mrb[0].mxu0
        %v2379 = vadd.f32 %v1884, %v2378
        %v2380 = vpop.f32.mrb[0].mxu0
        %v2381 = vadd.f32 %v1880, %v2380
        %v2382 = vpop.f32.mrb[0].mxu0
        %v2383 = vadd.f32 %v1884, %v2382
        %2384 = vdwg.mxu0
        %v2385 = vxor.u32 %v2334, 2147483648
        %v2386 = vxor.u32 %v2336, 2147483648
        %v2387 = vxor.u32 %v2377, 2147483648
        %v2388 = vxor.u32 %v2379, 2147483648
        %v2389 = vxor.u32 %v2338, 2147483648
        %v2390 = vxor.u32 %v2340, 2147483648
        %v2391 = vxor.u32 %v2381, 2147483648
        %v2392 = vxor.u32 %v2383, 2147483648
        %v2393 = vmul.f32 %v2385, 1.442695
        %v2394 = vpow.pop %v2393
        %v2395 = vmul.f32 %v2386, 1.442695
        %v2396 = vpow.pop %v2395
        %v2397 = vmul.f32 %v2387, 1.442695
        %v2398 = vpow.pop %v2397
        %v2399 = vmul.f32 %v2388, 1.442695
        %v2400 = vpow.pop %v2399
        %v2401 = vmul.f32 %v2389, 1.442695
        %v2402 = vpow.pop %v2401
        %v2403 = vmul.f32 %v2390, 1.442695
        %v2404 = vpow.pop %v2403
        %v2405 = vmul.f32 %v2391, 1.442695
        %v2406 = vpow.pop %v2405
        %v2407 = vmul.f32 %v2392, 1.442695
        %v2408 = vpow.pop %v2407
        %v2409 = vadd.f32 %v2394, 1.0
        %v2410 = vadd.f32 %v2396, 1.0
        %v2411 = vadd.f32 %v2398, 1.0
        %v2412 = vadd.f32 %v2400, 1.0
        %v2413 = vadd.f32 %v2402, 1.0
        %v2414 = vadd.f32 %v2404, 1.0
        %v2415 = vadd.f32 %v2406, 1.0
        %v2416 = vadd.f32 %v2408, 1.0
        %v2417 = vrcp.pop %v2409
        %v2418 = vmul.f32 1.0, %v2417
        %v2419 = vrcp.pop %v2410
        %v2420 = vmul.f32 1.0, %v2419
        %v2421 = vrcp.pop %v2411
        %v2422 = vmul.f32 1.0, %v2421
        %v2423 = vrcp.pop %v2412
        %v2424 = vmul.f32 1.0, %v2423
        %v2425 = vrcp.pop %v2413
        %v2426 = vmul.f32 1.0, %v2425
        %v2427 = vrcp.pop %v2414
        %v2428 = vmul.f32 1.0, %v2427
        %v2429 = vrcp.pop %v2415
        %v2430 = vmul.f32 1.0, %v2429
        %v2431 = vrcp.pop %v2416
        %v2432 = vmul.f32 1.0, %v2431
        %v2433 = vmul.f32 %v2334, %v2418
        %v2434 = vmul.f32 %v2336, %v2420
        %v2435 = vmul.f32 %v2377, %v2422
        %v2436 = vmul.f32 %v2379, %v2424
        %v2437 = vmul.f32 %v2338, %v2426
        %v2438 = vmul.f32 %v2340, %v2428
        %v2439 = vmul.f32 %v2381, %v2430
        %v2440 = vmul.f32 %v2383, %v2432
        %v2441 = vmul.f32 %v2248, %v2433
        %v2442 = vmul.f32 %v2250, %v2434
        %v2443 = vmul.f32 %v2291, %v2435
        %v2444 = vmul.f32 %v2293, %v2436
        %v2445 = vmul.f32 %v2252, %v2437
        %v2446 = vmul.f32 %v2254, %v2438
        %v2447 = vmul.f32 %v2295, %v2439
        %v2448 = vmul.f32 %v2297, %v2440
        %v2449 = vpack.c.bf16 %v2445, %v2441
        %v2450 = vpack.c.bf16 %v2446, %v2442
        %v2451 = vpack.c.bf16 %v2447, %v2443
        %v2452 = vpack.c.bf16 %v2448, %v2444
        %v2453 = vld [vmem:[#allocation10] sm:$0xf]
        %v2454 = vld [vmem:[#allocation10 + $0x4] sm:$0xf]
        %v2455 = vld [vmem:[#allocation10 + $0x8] sm:$0xf]
        %v2456 = vld [vmem:[#allocation10 + $0xc] sm:$0xf]
        %v2457 = vld [vmem:[#allocation10 + $0x10] sm:$0xf]
        %v2458 = vld [vmem:[#allocation10 + $0x14] sm:$0xf]
        %v2459 = vld [vmem:[#allocation10 + $0x18] sm:$0xf]
        %v2460 = vld [vmem:[#allocation10 + $0x1c] sm:$0xf]
        %v2461 = vld [vmem:[#allocation10 + $0x20] sm:$0xf]
        %v2462 = vld [vmem:[#allocation10 + $0x24] sm:$0xf]
        %v2463 = vld [vmem:[#allocation10 + $0x28] sm:$0xf]
        %v2464 = vld [vmem:[#allocation10 + $0x2c] sm:$0xf]
        %v2465 = vld [vmem:[#allocation10 + $0x30] sm:$0xf]
        %v2466 = vld [vmem:[#allocation10 + $0x34] sm:$0xf]
        %v2467 = vld [vmem:[#allocation10 + $0x38] sm:$0xf]
        %v2468 = vld [vmem:[#allocation10 + $0x3c] sm:$0xf]
        %v2469 = vld [vmem:[#allocation10 + $0x40] sm:$0xf]
        %v2470 = vld [vmem:[#allocation10 + $0x44] sm:$0xf]
        %v2471 = vld [vmem:[#allocation10 + $0x48] sm:$0xf]
        %v2472 = vld [vmem:[#allocation10 + $0x4c] sm:$0xf]
        %v2473 = vld [vmem:[#allocation10 + $0x50] sm:$0xf]
        %v2474 = vld [vmem:[#allocation10 + $0x54] sm:$0xf]
        %v2475 = vld [vmem:[#allocation10 + $0x58] sm:$0xf]
        %v2476 = vld [vmem:[#allocation10 + $0x5c] sm:$0xf]
        %v2477 = vld [vmem:[#allocation10 + $0x60] sm:$0xf]
        %v2478 = vld [vmem:[#allocation10 + $0x64] sm:$0xf]
        %v2479 = vld [vmem:[#allocation10 + $0x68] sm:$0xf]
        %v2480 = vld [vmem:[#allocation10 + $0x6c] sm:$0xf]
        %v2481 = vld [vmem:[#allocation10 + $0x70] sm:$0xf]
        %v2482 = vld [vmem:[#allocation10 + $0x74] sm:$0xf]
        %v2483 = vld [vmem:[#allocation10 + $0x78] sm:$0xf]
        %v2484 = vld [vmem:[#allocation10 + $0x7c] sm:$0xf]
        %v2485 = vld [vmem:[#allocation10 + $0x80] sm:$0xf]
        %v2486 = vld [vmem:[#allocation10 + $0x84] sm:$0xf]
        %v2487 = vld [vmem:[#allocation10 + $0x88] sm:$0xf]
        %v2488 = vld [vmem:[#allocation10 + $0x8c] sm:$0xf]
        %v2489 = vld [vmem:[#allocation10 + $0x90] sm:$0xf]
        %v2490 = vld [vmem:[#allocation10 + $0x94] sm:$0xf]
        %v2491 = vld [vmem:[#allocation10 + $0x98] sm:$0xf]
        %v2492 = vld [vmem:[#allocation10 + $0x9c] sm:$0xf]
        %v2493 = vld [vmem:[#allocation10 + $0xa0] sm:$0xf]
        %v2494 = vld [vmem:[#allocation10 + $0xa4] sm:$0xf]
        %v2495 = vld [vmem:[#allocation10 + $0xa8] sm:$0xf]
        %v2496 = vld [vmem:[#allocation10 + $0xac] sm:$0xf]
        %v2497 = vld [vmem:[#allocation10 + $0xb0] sm:$0xf]
        %v2498 = vld [vmem:[#allocation10 + $0xb4] sm:$0xf]
        %v2499 = vld [vmem:[#allocation10 + $0xb8] sm:$0xf]
        %v2500 = vld [vmem:[#allocation10 + $0xbc] sm:$0xf]
        %v2501 = vld [vmem:[#allocation10 + $0xc0] sm:$0xf]
        %v2502 = vld [vmem:[#allocation10 + $0xc4] sm:$0xf]
        %v2503 = vld [vmem:[#allocation10 + $0xc8] sm:$0xf]
        %v2504 = vld [vmem:[#allocation10 + $0xcc] sm:$0xf]
        %v2505 = vld [vmem:[#allocation10 + $0xd0] sm:$0xf]
        %v2506 = vld [vmem:[#allocation10 + $0xd4] sm:$0xf]
        %v2507 = vld [vmem:[#allocation10 + $0xd8] sm:$0xf]
        %v2508 = vld [vmem:[#allocation10 + $0xdc] sm:$0xf]
        %v2509 = vld [vmem:[#allocation10 + $0xe0] sm:$0xf]
        %v2510 = vld [vmem:[#allocation10 + $0xe4] sm:$0xf]
        %v2511 = vld [vmem:[#allocation10 + $0xe8] sm:$0xf]
        %v2512 = vld [vmem:[#allocation10 + $0xec] sm:$0xf]
        %v2513 = vld [vmem:[#allocation10 + $0xf0] sm:$0xf]
        %v2514 = vld [vmem:[#allocation10 + $0xf4] sm:$0xf]
        %v2515 = vld [vmem:[#allocation10 + $0xf8] sm:$0xf]
        %v2516 = vld [vmem:[#allocation10 + $0xfc] sm:$0xf]
        %v2517 = vld [vmem:[%s16] sm:$0x1]
        %v2519 = vlaneseq
        %v2520 = vshrl.u32 %v2519, 7
        %v2521 = vsub.s32 0, %v2520
        %v2522 = vrot.slane %v2517, %v2521
        %v2588 = vunpack.c.l.b16 %v2453
        %v2589 = vunpack.c.l.b16 %v2454
        %v2590 = vunpack.c.l.b16 %v2455
        %v2591 = vunpack.c.l.b16 %v2456
        %v2592 = vunpack.c.l.b16 %v2457
        %v2593 = vunpack.c.l.b16 %v2458
        %v2594 = vunpack.c.l.b16 %v2459
        %v2595 = vunpack.c.l.b16 %v2460
        %v2596 = vunpack.c.l.b16 %v2461
        %v2597 = vunpack.c.l.b16 %v2462
        %v2598 = vunpack.c.l.b16 %v2463
        %v2599 = vunpack.c.l.b16 %v2464
        %v2600 = vunpack.c.l.b16 %v2465
        %v2601 = vunpack.c.l.b16 %v2466
        %v2602 = vunpack.c.l.b16 %v2467
        %v2603 = vunpack.c.l.b16 %v2468
        %v2604 = vunpack.c.l.b16 %v2469
        %v2605 = vunpack.c.l.b16 %v2470
        %v2606 = vunpack.c.l.b16 %v2471
        %v2607 = vunpack.c.l.b16 %v2472
        %v2608 = vunpack.c.l.b16 %v2473
        %v2609 = vunpack.c.l.b16 %v2474
        %v2610 = vunpack.c.l.b16 %v2475
        %v2611 = vunpack.c.l.b16 %v2476
        %v2612 = vunpack.c.l.b16 %v2477
        %v2613 = vunpack.c.l.b16 %v2478
        %v2614 = vunpack.c.l.b16 %v2479
        %v2615 = vunpack.c.l.b16 %v2480
        %v2616 = vunpack.c.l.b16 %v2481
        %v2617 = vunpack.c.l.b16 %v2482
        %v2618 = vunpack.c.l.b16 %v2483
        %v2619 = vunpack.c.l.b16 %v2484
        %v2620 = vunpack.c.l.b16 %v2485
        %v2621 = vunpack.c.l.b16 %v2486
        %v2622 = vunpack.c.l.b16 %v2487
        %v2623 = vunpack.c.l.b16 %v2488
        %v2624 = vunpack.c.l.b16 %v2489
        %v2625 = vunpack.c.l.b16 %v2490
        %v2626 = vunpack.c.l.b16 %v2491
        %v2627 = vunpack.c.l.b16 %v2492
        %v2628 = vunpack.c.l.b16 %v2493
        %v2629 = vunpack.c.l.b16 %v2494
        %v2630 = vunpack.c.l.b16 %v2495
        %v2631 = vunpack.c.l.b16 %v2496
        %v2632 = vunpack.c.l.b16 %v2497
        %v2633 = vunpack.c.l.b16 %v2498
        %v2634 = vunpack.c.l.b16 %v2499
        %v2635 = vunpack.c.l.b16 %v2500
        %v2636 = vunpack.c.l.b16 %v2501
        %v2637 = vunpack.c.l.b16 %v2502
        %v2638 = vunpack.c.l.b16 %v2503
        %v2639 = vunpack.c.l.b16 %v2504
        %v2640 = vunpack.c.l.b16 %v2505
        %v2641 = vunpack.c.l.b16 %v2506
        %v2642 = vunpack.c.l.b16 %v2507
        %v2643 = vunpack.c.l.b16 %v2508
        %v2644 = vunpack.c.l.b16 %v2509
        %v2645 = vunpack.c.l.b16 %v2510
        %v2646 = vunpack.c.l.b16 %v2511
        %v2647 = vunpack.c.l.b16 %v2512
        %v2648 = vunpack.c.l.b16 %v2513
        %v2649 = vunpack.c.l.b16 %v2514
        %v2650 = vunpack.c.l.b16 %v2515
        %v2651 = vunpack.c.l.b16 %v2516
        %v2652 = vpack.c.b16 %v2589, %v2588
        %v2653 = vpack.c.b16 %v2591, %v2590
        %v2654 = vpack.c.b16 %v2593, %v2592
        %v2655 = vpack.c.b16 %v2595, %v2594
        %v2656 = vpack.c.b16 %v2597, %v2596
        %v2657 = vpack.c.b16 %v2599, %v2598
        %v2658 = vpack.c.b16 %v2601, %v2600
        %v2659 = vpack.c.b16 %v2603, %v2602
        %v2660 = vpack.c.b16 %v2605, %v2604
        %v2661 = vpack.c.b16 %v2607, %v2606
        %v2662 = vpack.c.b16 %v2609, %v2608
        %v2663 = vpack.c.b16 %v2611, %v2610
        %v2664 = vpack.c.b16 %v2613, %v2612
        %v2665 = vpack.c.b16 %v2615, %v2614
        %v2666 = vpack.c.b16 %v2617, %v2616
        %v2667 = vpack.c.b16 %v2619, %v2618
        %v2668 = vpack.c.b16 %v2621, %v2620
        %v2669 = vpack.c.b16 %v2623, %v2622
        %v2670 = vpack.c.b16 %v2625, %v2624
        %v2671 = vpack.c.b16 %v2627, %v2626
        %v2672 = vpack.c.b16 %v2629, %v2628
        %v2673 = vpack.c.b16 %v2631, %v2630
        %v2674 = vpack.c.b16 %v2633, %v2632
        %v2675 = vpack.c.b16 %v2635, %v2634
        %v2676 = vpack.c.b16 %v2637, %v2636
        %v2677 = vpack.c.b16 %v2639, %v2638
        %v2678 = vpack.c.b16 %v2641, %v2640
        %v2679 = vpack.c.b16 %v2643, %v2642
        %v2680 = vpack.c.b16 %v2645, %v2644
        %v2681 = vpack.c.b16 %v2647, %v2646
        %v2682 = vpack.c.b16 %v2649, %v2648
        %v2683 = vpack.c.b16 %v2651, %v2650
        %2716 = vmatprep.subr.bf16.mxu0 0
        %2717 = vmatpush1.bf16.msra.mxu0 %v2652
        %2718 = vmatprep.subr.bf16.mxu0 0
        %2719 = vmatpush1.bf16.msra.mxu0 %v2653
        %2720 = vmatprep.subr.bf16.mxu0 0
        %2721 = vmatpush1.bf16.msra.mxu0 %v2654
        %2722 = vmatprep.subr.bf16.mxu0 0
        %2723 = vmatpush1.bf16.msra.mxu0 %v2655
        %2724 = vmatprep.subr.bf16.mxu0 0
        %2725 = vmatpush1.bf16.msra.mxu0 %v2656
        %2726 = vmatprep.subr.bf16.mxu0 0
        %2727 = vmatpush1.bf16.msra.mxu0 %v2657
        %2728 = vmatprep.subr.bf16.mxu0 0
        %2729 = vmatpush1.bf16.msra.mxu0 %v2658
        %2730 = vmatprep.subr.bf16.mxu0 0
        %2731 = vmatpush1.bf16.msra.mxu0 %v2659
        %2732 = vmatprep.subr.bf16.mxu0 0
        %2733 = vmatpush1.bf16.msra.mxu0 %v2660
        %2734 = vmatprep.subr.bf16.mxu0 0
        %2735 = vmatpush1.bf16.msra.mxu0 %v2661
        %2736 = vmatprep.subr.bf16.mxu0 0
        %2737 = vmatpush1.bf16.msra.mxu0 %v2662
        %2738 = vmatprep.subr.bf16.mxu0 0
        %2739 = vmatpush1.bf16.msra.mxu0 %v2663
        %2740 = vmatprep.subr.bf16.mxu0 0
        %2741 = vmatpush1.bf16.msra.mxu0 %v2664
        %2742 = vmatprep.subr.bf16.mxu0 0
        %2743 = vmatpush1.bf16.msra.mxu0 %v2665
        %2744 = vmatprep.subr.bf16.mxu0 0
        %2745 = vmatpush1.bf16.msra.mxu0 %v2666
        %2746 = vmatprep.subr.bf16.mxu0 0
        %2747 = vmatpush1.bf16.msra.mxu0 %v2667
        %2748 = vmatprep.mubr.bf16.mxu0 %v2450
        %2749 = vmatmul.mubr.bf16.gmra.mrb[0].mxu0 %v2449
        %v2750 = vpop.f32.mrb[0].mxu0
        %v2751 = vadd.f32 %v2522, %v2750
        %v2752 = vpop.f32.mrb[0].mxu0
        %v2753 = vpop.f32.mrb[0].mxu0
        %v2754 = vadd.f32 %v2522, %v2753
        %v2755 = vpop.f32.mrb[0].mxu0
        %2756 = vdwg.mxu0
        %2757 = vmatprep.subr.bf16.mxu0 0
        %2758 = vmatpush1.bf16.msra.mxu0 %v2668
        %2759 = vmatprep.subr.bf16.mxu0 0
        %2760 = vmatpush1.bf16.msra.mxu0 %v2669
        %2761 = vmatprep.subr.bf16.mxu0 0
        %2762 = vmatpush1.bf16.msra.mxu0 %v2670
        %2763 = vmatprep.subr.bf16.mxu0 0
        %2764 = vmatpush1.bf16.msra.mxu0 %v2671
        %2765 = vmatprep.subr.bf16.mxu0 0
        %2766 = vmatpush1.bf16.msra.mxu0 %v2672
        %2767 = vmatprep.subr.bf16.mxu0 0
        %2768 = vmatpush1.bf16.msra.mxu0 %v2673
        %2769 = vmatprep.subr.bf16.mxu0 0
        %2770 = vmatpush1.bf16.msra.mxu0 %v2674
        %2771 = vmatprep.subr.bf16.mxu0 0
        %2772 = vmatpush1.bf16.msra.mxu0 %v2675
        %2773 = vmatprep.subr.bf16.mxu0 0
        %2774 = vmatpush1.bf16.msra.mxu0 %v2676
        %2775 = vmatprep.subr.bf16.mxu0 0
        %2776 = vmatpush1.bf16.msra.mxu0 %v2677
        %2777 = vmatprep.subr.bf16.mxu0 0
        %2778 = vmatpush1.bf16.msra.mxu0 %v2678
        %2779 = vmatprep.subr.bf16.mxu0 0
        %2780 = vmatpush1.bf16.msra.mxu0 %v2679
        %2781 = vmatprep.subr.bf16.mxu0 0
        %2782 = vmatpush1.bf16.msra.mxu0 %v2680
        %2783 = vmatprep.subr.bf16.mxu0 0
        %2784 = vmatpush1.bf16.msra.mxu0 %v2681
        %2785 = vmatprep.subr.bf16.mxu0 0
        %2786 = vmatpush1.bf16.msra.mxu0 %v2682
        %2787 = vmatprep.subr.bf16.mxu0 0
        %2788 = vmatpush1.bf16.msra.mxu0 %v2683
        %2789 = vmatprep.mubr.bf16.mxu0 %v2452
        %2790 = vmatmul.mubr.bf16.gmra.mrb[0].mxu0 %v2451
        %v2791 = vpop.f32.mrb[0].mxu0
        %v2792 = vadd.f32 %v2751, %v2791
        %v2793 = vpop.f32.mrb[0].mxu0
        %v2794 = vpop.f32.mrb[0].mxu0
        %v2795 = vadd.f32 %v2754, %v2794
        %v2796 = vpop.f32.mrb[0].mxu0
        %2797 = vdwg.mxu0
        %v2798 = vadd.f32 %v1742, %v2792
        %v2799 = vadd.f32 %v1743, %v2795
        %v2800 = vpack.c.bf16 %v2799, %v2798
        %v2802 = vunpack.c.l.b16 %v2800
        %v2803 = vunpack.c.h.b16 %v2800
        %v2804 = vpack.c.b16 %v2802, %v2802
        %v2805 = vpack.c.b16 %v2803, %v2803
        %2808 = vst [vmem:[%s636] sm:$0xf] %v2804
        %2809 = vst [vmem:[%s636 + $0x4] sm:$0x3] %v2805
        %p2810 = scmp.lt.s32.totalorder %s32, 3
        %s2811 = scalar_select %p2810, %s32, 3
        %s2812 = smul.addr %s2811, 2
        %s2813 = smul.addr %s2812, 4
        %s2814 = scalar_lea.vmem %s17, %s2813
        // Predicated region
        $region113: #{tpu_custom_call.1} parent=87 // pred_check
          %p2815 = pneg %p412
        $region114: #{tpu_custom_call.1} parent=87 // pred_check_branch
          %2817 = sbr.rel (%p2815) target = $region116
        $region115: #{tpu_custom_call.1} parent=87 // pred_region
          _
        $region116: #{tpu_custom_call.1} parent=87 // pred_fallthru
          _
      $region88: #{tpu_custom_call.1} parent=5 // pred_fallthru
        _
      %p2818 = scmp.le.s32.totalorder 2, %s27
      // Predicated region
      $region117: #{tpu_custom_call.1} parent=5 // pred_check
        %p2819 = pneg %p2818
      $region118: #{tpu_custom_call.1} parent=5 // pred_check_branch
        %2821 = sbr.rel (%p2819) target = $region120
      $region119: #{tpu_custom_call.1} parent=5 // pred_region
        %s2822 = ssub.s32 %s27, 2
        // Predicated region
        $region121: #{tpu_custom_call.1} parent=119 // pred_check
          %p2823 = pneg %p418
        $region122: #{tpu_custom_call.1} parent=119 // pred_check_branch
          %2825 = sbr.rel (%p2823) target = $region124
        $region123: #{tpu_custom_call.1} parent=119 // pred_region
          %p2826 = scmp.lt.s32.totalorder %s33, 3
          %s2827 = scalar_select %p2826, %s33, 3
          %s2828 = smul.addr %s2827, 2
          %s2829 = smul.addr %s2828, 4
          %s2830 = scalar_lea.vmem %s17, %s2829
        $region124: #{tpu_custom_call.1} parent=119 // pred_fallthru
          _
      $region120: #{tpu_custom_call.1} parent=5 // pred_fallthru
        _
    $region6: #{tpu_custom_call.1} parent=1 // loop_footer
      %s31 = sadd.s32 1, %s27
    $region7: #{tpu_custom_call.1} parent=1 // loop_footer_branch
      %26 = sbr.rel target = $region3
    $region8: #{tpu_custom_call.1} parent=1 // loop_exit
      _
    %2831 = vsyncpa [#allocation3], 1
    %s2832 = scalar_lea.sflag [#allocation3], 1
    %2833 = vsyncpa %s2832, 1
    %2834 = vsyncpa [#allocation5], 1
    %2835 = vsyncpa [#allocation8], 1
    %2836 = vsyncpa [#allocation11], 1

</llo_original>
